<compile_context>
chip_gen: v7x
topology: tpu7x:2x2x1
jax: 0.10.0
libtpu: 0.0.40
codegen_flags: <defaults>
</compile_context>

<pallas_src>
import functools
import math
import numpy as np
import jax
import jax.numpy as jnp
from jax.experimental import pallas as pl
from jax.experimental.pallas import tpu as pltpu

# ---------------- small config (consistent with the module's forward) ----------------
FEAT_DIM = 16
D_MODEL = 32            # divisible by N_HEADS and by 4
N_HEADS = 4
N_LAYERS = 2
HEAD_DIM = D_MODEL // N_HEADS
CHUNK = D_MODEL // 4    # SpiralMatchBlock dim
CLS_IN = CHUNK * 2 + 3 + 1
MAX_LEN = 64
LN_EPS = 1e-5
B, T = 2, 8

# ---- misc-slab layout (f32, lane width 128, all section starts 8-row aligned) ----
_EMB_ROWS = FEAT_DIM + 4                      # [We^T(16) ; Wpos^T(3) ; b_embed(1)] = 20 rows
_VAT_BASE = ((_EMB_ROWS + 7) // 8) * 8        # 24 : fused [Wv^T|Wa^T|Wt^T]  (D rows, 3*CHUNK cols)
_PROJ_BASE = _VAT_BASE + D_MODEL              # 56 : Wproj^T (CHUNK rows)
_VEC_BASE = _PROJ_BASE + CHUNK                # 64 : per-layer bias/LN rows, 8 rows per layer
_CLS_ROW = _VEC_BASE + 8 * N_LAYERS           # 80 : [w_cls(20) | b_cls | alpha | gamma]
_MISC_ROWS = ((_CLS_ROW + 1 + 7) // 8) * 8    # 88


def _layernorm(x, g, b):
    mu = jnp.mean(x, axis=-1, keepdims=True)
    var = jnp.mean((x - mu) ** 2, axis=-1, keepdims=True)
    return (x - mu) * jax.lax.rsqrt(var + LN_EPS) * g + b


# ---------------- the single fused kernel ----------------
def helix_fused_kernel(xc_ref, wmx_ref, w2_ref, misc_ref, out_ref, *, seq_len):
    f32, bf16 = jnp.float32, jnp.bfloat16
    D = D_MODEL
    BT = xc_ref.shape[0]

    def bdot(a, b):   # bf16 MXU operands, f32 accumulation
        return jnp.dot(a.astype(bf16), b.astype(bf16), preferred_element_type=f32)

    # ---- embed + helix positional projection + bias: ONE (BT,F+4)@(F+4,D) matmul ----
    h = bdot(xc_ref[...], misc_ref[0:_EMB_ROWS, 0:D])                       # (BT, D) f32

    # ---- block-diagonal additive attention bias, generated in-kernel (f32, VPU) ----
    row = jax.lax.broadcasted_iota(jnp.int32, (BT, BT), 0)
    col = jax.lax.broadcasted_iota(jnp.int32, (BT, BT), 1)
    if (seq_len & (seq_len - 1)) == 0:        # static branch: power-of-two -> shifts
        sh = seq_len.bit_length() - 1
        same = (row >> sh) == (col >> sh)
    else:
        same = (row // seq_len) == (col // seq_len)
    attn_bias = jnp.where(same, 0.0, -1e30).astype(f32)                     # (BT, BT)

    scale = 1.0 / math.sqrt(HEAD_DIM)

    # ---- transformer encoder layers (post-LN, eval), statically unrolled ----
    for l in range(N_LAYERS):
        base = _VEC_BASE + 8 * l
        bqkv = misc_ref[base + 0:base + 1, 0:3 * D]
        bo = misc_ref[base + 1:base + 2, 0:D]
        b1 = misc_ref[base + 2:base + 3, 0:4 * D]
        b2 = misc_ref[base + 3:base + 4, 0:D]
        g1 = misc_ref[base + 4:base + 5, 0:D]
        be1 = misc_ref[base + 5:base + 6, 0:D]
        g2 = misc_ref[base + 6:base + 7, 0:D]
        be2 = misc_ref[base + 7:base + 8, 0:D]

        # fused Q/K/V projection: one (BT,D)@(D,3D) bf16 matmul
        qkv = bdot(h, wmx_ref[l, :, 0:3 * D]) + bqkv                        # (BT, 3D) f32
        q = qkv[:, 0:D]
        k = qkv[:, D:2 * D]
        v = qkv[:, 2 * D:3 * D]

        # per-head attention over ALL batch rows at once; Wo folded per head so the
        # head outputs never touch VMEM (no scratch, no masked narrow stores).
        attn = None
        for hh in range(N_HEADS):
            lo = hh * HEAD_DIM
            qh = q[:, lo:lo + HEAD_DIM].astype(bf16)
            kh = k[:, lo:lo + HEAD_DIM].astype(bf16)
            vh = v[:, lo:lo + HEAD_DIM].astype(bf16)
            s = jax.lax.dot_general(qh, kh, (((1,), (1,)), ((), ())),
                                    preferred_element_type=f32) * scale + attn_bias
            s = s - jnp.max(s, axis=-1, keepdims=True)
            e = jnp.exp(s)
            p = e * pl.reciprocal(jnp.sum(e, axis=-1, keepdims=True), approx=True)
            oh = jnp.dot(p.astype(bf16), vh, preferred_element_type=f32)    # (BT, dh)
            contrib = jnp.dot(oh.astype(bf16),
                              wmx_ref[l, lo:lo + HEAD_DIM, 3 * D:4 * D],
                              preferred_element_type=f32)                   # (BT, D)
            attn = contrib if attn is None else attn + contrib

        y = _layernorm(h + attn + bo, g1, be1)
        ff = jnp.maximum(bdot(y, wmx_ref[l, :, 4 * D:8 * D]) + b1, 0.0)
        ff = bdot(ff, w2_ref[l]) + b2
        h = _layernorm(y + ff, g2, be2)

    # ---- v/a/t projections (one fused matmul) + SpiralMatchBlock ----
    cls = misc_ref[_CLS_ROW:_CLS_ROW + 1, :]                                # (1, 128) f32
    alpha = cls[:, CLS_IN + 1:CLS_IN + 2]
    gamma = cls[:, CLS_IN + 2:CLS_IN + 3]

    hvat = bdot(h, misc_ref[_VAT_BASE:_VAT_BASE + D, 0:3 * CHUNK])          # (BT, 3*CHUNK)
    hv = hvat[:, 0:CHUNK]
    ha = hvat[:, CHUNK:2 * CHUNK]
    ht = hvat[:, 2 * CHUNK:3 * CHUNK]

    center = alpha * hv + (1.0 - alpha) * ha
    trust = bdot(ht, misc_ref[_PROJ_BASE:_PROJ_BASE + CHUNK, 0:CHUNK])

    diff = center - trust
    err_align = jnp.mean(diff * diff, axis=-1, keepdims=True)
    n1 = jnp.sqrt(jnp.sum(center * center, axis=-1, keepdims=True)) + 1e-6
    n2 = jnp.sqrt(jnp.sum(trust * trust, axis=-1, keepdims=True)) + 1e-6
    dn = center * pl.reciprocal(n1, approx=True) - trust * pl.reciprocal(n2, approx=True)
    err_circ = jnp.mean(dn * dn, axis=-1, keepdims=True)
    err = err_align + jnp.abs(gamma) * err_circ                             # (BT, 1)

    # wave = cross(hv[:, :3], ha[:, :3])
    a0, a1, a2 = hv[:, 0:1], hv[:, 1:2], hv[:, 2:3]
    c0, c1, c2 = ha[:, 0:1], ha[:, 1:2], ha[:, 2:3]
    w0 = a1 * c2 - a2 * c1
    w1 = a2 * c0 - a0 * c2
    w2 = a0 * c1 - a1 * c0

    # classifier: concat-free decomposition, VPU dot products (no N=1 MXU pushes)
    logits = (jnp.sum(center * cls[:, 0:CHUNK], axis=-1, keepdims=True)
              + jnp.sum(trust * cls[:, CHUNK:2 * CHUNK], axis=-1, keepdims=True)
              + w0 * cls[:, 2 * CHUNK:2 * CHUNK + 1]
              + w1 * cls[:, 2 * CHUNK + 1:2 * CHUNK + 2]
              + w2 * cls[:, 2 * CHUNK + 2:2 * CHUNK + 3]
              + err * cls[:, 2 * CHUNK + 3:2 * CHUNK + 4]
              + cls[:, CLS_IN:CLS_IN + 1])

    # single merged write: [logits | err]  (one store, one output DMA; split on host)
    out_ref[...] = jnp.concatenate([logits, err], axis=1)


# ---------------- host-side parameter packing (done once) ----------------
def pack_params(params):
    D, L = D_MODEL, N_LAYERS

    def n(a):
        return np.asarray(a, np.float32)

    wmx = np.zeros((L, D, 8 * D), np.float32)     # per-layer [Wqkv^T | Wo^T | W1^T]
    w2mx = np.zeros((L, 4 * D, D), np.float32)    # per-layer W2^T
    misc = np.zeros((_MISC_ROWS, 128), np.float32)

    # embedding block (bias folded via the ones-column appended to xc)
    misc[0:FEAT_DIM, 0:D] = n(params['w_embed']).T
    misc[FEAT_DIM:FEAT_DIM + 3, 0:D] = n(params['w_pos']).T
    misc[FEAT_DIM + 3, 0:D] = n(params['b_embed']).reshape(-1)
    # fused v/a/t projection and spiral projection
    misc[_VAT_BASE:_VAT_BASE + D, 0:3 * CHUNK] = np.concatenate(
        [n(params['w_v']).T, n(params['w_a']).T, n(params['w_t']).T], axis=1)
    misc[_PROJ_BASE:_PROJ_BASE + CHUNK, 0:CHUNK] = n(params['w_proj']).T

    for l, lp in enumerate(params['layers']):
        wmx[l, :, 0:3 * D] = np.concatenate(
            [n(lp['wq']).T, n(lp['wk']).T, n(lp['wv']).T], axis=1)
        wmx[l, :, 3 * D:4 * D] = n(lp['wo']).T
        wmx[l, :, 4 * D:8 * D] = n(lp['w1']).T
        w2mx[l] = n(lp['w2']).T
        base = _VEC_BASE + 8 * l
        misc[base + 0, 0:3 * D] = np.concatenate(
            [n(lp['bq']).reshape(-1), n(lp['bk']).reshape(-1), n(lp['bv']).reshape(-1)])
        misc[base + 1, 0:D] = n(lp['bo']).reshape(-1)
        misc[base + 2, 0:4 * D] = n(lp['b1']).reshape(-1)
        misc[base + 3, 0:D] = n(lp['b2']).reshape(-1)
        misc[base + 4, 0:D] = n(lp['g1']).reshape(-1)
        misc[base + 5, 0:D] = n(lp['be1']).reshape(-1)
        misc[base + 6, 0:D] = n(lp['g2']).reshape(-1)
        misc[base + 7, 0:D] = n(lp['be2']).reshape(-1)

    misc[_CLS_ROW, 0:CLS_IN] = n(params['w_cls']).reshape(-1)
    misc[_CLS_ROW, CLS_IN] = n(params['b_cls']).reshape(-1)[0]
    misc[_CLS_ROW, CLS_IN + 1] = n(params['alpha']).reshape(-1)[0]
    misc[_CLS_ROW, CLS_IN + 2] = n(params['gamma']).reshape(-1)[0]

    return {
        'wmx': jnp.asarray(wmx, jnp.bfloat16),    # bf16 MXU weights (halves weight DMA)
        'w2mx': jnp.asarray(w2mx, jnp.bfloat16),
        'misc': jnp.asarray(misc, jnp.float32),   # f32 VPU-path params
    }


def helix_pos(t_idx):
    # TODO(synk): HelixPosEncoder is not defined in the source; using canonical
    # helix coordinates (cos t, sin t, t/MAX_LEN) -> (..., 3).
    t = t_idx.astype(jnp.float32)
    return jnp.stack([jnp.cos(t), jnp.sin(t), t / MAX_LEN], axis=-1)


# ---------------- single-pallas_call forward ----------------
def helix_transformer_forward(x, packed):
    Bx, Tx, F = x.shape
    BT = Bx * Tx
    t_idx = jnp.broadcast_to(jnp.arange(Tx)[None, :], (Bx, Tx))
    coords = helix_pos(t_idx).reshape(BT, 3)                 # constant-folded under jit
    xc = jnp.concatenate([x.reshape(BT, F), coords,
                          jnp.ones((BT, 1), jnp.float32)], axis=1)   # (BT, F+4)

    vmem = pl.BlockSpec(memory_space=pltpu.MemorySpace.VMEM)
    # TODO(synk): on v7x (2 TensorCores/chip) add a leading "parallel" grid axis over row
    # blocks of the flattened BT dimension once the problem grows past the ~µs fixed
    # invocation cost; at B=2/T=8 a single fused invocation is fastest on every generation.
    out = pl.pallas_call(
        functools.partial(helix_fused_kernel, seq_len=int(Tx)),
        out_shape=jax.ShapeDtypeStruct((BT, 2), jnp.float32),
        in_specs=[vmem, vmem, vmem, vmem],
        out_specs=vmem,
    )(xc, packed['wmx'], packed['w2mx'], packed['misc'])

    logits = out[:, 0:1].reshape(Bx, Tx, 1)
    err_micro = out[:, 1:2].reshape(Bx, Tx, 1)
    err_macro = jnp.mean(err_micro, axis=1, keepdims=True)
    return logits, (err_micro, err_macro)


# ---------------- pure-JAX reference (mirrors the PyTorch forward, eval mode) ----------------
def reference_forward(x, params):
    Bx, Tx, _ = x.shape
    t_idx = jnp.broadcast_to(jnp.arange(Tx)[None, :], (Bx, Tx))
    pos = helix_pos(t_idx) @ params['w_pos'].T
    h = x @ params['w_embed'].T + params['b_embed'] + pos
    for lp in params['layers']:
        q = (h @ lp['wq'].T + lp['bq']).reshape(Bx, Tx, N_HEADS, HEAD_DIM)
        k = (h @ lp['wk'].T + lp['bk']).reshape(Bx, Tx, N_HEADS, HEAD_DIM)
        v = (h @ lp['wv'].T + lp['bv']).reshape(Bx, Tx, N_HEADS, HEAD_DIM)
        s = jnp.einsum('bqhd,bkhd->bhqk', q, k) / math.sqrt(HEAD_DIM)
        p = jax.nn.softmax(s, axis=-1)
        o = jnp.einsum('bhqk,bkhd->bqhd', p, v).reshape(Bx, Tx, D_MODEL)
        attn = o @ lp['wo'].T + lp['bo']
        h = _layernorm(h + attn, lp['g1'], lp['be1'])
        ff = jax.nn.relu(h @ lp['w1'].T + lp['b1']) @ lp['w2'].T + lp['b2']
        h = _layernorm(h + ff, lp['g2'], lp['be2'])
    hv, ha, ht = h @ params['w_v'].T, h @ params['w_a'].T, h @ params['w_t'].T
    alpha = params['alpha'][0]
    center = alpha * hv + (1.0 - alpha) * ha
    wave = jnp.cross(hv[..., :3], ha[..., :3])
    trust = ht @ params['w_proj'].T
    err_align = jnp.mean((center - trust) ** 2, -1, keepdims=True)
    v1 = center / (jnp.linalg.norm(center, axis=-1, keepdims=True) + 1e-6)
    v2 = trust / (jnp.linalg.norm(trust, axis=-1, keepdims=True) + 1e-6)
    err_circ = jnp.mean((v1 - v2) ** 2, -1, keepdims=True)
    err = err_align + jnp.abs(params['gamma'][0]) * err_circ
    fusion = jnp.concatenate([center, trust, wave, err], axis=-1)
    logits = fusion @ params['w_cls'].T + params['b_cls']
    return logits, (err, jnp.mean(err, axis=1, keepdims=True))


# ---------------- deterministic parameter init ----------------
def init_params(key):
    keys = iter(jax.random.split(key, 64))

    def nrm(shape, scale=0.1):
        return jax.random.normal(next(keys), shape, jnp.float32) * scale

    params = {
        'w_embed': nrm((D_MODEL, FEAT_DIM)),
        'b_embed': nrm((1, D_MODEL), 0.02),
        'w_pos': nrm((D_MODEL, 3)),
        'w_v': nrm((CHUNK, D_MODEL)),
        'w_a': nrm((CHUNK, D_MODEL)),
        'w_t': nrm((CHUNK, D_MODEL)),
        'w_proj': nrm((CHUNK, CHUNK)),
        'alpha': jnp.array([0.3], jnp.float32),
        'gamma': jnp.array([0.3], jnp.float32),
        'w_cls': nrm((1, CLS_IN)),
        'b_cls': nrm((1, 1), 0.02),
        'layers': [],
    }
    for _ in range(N_LAYERS):
        params['layers'].append({
            'wq': nrm((D_MODEL, D_MODEL)), 'wk': nrm((D_MODEL, D_MODEL)),
            'wv': nrm((D_MODEL, D_MODEL)),
            'bq': nrm((1, D_MODEL), 0.02), 'bk': nrm((1, D_MODEL), 0.02),
            'bv': nrm((1, D_MODEL), 0.02),
            'wo': nrm((D_MODEL, D_MODEL)), 'bo': nrm((1, D_MODEL), 0.02),
            'w1': nrm((4 * D_MODEL, D_MODEL)), 'b1': nrm((1, 4 * D_MODEL), 0.02),
            'w2': nrm((D_MODEL, 4 * D_MODEL)), 'b2': nrm((1, D_MODEL), 0.02),
            'g1': jnp.ones((1, D_MODEL), jnp.float32),
            'be1': jnp.zeros((1, D_MODEL), jnp.float32),
            'g2': jnp.ones((1, D_MODEL), jnp.float32),
            'be2': jnp.zeros((1, D_MODEL), jnp.float32),
        })
    return params


if __name__ == "__main__":
    key = jax.random.PRNGKey(0)
    kx, kp = jax.random.split(key)
    x = jax.random.normal(kx, (B, T, FEAT_DIM), jnp.float32)
    params = init_params(kp)
    packed = pack_params(params)

    fwd = jax.jit(helix_transformer_forward)
    logits, (err_micro, err_macro) = fwd(x, packed)
    jax.block_until_ready((logits, err_micro, err_macro))

    assert logits.shape == (B, T, 1)
    assert err_micro.shape == (B, T, 1)
    assert err_macro.shape == (B, 1, 1)

    ref_logits, (ref_em, ref_eM) = reference_forward(x, params)
    # bf16 MXU operands (f32 accumulation) vs pure-f32 reference -> allow ~1e-2 drift.
    np.testing.assert_allclose(np.asarray(logits), np.asarray(ref_logits), rtol=2e-2, atol=2e-2)
    np.testing.assert_allclose(np.asarray(err_micro), np.asarray(ref_em), rtol=2e-2, atol=2e-2)
    np.testing.assert_allclose(np.asarray(err_macro), np.asarray(ref_eM), rtol=2e-2, atol=2e-2)

    print("KERNEL_OK")
</pallas_src>

<mosaic_0001>
module attributes {stable_mosaic.version = 11 : i64} {
  func.func @helix_fused_kernel(%arg0: memref<16x20xf32, #tpu.memory_space<vmem>>, %arg1: memref<2x32x256xbf16, #tpu.memory_space<vmem>>, %arg2: memref<2x128x32xbf16, #tpu.memory_space<vmem>>, %arg3: memref<88x128xf32, #tpu.memory_space<vmem>>, %arg4: memref<16x2xf32, #tpu.memory_space<vmem>>) attributes {dimension_semantics = [], scalar_prefetch = 0 : i64, scratch_operands = 0 : i64, tpu.core_type = #tpu.core_type<tc>} {
    %c0 = arith.constant 0 : index
    %c0_0 = arith.constant 0 : index
    %0 = vector.load %arg0[%c0, %c0_0] : memref<16x20xf32, #tpu.memory_space<vmem>>, vector<16x20xf32>
    %c0_1 = arith.constant 0 : index
    %c0_2 = arith.constant 0 : index
    %1 = vector.load %arg3[%c0_1, %c0_2] : memref<88x128xf32, #tpu.memory_space<vmem>>, vector<20x32xf32>
    %2 = arith.truncf %0 : vector<16x20xf32> to vector<16x20xbf16>
    %3 = arith.truncf %1 : vector<20x32xf32> to vector<20x32xbf16>
    %cst = arith.constant dense<0.000000e+00> : vector<16x32xf32>
    %4 = tpu.matmul %2, %3, %cst {dimension_numbers = #tpu.dot_dimension_numbers<[1], [0], [0], [1], [0, 0, 1, 1], [], []>} : vector<16x20xbf16>, vector<20x32xbf16>, vector<16x32xf32> -> vector<16x32xf32>
    %5 = tpu.iota {dimensions = array<i32: 0>} : vector<16x16xi32>
    %6 = tpu.iota {dimensions = array<i32: 1>} : vector<16x16xi32>
    %c3_i32 = arith.constant 3 : i32
    %7 = vector.broadcast %c3_i32 : i32 to vector<16x16xi32>
    %8 = arith.shrsi %5, %7 : vector<16x16xi32>
    %c3_i32_3 = arith.constant 3 : i32
    %9 = vector.broadcast %c3_i32_3 : i32 to vector<16x16xi32>
    %10 = arith.shrsi %6, %9 : vector<16x16xi32>
    %11 = arith.cmpi eq, %8, %10 : vector<16x16xi32>
    %cst_4 = arith.constant 0.000000e+00 : f32
    %cst_5 = arith.constant -1.000000e+30 : f32
    %12 = vector.broadcast %cst_4 : f32 to vector<16x16xf32>
    %13 = vector.broadcast %cst_5 : f32 to vector<16x16xf32>
    %14 = arith.select %11, %12, %13 : vector<16x16xi1>, vector<16x16xf32>
    %c64 = arith.constant 64 : index
    %c0_6 = arith.constant 0 : index
    %15 = vector.load %arg3[%c64, %c0_6] : memref<88x128xf32, #tpu.memory_space<vmem>>, vector<1x96xf32>
    %c65 = arith.constant 65 : index
    %c0_7 = arith.constant 0 : index
    %16 = vector.load %arg3[%c65, %c0_7] : memref<88x128xf32, #tpu.memory_space<vmem>>, vector<1x32xf32>
    %c66 = arith.constant 66 : index
    %c0_8 = arith.constant 0 : index
    %17 = vector.load %arg3[%c66, %c0_8] : memref<88x128xf32, #tpu.memory_space<vmem>>, vector<1x128xf32>
    %c67 = arith.constant 67 : index
    %c0_9 = arith.constant 0 : index
    %18 = vector.load %arg3[%c67, %c0_9] : memref<88x128xf32, #tpu.memory_space<vmem>>, vector<1x32xf32>
    %c68 = arith.constant 68 : index
    %c0_10 = arith.constant 0 : index
    %19 = vector.load %arg3[%c68, %c0_10] : memref<88x128xf32, #tpu.memory_space<vmem>>, vector<1x32xf32>
    %c69 = arith.constant 69 : index
    %c0_11 = arith.constant 0 : index
    %20 = vector.load %arg3[%c69, %c0_11] : memref<88x128xf32, #tpu.memory_space<vmem>>, vector<1x32xf32>
    %c70 = arith.constant 70 : index
    %c0_12 = arith.constant 0 : index
    %21 = vector.load %arg3[%c70, %c0_12] : memref<88x128xf32, #tpu.memory_space<vmem>>, vector<1x32xf32>
    %c71 = arith.constant 71 : index
    %c0_13 = arith.constant 0 : index
    %22 = vector.load %arg3[%c71, %c0_13] : memref<88x128xf32, #tpu.memory_space<vmem>>, vector<1x32xf32>
    %c0_14 = arith.constant 0 : index
    %c0_15 = arith.constant 0 : index
    %c0_16 = arith.constant 0 : index
    %23 = vector.load %arg1[%c0_14, %c0_15, %c0_16] : memref<2x32x256xbf16, #tpu.memory_space<vmem>>, vector<1x32x96xbf16>
    %24 = vector.shape_cast %23 : vector<1x32x96xbf16> to vector<32x96xbf16>
    %25 = arith.truncf %4 : vector<16x32xf32> to vector<16x32xbf16>
    %cst_17 = arith.constant dense<0.000000e+00> : vector<16x96xf32>
    %26 = tpu.matmul %25, %24, %cst_17 {dimension_numbers = #tpu.dot_dimension_numbers<[1], [0], [0], [1], [0, 0, 1, 1], [], []>} : vector<16x32xbf16>, vector<32x96xbf16>, vector<16x96xf32> -> vector<16x96xf32>
    %27 = vector.broadcast %15 : vector<1x96xf32> to vector<16x96xf32>
    %28 = arith.addf %26, %27 : vector<16x96xf32>
    %29 = vector.extract_strided_slice %28 {offsets = [0, 0], sizes = [16, 32], strides = [1, 1]} : vector<16x96xf32> to vector<16x32xf32>
    %30 = vector.extract_strided_slice %28 {offsets = [0, 32], sizes = [16, 32], strides = [1, 1]} : vector<16x96xf32> to vector<16x32xf32>
    %31 = vector.extract_strided_slice %28 {offsets = [0, 64], sizes = [16, 32], strides = [1, 1]} : vector<16x96xf32> to vector<16x32xf32>
    %32 = vector.extract_strided_slice %29 {offsets = [0, 0], sizes = [16, 8], strides = [1, 1]} : vector<16x32xf32> to vector<16x8xf32>
    %33 = arith.truncf %32 : vector<16x8xf32> to vector<16x8xbf16>
    %34 = vector.extract_strided_slice %30 {offsets = [0, 0], sizes = [16, 8], strides = [1, 1]} : vector<16x32xf32> to vector<16x8xf32>
    %35 = arith.truncf %34 : vector<16x8xf32> to vector<16x8xbf16>
    %36 = vector.extract_strided_slice %31 {offsets = [0, 0], sizes = [16, 8], strides = [1, 1]} : vector<16x32xf32> to vector<16x8xf32>
    %37 = arith.truncf %36 : vector<16x8xf32> to vector<16x8xbf16>
    %cst_18 = arith.constant dense<0.000000e+00> : vector<16x16xf32>
    %38 = tpu.matmul %33, %35, %cst_18 {dimension_numbers = #tpu.dot_dimension_numbers<[1], [1], [0], [0], [0, 0, 1, 0], [], []>} : vector<16x8xbf16>, vector<16x8xbf16>, vector<16x16xf32> -> vector<16x16xf32>
    %cst_19 = arith.constant 0.353553385 : f32
    %39 = vector.broadcast %cst_19 : f32 to vector<16x16xf32>
    %40 = arith.mulf %38, %39 : vector<16x16xf32>
    %41 = arith.addf %40, %14 : vector<16x16xf32>
    %cst_20 = arith.constant dense<0xFF800000> : vector<16xf32>
    %42 = vector.multi_reduction <maximumf>, %41, %cst_20 [1] : vector<16x16xf32> to vector<16xf32>
    %43 = vector.shape_cast %42 : vector<16xf32> to vector<16x1xf32>
    %44 = vector.broadcast %43 : vector<16x1xf32> to vector<16x16xf32>
    %45 = arith.subf %41, %44 : vector<16x16xf32>
    %46 = math.exp %45 : vector<16x16xf32>
    %cst_21 = arith.constant dense<0.000000e+00> : vector<16xf32>
    %47 = vector.multi_reduction <add>, %46, %cst_21 [1] : vector<16x16xf32> to vector<16xf32>
    %48 = vector.shape_cast %47 : vector<16xf32> to vector<16x1xf32>
    %49 = tpu.reciprocal %48 {approx = true} : vector<16x1xf32> -> vector<16x1xf32>
    %50 = vector.broadcast %49 : vector<16x1xf32> to vector<16x16xf32>
    %51 = arith.mulf %46, %50 : vector<16x16xf32>
    %52 = arith.truncf %51 : vector<16x16xf32> to vector<16x16xbf16>
    %cst_22 = arith.constant dense<0.000000e+00> : vector<16x8xf32>
    %53 = tpu.matmul %52, %37, %cst_22 {dimension_numbers = #tpu.dot_dimension_numbers<[1], [0], [0], [1], [0, 0, 1, 1], [], []>} : vector<16x16xbf16>, vector<16x8xbf16>, vector<16x8xf32> -> vector<16x8xf32>
    %54 = arith.truncf %53 : vector<16x8xf32> to vector<16x8xbf16>
    %c0_23 = arith.constant 0 : index
    %c0_24 = arith.constant 0 : index
    %c96 = arith.constant 96 : index
    %55 = vector.load %arg1[%c0_23, %c0_24, %c96] : memref<2x32x256xbf16, #tpu.memory_space<vmem>>, vector<1x8x32xbf16>
    %56 = vector.shape_cast %55 : vector<1x8x32xbf16> to vector<8x32xbf16>
    %cst_25 = arith.constant dense<0.000000e+00> : vector<16x32xf32>
    %57 = tpu.matmul %54, %56, %cst_25 {dimension_numbers = #tpu.dot_dimension_numbers<[1], [0], [0], [1], [0, 0, 1, 1], [], []>} : vector<16x8xbf16>, vector<8x32xbf16>, vector<16x32xf32> -> vector<16x32xf32>
    %58 = vector.extract_strided_slice %29 {offsets = [0, 8], sizes = [16, 8], strides = [1, 1]} : vector<16x32xf32> to vector<16x8xf32>
    %59 = arith.truncf %58 : vector<16x8xf32> to vector<16x8xbf16>
    %60 = vector.extract_strided_slice %30 {offsets = [0, 8], sizes = [16, 8], strides = [1, 1]} : vector<16x32xf32> to vector<16x8xf32>
    %61 = arith.truncf %60 : vector<16x8xf32> to vector<16x8xbf16>
    %62 = vector.extract_strided_slice %31 {offsets = [0, 8], sizes = [16, 8], strides = [1, 1]} : vector<16x32xf32> to vector<16x8xf32>
    %63 = arith.truncf %62 : vector<16x8xf32> to vector<16x8xbf16>
    %cst_26 = arith.constant dense<0.000000e+00> : vector<16x16xf32>
    %64 = tpu.matmul %59, %61, %cst_26 {dimension_numbers = #tpu.dot_dimension_numbers<[1], [1], [0], [0], [0, 0, 1, 0], [], []>} : vector<16x8xbf16>, vector<16x8xbf16>, vector<16x16xf32> -> vector<16x16xf32>
    %cst_27 = arith.constant 0.353553385 : f32
    %65 = vector.broadcast %cst_27 : f32 to vector<16x16xf32>
    %66 = arith.mulf %64, %65 : vector<16x16xf32>
    %67 = arith.addf %66, %14 : vector<16x16xf32>
    %cst_28 = arith.constant dense<0xFF800000> : vector<16xf32>
    %68 = vector.multi_reduction <maximumf>, %67, %cst_28 [1] : vector<16x16xf32> to vector<16xf32>
    %69 = vector.shape_cast %68 : vector<16xf32> to vector<16x1xf32>
    %70 = vector.broadcast %69 : vector<16x1xf32> to vector<16x16xf32>
    %71 = arith.subf %67, %70 : vector<16x16xf32>
    %72 = math.exp %71 : vector<16x16xf32>
    %cst_29 = arith.constant dense<0.000000e+00> : vector<16xf32>
    %73 = vector.multi_reduction <add>, %72, %cst_29 [1] : vector<16x16xf32> to vector<16xf32>
    %74 = vector.shape_cast %73 : vector<16xf32> to vector<16x1xf32>
    %75 = tpu.reciprocal %74 {approx = true} : vector<16x1xf32> -> vector<16x1xf32>
    %76 = vector.broadcast %75 : vector<16x1xf32> to vector<16x16xf32>
    %77 = arith.mulf %72, %76 : vector<16x16xf32>
    %78 = arith.truncf %77 : vector<16x16xf32> to vector<16x16xbf16>
    %cst_30 = arith.constant dense<0.000000e+00> : vector<16x8xf32>
    %79 = tpu.matmul %78, %63, %cst_30 {dimension_numbers = #tpu.dot_dimension_numbers<[1], [0], [0], [1], [0, 0, 1, 1], [], []>} : vector<16x16xbf16>, vector<16x8xbf16>, vector<16x8xf32> -> vector<16x8xf32>
    %80 = arith.truncf %79 : vector<16x8xf32> to vector<16x8xbf16>
    %c0_31 = arith.constant 0 : index
    %c8 = arith.constant 8 : index
    %c96_32 = arith.constant 96 : index
    %81 = vector.load %arg1[%c0_31, %c8, %c96_32] : memref<2x32x256xbf16, #tpu.memory_space<vmem>>, vector<1x8x32xbf16>
    %82 = vector.shape_cast %81 : vector<1x8x32xbf16> to vector<8x32xbf16>
    %cst_33 = arith.constant dense<0.000000e+00> : vector<16x32xf32>
    %83 = tpu.matmul %80, %82, %cst_33 {dimension_numbers = #tpu.dot_dimension_numbers<[1], [0], [0], [1], [0, 0, 1, 1], [], []>} : vector<16x8xbf16>, vector<8x32xbf16>, vector<16x32xf32> -> vector<16x32xf32>
    %84 = arith.addf %57, %83 : vector<16x32xf32>
    %85 = vector.extract_strided_slice %29 {offsets = [0, 16], sizes = [16, 8], strides = [1, 1]} : vector<16x32xf32> to vector<16x8xf32>
    %86 = arith.truncf %85 : vector<16x8xf32> to vector<16x8xbf16>
    %87 = vector.extract_strided_slice %30 {offsets = [0, 16], sizes = [16, 8], strides = [1, 1]} : vector<16x32xf32> to vector<16x8xf32>
    %88 = arith.truncf %87 : vector<16x8xf32> to vector<16x8xbf16>
    %89 = vector.extract_strided_slice %31 {offsets = [0, 16], sizes = [16, 8], strides = [1, 1]} : vector<16x32xf32> to vector<16x8xf32>
    %90 = arith.truncf %89 : vector<16x8xf32> to vector<16x8xbf16>
    %cst_34 = arith.constant dense<0.000000e+00> : vector<16x16xf32>
    %91 = tpu.matmul %86, %88, %cst_34 {dimension_numbers = #tpu.dot_dimension_numbers<[1], [1], [0], [0], [0, 0, 1, 0], [], []>} : vector<16x8xbf16>, vector<16x8xbf16>, vector<16x16xf32> -> vector<16x16xf32>
    %cst_35 = arith.constant 0.353553385 : f32
    %92 = vector.broadcast %cst_35 : f32 to vector<16x16xf32>
    %93 = arith.mulf %91, %92 : vector<16x16xf32>
    %94 = arith.addf %93, %14 : vector<16x16xf32>
    %cst_36 = arith.constant dense<0xFF800000> : vector<16xf32>
    %95 = vector.multi_reduction <maximumf>, %94, %cst_36 [1] : vector<16x16xf32> to vector<16xf32>
    %96 = vector.shape_cast %95 : vector<16xf32> to vector<16x1xf32>
    %97 = vector.broadcast %96 : vector<16x1xf32> to vector<16x16xf32>
    %98 = arith.subf %94, %97 : vector<16x16xf32>
    %99 = math.exp %98 : vector<16x16xf32>
    %cst_37 = arith.constant dense<0.000000e+00> : vector<16xf32>
    %100 = vector.multi_reduction <add>, %99, %cst_37 [1] : vector<16x16xf32> to vector<16xf32>
    %101 = vector.shape_cast %100 : vector<16xf32> to vector<16x1xf32>
    %102 = tpu.reciprocal %101 {approx = true} : vector<16x1xf32> -> vector<16x1xf32>
    %103 = vector.broadcast %102 : vector<16x1xf32> to vector<16x16xf32>
    %104 = arith.mulf %99, %103 : vector<16x16xf32>
    %105 = arith.truncf %104 : vector<16x16xf32> to vector<16x16xbf16>
    %cst_38 = arith.constant dense<0.000000e+00> : vector<16x8xf32>
    %106 = tpu.matmul %105, %90, %cst_38 {dimension_numbers = #tpu.dot_dimension_numbers<[1], [0], [0], [1], [0, 0, 1, 1], [], []>} : vector<16x16xbf16>, vector<16x8xbf16>, vector<16x8xf32> -> vector<16x8xf32>
    %107 = arith.truncf %106 : vector<16x8xf32> to vector<16x8xbf16>
    %c0_39 = arith.constant 0 : index
    %c16 = arith.constant 16 : index
    %c96_40 = arith.constant 96 : index
    %108 = vector.load %arg1[%c0_39, %c16, %c96_40] : memref<2x32x256xbf16, #tpu.memory_space<vmem>>, vector<1x8x32xbf16>
    %109 = vector.shape_cast %108 : vector<1x8x32xbf16> to vector<8x32xbf16>
    %cst_41 = arith.constant dense<0.000000e+00> : vector<16x32xf32>
    %110 = tpu.matmul %107, %109, %cst_41 {dimension_numbers = #tpu.dot_dimension_numbers<[1], [0], [0], [1], [0, 0, 1, 1], [], []>} : vector<16x8xbf16>, vector<8x32xbf16>, vector<16x32xf32> -> vector<16x32xf32>
    %111 = arith.addf %84, %110 : vector<16x32xf32>
    %112 = vector.extract_strided_slice %29 {offsets = [0, 24], sizes = [16, 8], strides = [1, 1]} : vector<16x32xf32> to vector<16x8xf32>
    %113 = arith.truncf %112 : vector<16x8xf32> to vector<16x8xbf16>
    %114 = vector.extract_strided_slice %30 {offsets = [0, 24], sizes = [16, 8], strides = [1, 1]} : vector<16x32xf32> to vector<16x8xf32>
    %115 = arith.truncf %114 : vector<16x8xf32> to vector<16x8xbf16>
    %116 = vector.extract_strided_slice %31 {offsets = [0, 24], sizes = [16, 8], strides = [1, 1]} : vector<16x32xf32> to vector<16x8xf32>
    %117 = arith.truncf %116 : vector<16x8xf32> to vector<16x8xbf16>
    %cst_42 = arith.constant dense<0.000000e+00> : vector<16x16xf32>
    %118 = tpu.matmul %113, %115, %cst_42 {dimension_numbers = #tpu.dot_dimension_numbers<[1], [1], [0], [0], [0, 0, 1, 0], [], []>} : vector<16x8xbf16>, vector<16x8xbf16>, vector<16x16xf32> -> vector<16x16xf32>
    %cst_43 = arith.constant 0.353553385 : f32
    %119 = vector.broadcast %cst_43 : f32 to vector<16x16xf32>
    %120 = arith.mulf %118, %119 : vector<16x16xf32>
    %121 = arith.addf %120, %14 : vector<16x16xf32>
    %cst_44 = arith.constant dense<0xFF800000> : vector<16xf32>
    %122 = vector.multi_reduction <maximumf>, %121, %cst_44 [1] : vector<16x16xf32> to vector<16xf32>
    %123 = vector.shape_cast %122 : vector<16xf32> to vector<16x1xf32>
    %124 = vector.broadcast %123 : vector<16x1xf32> to vector<16x16xf32>
    %125 = arith.subf %121, %124 : vector<16x16xf32>
    %126 = math.exp %125 : vector<16x16xf32>
    %cst_45 = arith.constant dense<0.000000e+00> : vector<16xf32>
    %127 = vector.multi_reduction <add>, %126, %cst_45 [1] : vector<16x16xf32> to vector<16xf32>
    %128 = vector.shape_cast %127 : vector<16xf32> to vector<16x1xf32>
    %129 = tpu.reciprocal %128 {approx = true} : vector<16x1xf32> -> vector<16x1xf32>
    %130 = vector.broadcast %129 : vector<16x1xf32> to vector<16x16xf32>
    %131 = arith.mulf %126, %130 : vector<16x16xf32>
    %132 = arith.truncf %131 : vector<16x16xf32> to vector<16x16xbf16>
    %cst_46 = arith.constant dense<0.000000e+00> : vector<16x8xf32>
    %133 = tpu.matmul %132, %117, %cst_46 {dimension_numbers = #tpu.dot_dimension_numbers<[1], [0], [0], [1], [0, 0, 1, 1], [], []>} : vector<16x16xbf16>, vector<16x8xbf16>, vector<16x8xf32> -> vector<16x8xf32>
    %134 = arith.truncf %133 : vector<16x8xf32> to vector<16x8xbf16>
    %c0_47 = arith.constant 0 : index
    %c24 = arith.constant 24 : index
    %c96_48 = arith.constant 96 : index
    %135 = vector.load %arg1[%c0_47, %c24, %c96_48] : memref<2x32x256xbf16, #tpu.memory_space<vmem>>, vector<1x8x32xbf16>
    %136 = vector.shape_cast %135 : vector<1x8x32xbf16> to vector<8x32xbf16>
    %cst_49 = arith.constant dense<0.000000e+00> : vector<16x32xf32>
    %137 = tpu.matmul %134, %136, %cst_49 {dimension_numbers = #tpu.dot_dimension_numbers<[1], [0], [0], [1], [0, 0, 1, 1], [], []>} : vector<16x8xbf16>, vector<8x32xbf16>, vector<16x32xf32> -> vector<16x32xf32>
    %138 = arith.addf %111, %137 : vector<16x32xf32>
    %139 = arith.addf %4, %138 : vector<16x32xf32>
    %140 = vector.broadcast %16 : vector<1x32xf32> to vector<16x32xf32>
    %141 = arith.addf %139, %140 : vector<16x32xf32>
    %cst_50 = arith.constant dense<0.000000e+00> : vector<16xf32>
    %142 = vector.multi_reduction <add>, %141, %cst_50 [1] : vector<16x32xf32> to vector<16xf32>
    %143 = vector.shape_cast %142 : vector<16xf32> to vector<16x1xf32>
    %cst_51 = arith.constant 3.200000e+01 : f32
    %144 = vector.broadcast %cst_51 : f32 to vector<16x1xf32>
    %145 = arith.divf %143, %144 : vector<16x1xf32>
    %146 = vector.broadcast %145 : vector<16x1xf32> to vector<16x32xf32>
    %147 = arith.subf %141, %146 : vector<16x32xf32>
    %148 = arith.mulf %147, %147 : vector<16x32xf32>
    %cst_52 = arith.constant dense<0.000000e+00> : vector<16xf32>
    %149 = vector.multi_reduction <add>, %148, %cst_52 [1] : vector<16x32xf32> to vector<16xf32>
    %150 = vector.shape_cast %149 : vector<16xf32> to vector<16x1xf32>
    %cst_53 = arith.constant 3.200000e+01 : f32
    %151 = vector.broadcast %cst_53 : f32 to vector<16x1xf32>
    %152 = arith.divf %150, %151 : vector<16x1xf32>
    %153 = vector.broadcast %145 : vector<16x1xf32> to vector<16x32xf32>
    %154 = arith.subf %141, %153 : vector<16x32xf32>
    %cst_54 = arith.constant 9.99999974E-6 : f32
    %155 = vector.broadcast %cst_54 : f32 to vector<16x1xf32>
    %156 = arith.addf %152, %155 : vector<16x1xf32>
    %157 = math.rsqrt %156 : vector<16x1xf32>
    %158 = vector.broadcast %157 : vector<16x1xf32> to vector<16x32xf32>
    %159 = arith.mulf %154, %158 : vector<16x32xf32>
    %160 = vector.broadcast %19 : vector<1x32xf32> to vector<16x32xf32>
    %161 = arith.mulf %159, %160 : vector<16x32xf32>
    %162 = vector.broadcast %20 : vector<1x32xf32> to vector<16x32xf32>
    %163 = arith.addf %161, %162 : vector<16x32xf32>
    %c0_55 = arith.constant 0 : index
    %c0_56 = arith.constant 0 : index
    %c128 = arith.constant 128 : index
    %164 = vector.load %arg1[%c0_55, %c0_56, %c128] : memref<2x32x256xbf16, #tpu.memory_space<vmem>>, vector<1x32x128xbf16>
    %165 = vector.shape_cast %164 : vector<1x32x128xbf16> to vector<32x128xbf16>
    %166 = arith.truncf %163 : vector<16x32xf32> to vector<16x32xbf16>
    %cst_57 = arith.constant dense<0.000000e+00> : vector<16x128xf32>
    %167 = tpu.matmul %166, %165, %cst_57 {dimension_numbers = #tpu.dot_dimension_numbers<[1], [0], [0], [1], [0, 0, 1, 1], [], []>} : vector<16x32xbf16>, vector<32x128xbf16>, vector<16x128xf32> -> vector<16x128xf32>
    %168 = vector.broadcast %17 : vector<1x128xf32> to vector<16x128xf32>
    %169 = arith.addf %167, %168 : vector<16x128xf32>
    %cst_58 = arith.constant 0.000000e+00 : f32
    %170 = vector.broadcast %cst_58 : f32 to vector<16x128xf32>
    %171 = arith.maximumf %169, %170 : vector<16x128xf32>
    %c0_59 = arith.constant 0 : index
    %c0_60 = arith.constant 0 : index
    %c0_61 = arith.constant 0 : index
    %172 = vector.load %arg2[%c0_59, %c0_60, %c0_61] : memref<2x128x32xbf16, #tpu.memory_space<vmem>>, vector<1x128x32xbf16>
    %173 = vector.shape_cast %172 : vector<1x128x32xbf16> to vector<128x32xbf16>
    %174 = arith.truncf %171 : vector<16x128xf32> to vector<16x128xbf16>
    %cst_62 = arith.constant dense<0.000000e+00> : vector<16x32xf32>
    %175 = tpu.matmul %174, %173, %cst_62 {dimension_numbers = #tpu.dot_dimension_numbers<[1], [0], [0], [1], [0, 0, 1, 1], [], []>} : vector<16x128xbf16>, vector<128x32xbf16>, vector<16x32xf32> -> vector<16x32xf32>
    %176 = vector.broadcast %18 : vector<1x32xf32> to vector<16x32xf32>
    %177 = arith.addf %175, %176 : vector<16x32xf32>
    %178 = arith.addf %163, %177 : vector<16x32xf32>
    %cst_63 = arith.constant dense<0.000000e+00> : vector<16xf32>
    %179 = vector.multi_reduction <add>, %178, %cst_63 [1] : vector<16x32xf32> to vector<16xf32>
    %180 = vector.shape_cast %179 : vector<16xf32> to vector<16x1xf32>
    %cst_64 = arith.constant 3.200000e+01 : f32
    %181 = vector.broadcast %cst_64 : f32 to vector<16x1xf32>
    %182 = arith.divf %180, %181 : vector<16x1xf32>
    %183 = vector.broadcast %182 : vector<16x1xf32> to vector<16x32xf32>
    %184 = arith.subf %178, %183 : vector<16x32xf32>
    %185 = arith.mulf %184, %184 : vector<16x32xf32>
    %cst_65 = arith.constant dense<0.000000e+00> : vector<16xf32>
    %186 = vector.multi_reduction <add>, %185, %cst_65 [1] : vector<16x32xf32> to vector<16xf32>
    %187 = vector.shape_cast %186 : vector<16xf32> to vector<16x1xf32>
    %cst_66 = arith.constant 3.200000e+01 : f32
    %188 = vector.broadcast %cst_66 : f32 to vector<16x1xf32>
    %189 = arith.divf %187, %188 : vector<16x1xf32>
    %190 = vector.broadcast %182 : vector<16x1xf32> to vector<16x32xf32>
    %191 = arith.subf %178, %190 : vector<16x32xf32>
    %cst_67 = arith.constant 9.99999974E-6 : f32
    %192 = vector.broadcast %cst_67 : f32 to vector<16x1xf32>
    %193 = arith.addf %189, %192 : vector<16x1xf32>
    %194 = math.rsqrt %193 : vector<16x1xf32>
    %195 = vector.broadcast %194 : vector<16x1xf32> to vector<16x32xf32>
    %196 = arith.mulf %191, %195 : vector<16x32xf32>
    %197 = vector.broadcast %21 : vector<1x32xf32> to vector<16x32xf32>
    %198 = arith.mulf %196, %197 : vector<16x32xf32>
    %199 = vector.broadcast %22 : vector<1x32xf32> to vector<16x32xf32>
    %200 = arith.addf %198, %199 : vector<16x32xf32>
    %c72 = arith.constant 72 : index
    %c0_68 = arith.constant 0 : index
    %201 = vector.load %arg3[%c72, %c0_68] : memref<88x128xf32, #tpu.memory_space<vmem>>, vector<1x96xf32>
    %c73 = arith.constant 73 : index
    %c0_69 = arith.constant 0 : index
    %202 = vector.load %arg3[%c73, %c0_69] : memref<88x128xf32, #tpu.memory_space<vmem>>, vector<1x32xf32>
    %c74 = arith.constant 74 : index
    %c0_70 = arith.constant 0 : index
    %203 = vector.load %arg3[%c74, %c0_70] : memref<88x128xf32, #tpu.memory_space<vmem>>, vector<1x128xf32>
    %c75 = arith.constant 75 : index
    %c0_71 = arith.constant 0 : index
    %204 = vector.load %arg3[%c75, %c0_71] : memref<88x128xf32, #tpu.memory_space<vmem>>, vector<1x32xf32>
    %c76 = arith.constant 76 : index
    %c0_72 = arith.constant 0 : index
    %205 = vector.load %arg3[%c76, %c0_72] : memref<88x128xf32, #tpu.memory_space<vmem>>, vector<1x32xf32>
    %c77 = arith.constant 77 : index
    %c0_73 = arith.constant 0 : index
    %206 = vector.load %arg3[%c77, %c0_73] : memref<88x128xf32, #tpu.memory_space<vmem>>, vector<1x32xf32>
    %c78 = arith.constant 78 : index
    %c0_74 = arith.constant 0 : index
    %207 = vector.load %arg3[%c78, %c0_74] : memref<88x128xf32, #tpu.memory_space<vmem>>, vector<1x32xf32>
    %c79 = arith.constant 79 : index
    %c0_75 = arith.constant 0 : index
    %208 = vector.load %arg3[%c79, %c0_75] : memref<88x128xf32, #tpu.memory_space<vmem>>, vector<1x32xf32>
    %c1 = arith.constant 1 : index
    %c0_76 = arith.constant 0 : index
    %c0_77 = arith.constant 0 : index
    %209 = vector.load %arg1[%c1, %c0_76, %c0_77] : memref<2x32x256xbf16, #tpu.memory_space<vmem>>, vector<1x32x96xbf16>
    %210 = vector.shape_cast %209 : vector<1x32x96xbf16> to vector<32x96xbf16>
    %211 = arith.truncf %200 : vector<16x32xf32> to vector<16x32xbf16>
    %cst_78 = arith.constant dense<0.000000e+00> : vector<16x96xf32>
    %212 = tpu.matmul %211, %210, %cst_78 {dimension_numbers = #tpu.dot_dimension_numbers<[1], [0], [0], [1], [0, 0, 1, 1], [], []>} : vector<16x32xbf16>, vector<32x96xbf16>, vector<16x96xf32> -> vector<16x96xf32>
    %213 = vector.broadcast %201 : vector<1x96xf32> to vector<16x96xf32>
    %214 = arith.addf %212, %213 : vector<16x96xf32>
    %215 = vector.extract_strided_slice %214 {offsets = [0, 0], sizes = [16, 32], strides = [1, 1]} : vector<16x96xf32> to vector<16x32xf32>
    %216 = vector.extract_strided_slice %214 {offsets = [0, 32], sizes = [16, 32], strides = [1, 1]} : vector<16x96xf32> to vector<16x32xf32>
    %217 = vector.extract_strided_slice %214 {offsets = [0, 64], sizes = [16, 32], strides = [1, 1]} : vector<16x96xf32> to vector<16x32xf32>
    %218 = vector.extract_strided_slice %215 {offsets = [0, 0], sizes = [16, 8], strides = [1, 1]} : vector<16x32xf32> to vector<16x8xf32>
    %219 = arith.truncf %218 : vector<16x8xf32> to vector<16x8xbf16>
    %220 = vector.extract_strided_slice %216 {offsets = [0, 0], sizes = [16, 8], strides = [1, 1]} : vector<16x32xf32> to vector<16x8xf32>
    %221 = arith.truncf %220 : vector<16x8xf32> to vector<16x8xbf16>
    %222 = vector.extract_strided_slice %217 {offsets = [0, 0], sizes = [16, 8], strides = [1, 1]} : vector<16x32xf32> to vector<16x8xf32>
    %223 = arith.truncf %222 : vector<16x8xf32> to vector<16x8xbf16>
    %cst_79 = arith.constant dense<0.000000e+00> : vector<16x16xf32>
    %224 = tpu.matmul %219, %221, %cst_79 {dimension_numbers = #tpu.dot_dimension_numbers<[1], [1], [0], [0], [0, 0, 1, 0], [], []>} : vector<16x8xbf16>, vector<16x8xbf16>, vector<16x16xf32> -> vector<16x16xf32>
    %cst_80 = arith.constant 0.353553385 : f32
    %225 = vector.broadcast %cst_80 : f32 to vector<16x16xf32>
    %226 = arith.mulf %224, %225 : vector<16x16xf32>
    %227 = arith.addf %226, %14 : vector<16x16xf32>
    %cst_81 = arith.constant dense<0xFF800000> : vector<16xf32>
    %228 = vector.multi_reduction <maximumf>, %227, %cst_81 [1] : vector<16x16xf32> to vector<16xf32>
    %229 = vector.shape_cast %228 : vector<16xf32> to vector<16x1xf32>
    %230 = vector.broadcast %229 : vector<16x1xf32> to vector<16x16xf32>
    %231 = arith.subf %227, %230 : vector<16x16xf32>
    %232 = math.exp %231 : vector<16x16xf32>
    %cst_82 = arith.constant dense<0.000000e+00> : vector<16xf32>
    %233 = vector.multi_reduction <add>, %232, %cst_82 [1] : vector<16x16xf32> to vector<16xf32>
    %234 = vector.shape_cast %233 : vector<16xf32> to vector<16x1xf32>
    %235 = tpu.reciprocal %234 {approx = true} : vector<16x1xf32> -> vector<16x1xf32>
    %236 = vector.broadcast %235 : vector<16x1xf32> to vector<16x16xf32>
    %237 = arith.mulf %232, %236 : vector<16x16xf32>
    %238 = arith.truncf %237 : vector<16x16xf32> to vector<16x16xbf16>
    %cst_83 = arith.constant dense<0.000000e+00> : vector<16x8xf32>
    %239 = tpu.matmul %238, %223, %cst_83 {dimension_numbers = #tpu.dot_dimension_numbers<[1], [0], [0], [1], [0, 0, 1, 1], [], []>} : vector<16x16xbf16>, vector<16x8xbf16>, vector<16x8xf32> -> vector<16x8xf32>
    %240 = arith.truncf %239 : vector<16x8xf32> to vector<16x8xbf16>
    %c1_84 = arith.constant 1 : index
    %c0_85 = arith.constant 0 : index
    %c96_86 = arith.constant 96 : index
    %241 = vector.load %arg1[%c1_84, %c0_85, %c96_86] : memref<2x32x256xbf16, #tpu.memory_space<vmem>>, vector<1x8x32xbf16>
    %242 = vector.shape_cast %241 : vector<1x8x32xbf16> to vector<8x32xbf16>
    %cst_87 = arith.constant dense<0.000000e+00> : vector<16x32xf32>
    %243 = tpu.matmul %240, %242, %cst_87 {dimension_numbers = #tpu.dot_dimension_numbers<[1], [0], [0], [1], [0, 0, 1, 1], [], []>} : vector<16x8xbf16>, vector<8x32xbf16>, vector<16x32xf32> -> vector<16x32xf32>
    %244 = vector.extract_strided_slice %215 {offsets = [0, 8], sizes = [16, 8], strides = [1, 1]} : vector<16x32xf32> to vector<16x8xf32>
    %245 = arith.truncf %244 : vector<16x8xf32> to vector<16x8xbf16>
    %246 = vector.extract_strided_slice %216 {offsets = [0, 8], sizes = [16, 8], strides = [1, 1]} : vector<16x32xf32> to vector<16x8xf32>
    %247 = arith.truncf %246 : vector<16x8xf32> to vector<16x8xbf16>
    %248 = vector.extract_strided_slice %217 {offsets = [0, 8], sizes = [16, 8], strides = [1, 1]} : vector<16x32xf32> to vector<16x8xf32>
    %249 = arith.truncf %248 : vector<16x8xf32> to vector<16x8xbf16>
    %cst_88 = arith.constant dense<0.000000e+00> : vector<16x16xf32>
    %250 = tpu.matmul %245, %247, %cst_88 {dimension_numbers = #tpu.dot_dimension_numbers<[1], [1], [0], [0], [0, 0, 1, 0], [], []>} : vector<16x8xbf16>, vector<16x8xbf16>, vector<16x16xf32> -> vector<16x16xf32>
    %cst_89 = arith.constant 0.353553385 : f32
    %251 = vector.broadcast %cst_89 : f32 to vector<16x16xf32>
    %252 = arith.mulf %250, %251 : vector<16x16xf32>
    %253 = arith.addf %252, %14 : vector<16x16xf32>
    %cst_90 = arith.constant dense<0xFF800000> : vector<16xf32>
    %254 = vector.multi_reduction <maximumf>, %253, %cst_90 [1] : vector<16x16xf32> to vector<16xf32>
    %255 = vector.shape_cast %254 : vector<16xf32> to vector<16x1xf32>
    %256 = vector.broadcast %255 : vector<16x1xf32> to vector<16x16xf32>
    %257 = arith.subf %253, %256 : vector<16x16xf32>
    %258 = math.exp %257 : vector<16x16xf32>
    %cst_91 = arith.constant dense<0.000000e+00> : vector<16xf32>
    %259 = vector.multi_reduction <add>, %258, %cst_91 [1] : vector<16x16xf32> to vector<16xf32>
    %260 = vector.shape_cast %259 : vector<16xf32> to vector<16x1xf32>
    %261 = tpu.reciprocal %260 {approx = true} : vector<16x1xf32> -> vector<16x1xf32>
    %262 = vector.broadcast %261 : vector<16x1xf32> to vector<16x16xf32>
    %263 = arith.mulf %258, %262 : vector<16x16xf32>
    %264 = arith.truncf %263 : vector<16x16xf32> to vector<16x16xbf16>
    %cst_92 = arith.constant dense<0.000000e+00> : vector<16x8xf32>
    %265 = tpu.matmul %264, %249, %cst_92 {dimension_numbers = #tpu.dot_dimension_numbers<[1], [0], [0], [1], [0, 0, 1, 1], [], []>} : vector<16x16xbf16>, vector<16x8xbf16>, vector<16x8xf32> -> vector<16x8xf32>
    %266 = arith.truncf %265 : vector<16x8xf32> to vector<16x8xbf16>
    %c1_93 = arith.constant 1 : index
    %c8_94 = arith.constant 8 : index
    %c96_95 = arith.constant 96 : index
    %267 = vector.load %arg1[%c1_93, %c8_94, %c96_95] : memref<2x32x256xbf16, #tpu.memory_space<vmem>>, vector<1x8x32xbf16>
    %268 = vector.shape_cast %267 : vector<1x8x32xbf16> to vector<8x32xbf16>
    %cst_96 = arith.constant dense<0.000000e+00> : vector<16x32xf32>
    %269 = tpu.matmul %266, %268, %cst_96 {dimension_numbers = #tpu.dot_dimension_numbers<[1], [0], [0], [1], [0, 0, 1, 1], [], []>} : vector<16x8xbf16>, vector<8x32xbf16>, vector<16x32xf32> -> vector<16x32xf32>
    %270 = arith.addf %243, %269 : vector<16x32xf32>
    %271 = vector.extract_strided_slice %215 {offsets = [0, 16], sizes = [16, 8], strides = [1, 1]} : vector<16x32xf32> to vector<16x8xf32>
    %272 = arith.truncf %271 : vector<16x8xf32> to vector<16x8xbf16>
    %273 = vector.extract_strided_slice %216 {offsets = [0, 16], sizes = [16, 8], strides = [1, 1]} : vector<16x32xf32> to vector<16x8xf32>
    %274 = arith.truncf %273 : vector<16x8xf32> to vector<16x8xbf16>
    %275 = vector.extract_strided_slice %217 {offsets = [0, 16], sizes = [16, 8], strides = [1, 1]} : vector<16x32xf32> to vector<16x8xf32>
    %276 = arith.truncf %275 : vector<16x8xf32> to vector<16x8xbf16>
    %cst_97 = arith.constant dense<0.000000e+00> : vector<16x16xf32>
    %277 = tpu.matmul %272, %274, %cst_97 {dimension_numbers = #tpu.dot_dimension_numbers<[1], [1], [0], [0], [0, 0, 1, 0], [], []>} : vector<16x8xbf16>, vector<16x8xbf16>, vector<16x16xf32> -> vector<16x16xf32>
    %cst_98 = arith.constant 0.353553385 : f32
    %278 = vector.broadcast %cst_98 : f32 to vector<16x16xf32>
    %279 = arith.mulf %277, %278 : vector<16x16xf32>
    %280 = arith.addf %279, %14 : vector<16x16xf32>
    %cst_99 = arith.constant dense<0xFF800000> : vector<16xf32>
    %281 = vector.multi_reduction <maximumf>, %280, %cst_99 [1] : vector<16x16xf32> to vector<16xf32>
    %282 = vector.shape_cast %281 : vector<16xf32> to vector<16x1xf32>
    %283 = vector.broadcast %282 : vector<16x1xf32> to vector<16x16xf32>
    %284 = arith.subf %280, %283 : vector<16x16xf32>
    %285 = math.exp %284 : vector<16x16xf32>
    %cst_100 = arith.constant dense<0.000000e+00> : vector<16xf32>
    %286 = vector.multi_reduction <add>, %285, %cst_100 [1] : vector<16x16xf32> to vector<16xf32>
    %287 = vector.shape_cast %286 : vector<16xf32> to vector<16x1xf32>
    %288 = tpu.reciprocal %287 {approx = true} : vector<16x1xf32> -> vector<16x1xf32>
    %289 = vector.broadcast %288 : vector<16x1xf32> to vector<16x16xf32>
    %290 = arith.mulf %285, %289 : vector<16x16xf32>
    %291 = arith.truncf %290 : vector<16x16xf32> to vector<16x16xbf16>
    %cst_101 = arith.constant dense<0.000000e+00> : vector<16x8xf32>
    %292 = tpu.matmul %291, %276, %cst_101 {dimension_numbers = #tpu.dot_dimension_numbers<[1], [0], [0], [1], [0, 0, 1, 1], [], []>} : vector<16x16xbf16>, vector<16x8xbf16>, vector<16x8xf32> -> vector<16x8xf32>
    %293 = arith.truncf %292 : vector<16x8xf32> to vector<16x8xbf16>
    %c1_102 = arith.constant 1 : index
    %c16_103 = arith.constant 16 : index
    %c96_104 = arith.constant 96 : index
    %294 = vector.load %arg1[%c1_102, %c16_103, %c96_104] : memref<2x32x256xbf16, #tpu.memory_space<vmem>>, vector<1x8x32xbf16>
    %295 = vector.shape_cast %294 : vector<1x8x32xbf16> to vector<8x32xbf16>
    %cst_105 = arith.constant dense<0.000000e+00> : vector<16x32xf32>
    %296 = tpu.matmul %293, %295, %cst_105 {dimension_numbers = #tpu.dot_dimension_numbers<[1], [0], [0], [1], [0, 0, 1, 1], [], []>} : vector<16x8xbf16>, vector<8x32xbf16>, vector<16x32xf32> -> vector<16x32xf32>
    %297 = arith.addf %270, %296 : vector<16x32xf32>
    %298 = vector.extract_strided_slice %215 {offsets = [0, 24], sizes = [16, 8], strides = [1, 1]} : vector<16x32xf32> to vector<16x8xf32>
    %299 = arith.truncf %298 : vector<16x8xf32> to vector<16x8xbf16>
    %300 = vector.extract_strided_slice %216 {offsets = [0, 24], sizes = [16, 8], strides = [1, 1]} : vector<16x32xf32> to vector<16x8xf32>
    %301 = arith.truncf %300 : vector<16x8xf32> to vector<16x8xbf16>
    %302 = vector.extract_strided_slice %217 {offsets = [0, 24], sizes = [16, 8], strides = [1, 1]} : vector<16x32xf32> to vector<16x8xf32>
    %303 = arith.truncf %302 : vector<16x8xf32> to vector<16x8xbf16>
    %cst_106 = arith.constant dense<0.000000e+00> : vector<16x16xf32>
    %304 = tpu.matmul %299, %301, %cst_106 {dimension_numbers = #tpu.dot_dimension_numbers<[1], [1], [0], [0], [0, 0, 1, 0], [], []>} : vector<16x8xbf16>, vector<16x8xbf16>, vector<16x16xf32> -> vector<16x16xf32>
    %cst_107 = arith.constant 0.353553385 : f32
    %305 = vector.broadcast %cst_107 : f32 to vector<16x16xf32>
    %306 = arith.mulf %304, %305 : vector<16x16xf32>
    %307 = arith.addf %306, %14 : vector<16x16xf32>
    %cst_108 = arith.constant dense<0xFF800000> : vector<16xf32>
    %308 = vector.multi_reduction <maximumf>, %307, %cst_108 [1] : vector<16x16xf32> to vector<16xf32>
    %309 = vector.shape_cast %308 : vector<16xf32> to vector<16x1xf32>
    %310 = vector.broadcast %309 : vector<16x1xf32> to vector<16x16xf32>
    %311 = arith.subf %307, %310 : vector<16x16xf32>
    %312 = math.exp %311 : vector<16x16xf32>
    %cst_109 = arith.constant dense<0.000000e+00> : vector<16xf32>
    %313 = vector.multi_reduction <add>, %312, %cst_109 [1] : vector<16x16xf32> to vector<16xf32>
    %314 = vector.shape_cast %313 : vector<16xf32> to vector<16x1xf32>
    %315 = tpu.reciprocal %314 {approx = true} : vector<16x1xf32> -> vector<16x1xf32>
    %316 = vector.broadcast %315 : vector<16x1xf32> to vector<16x16xf32>
    %317 = arith.mulf %312, %316 : vector<16x16xf32>
    %318 = arith.truncf %317 : vector<16x16xf32> to vector<16x16xbf16>
    %cst_110 = arith.constant dense<0.000000e+00> : vector<16x8xf32>
    %319 = tpu.matmul %318, %303, %cst_110 {dimension_numbers = #tpu.dot_dimension_numbers<[1], [0], [0], [1], [0, 0, 1, 1], [], []>} : vector<16x16xbf16>, vector<16x8xbf16>, vector<16x8xf32> -> vector<16x8xf32>
    %320 = arith.truncf %319 : vector<16x8xf32> to vector<16x8xbf16>
    %c1_111 = arith.constant 1 : index
    %c24_112 = arith.constant 24 : index
    %c96_113 = arith.constant 96 : index
    %321 = vector.load %arg1[%c1_111, %c24_112, %c96_113] : memref<2x32x256xbf16, #tpu.memory_space<vmem>>, vector<1x8x32xbf16>
    %322 = vector.shape_cast %321 : vector<1x8x32xbf16> to vector<8x32xbf16>
    %cst_114 = arith.constant dense<0.000000e+00> : vector<16x32xf32>
    %323 = tpu.matmul %320, %322, %cst_114 {dimension_numbers = #tpu.dot_dimension_numbers<[1], [0], [0], [1], [0, 0, 1, 1], [], []>} : vector<16x8xbf16>, vector<8x32xbf16>, vector<16x32xf32> -> vector<16x32xf32>
    %324 = arith.addf %297, %323 : vector<16x32xf32>
    %325 = arith.addf %200, %324 : vector<16x32xf32>
    %326 = vector.broadcast %202 : vector<1x32xf32> to vector<16x32xf32>
    %327 = arith.addf %325, %326 : vector<16x32xf32>
    %cst_115 = arith.constant dense<0.000000e+00> : vector<16xf32>
    %328 = vector.multi_reduction <add>, %327, %cst_115 [1] : vector<16x32xf32> to vector<16xf32>
    %329 = vector.shape_cast %328 : vector<16xf32> to vector<16x1xf32>
    %cst_116 = arith.constant 3.200000e+01 : f32
    %330 = vector.broadcast %cst_116 : f32 to vector<16x1xf32>
    %331 = arith.divf %329, %330 : vector<16x1xf32>
    %332 = vector.broadcast %331 : vector<16x1xf32> to vector<16x32xf32>
    %333 = arith.subf %327, %332 : vector<16x32xf32>
    %334 = arith.mulf %333, %333 : vector<16x32xf32>
    %cst_117 = arith.constant dense<0.000000e+00> : vector<16xf32>
    %335 = vector.multi_reduction <add>, %334, %cst_117 [1] : vector<16x32xf32> to vector<16xf32>
    %336 = vector.shape_cast %335 : vector<16xf32> to vector<16x1xf32>
    %cst_118 = arith.constant 3.200000e+01 : f32
    %337 = vector.broadcast %cst_118 : f32 to vector<16x1xf32>
    %338 = arith.divf %336, %337 : vector<16x1xf32>
    %339 = vector.broadcast %331 : vector<16x1xf32> to vector<16x32xf32>
    %340 = arith.subf %327, %339 : vector<16x32xf32>
    %cst_119 = arith.constant 9.99999974E-6 : f32
    %341 = vector.broadcast %cst_119 : f32 to vector<16x1xf32>
    %342 = arith.addf %338, %341 : vector<16x1xf32>
    %343 = math.rsqrt %342 : vector<16x1xf32>
    %344 = vector.broadcast %343 : vector<16x1xf32> to vector<16x32xf32>
    %345 = arith.mulf %340, %344 : vector<16x32xf32>
    %346 = vector.broadcast %205 : vector<1x32xf32> to vector<16x32xf32>
    %347 = arith.mulf %345, %346 : vector<16x32xf32>
    %348 = vector.broadcast %206 : vector<1x32xf32> to vector<16x32xf32>
    %349 = arith.addf %347, %348 : vector<16x32xf32>
    %c1_120 = arith.constant 1 : index
    %c0_121 = arith.constant 0 : index
    %c128_122 = arith.constant 128 : index
    %350 = vector.load %arg1[%c1_120, %c0_121, %c128_122] : memref<2x32x256xbf16, #tpu.memory_space<vmem>>, vector<1x32x128xbf16>
    %351 = vector.shape_cast %350 : vector<1x32x128xbf16> to vector<32x128xbf16>
    %352 = arith.truncf %349 : vector<16x32xf32> to vector<16x32xbf16>
    %cst_123 = arith.constant dense<0.000000e+00> : vector<16x128xf32>
    %353 = tpu.matmul %352, %351, %cst_123 {dimension_numbers = #tpu.dot_dimension_numbers<[1], [0], [0], [1], [0, 0, 1, 1], [], []>} : vector<16x32xbf16>, vector<32x128xbf16>, vector<16x128xf32> -> vector<16x128xf32>
    %354 = vector.broadcast %203 : vector<1x128xf32> to vector<16x128xf32>
    %355 = arith.addf %353, %354 : vector<16x128xf32>
    %cst_124 = arith.constant 0.000000e+00 : f32
    %356 = vector.broadcast %cst_124 : f32 to vector<16x128xf32>
    %357 = arith.maximumf %355, %356 : vector<16x128xf32>
    %c1_125 = arith.constant 1 : index
    %c0_126 = arith.constant 0 : index
    %c0_127 = arith.constant 0 : index
    %358 = vector.load %arg2[%c1_125, %c0_126, %c0_127] : memref<2x128x32xbf16, #tpu.memory_space<vmem>>, vector<1x128x32xbf16>
    %359 = vector.shape_cast %358 : vector<1x128x32xbf16> to vector<128x32xbf16>
    %360 = arith.truncf %357 : vector<16x128xf32> to vector<16x128xbf16>
    %cst_128 = arith.constant dense<0.000000e+00> : vector<16x32xf32>
    %361 = tpu.matmul %360, %359, %cst_128 {dimension_numbers = #tpu.dot_dimension_numbers<[1], [0], [0], [1], [0, 0, 1, 1], [], []>} : vector<16x128xbf16>, vector<128x32xbf16>, vector<16x32xf32> -> vector<16x32xf32>
    %362 = vector.broadcast %204 : vector<1x32xf32> to vector<16x32xf32>
    %363 = arith.addf %361, %362 : vector<16x32xf32>
    %364 = arith.addf %349, %363 : vector<16x32xf32>
    %cst_129 = arith.constant dense<0.000000e+00> : vector<16xf32>
    %365 = vector.multi_reduction <add>, %364, %cst_129 [1] : vector<16x32xf32> to vector<16xf32>
    %366 = vector.shape_cast %365 : vector<16xf32> to vector<16x1xf32>
    %cst_130 = arith.constant 3.200000e+01 : f32
    %367 = vector.broadcast %cst_130 : f32 to vector<16x1xf32>
    %368 = arith.divf %366, %367 : vector<16x1xf32>
    %369 = vector.broadcast %368 : vector<16x1xf32> to vector<16x32xf32>
    %370 = arith.subf %364, %369 : vector<16x32xf32>
    %371 = arith.mulf %370, %370 : vector<16x32xf32>
    %cst_131 = arith.constant dense<0.000000e+00> : vector<16xf32>
    %372 = vector.multi_reduction <add>, %371, %cst_131 [1] : vector<16x32xf32> to vector<16xf32>
    %373 = vector.shape_cast %372 : vector<16xf32> to vector<16x1xf32>
    %cst_132 = arith.constant 3.200000e+01 : f32
    %374 = vector.broadcast %cst_132 : f32 to vector<16x1xf32>
    %375 = arith.divf %373, %374 : vector<16x1xf32>
    %376 = vector.broadcast %368 : vector<16x1xf32> to vector<16x32xf32>
    %377 = arith.subf %364, %376 : vector<16x32xf32>
    %cst_133 = arith.constant 9.99999974E-6 : f32
    %378 = vector.broadcast %cst_133 : f32 to vector<16x1xf32>
    %379 = arith.addf %375, %378 : vector<16x1xf32>
    %380 = math.rsqrt %379 : vector<16x1xf32>
    %381 = vector.broadcast %380 : vector<16x1xf32> to vector<16x32xf32>
    %382 = arith.mulf %377, %381 : vector<16x32xf32>
    %383 = vector.broadcast %207 : vector<1x32xf32> to vector<16x32xf32>
    %384 = arith.mulf %382, %383 : vector<16x32xf32>
    %385 = vector.broadcast %208 : vector<1x32xf32> to vector<16x32xf32>
    %386 = arith.addf %384, %385 : vector<16x32xf32>
    %c80 = arith.constant 80 : index
    %c0_134 = arith.constant 0 : index
    %387 = vector.load %arg3[%c80, %c0_134] : memref<88x128xf32, #tpu.memory_space<vmem>>, vector<1x128xf32>
    %388 = vector.extract_strided_slice %387 {offsets = [0, 21], sizes = [1, 1], strides = [1, 1]} : vector<1x128xf32> to vector<1x1xf32>
    %389 = vector.extract_strided_slice %387 {offsets = [0, 22], sizes = [1, 1], strides = [1, 1]} : vector<1x128xf32> to vector<1x1xf32>
    %c24_135 = arith.constant 24 : index
    %c0_136 = arith.constant 0 : index
    %390 = vector.load %arg3[%c24_135, %c0_136] : memref<88x128xf32, #tpu.memory_space<vmem>>, vector<32x24xf32>
    %391 = arith.truncf %386 : vector<16x32xf32> to vector<16x32xbf16>
    %392 = arith.truncf %390 : vector<32x24xf32> to vector<32x24xbf16>
    %cst_137 = arith.constant dense<0.000000e+00> : vector<16x24xf32>
    %393 = tpu.matmul %391, %392, %cst_137 {dimension_numbers = #tpu.dot_dimension_numbers<[1], [0], [0], [1], [0, 0, 1, 1], [], []>} : vector<16x32xbf16>, vector<32x24xbf16>, vector<16x24xf32> -> vector<16x24xf32>
    %394 = vector.extract_strided_slice %393 {offsets = [0, 0], sizes = [16, 8], strides = [1, 1]} : vector<16x24xf32> to vector<16x8xf32>
    %395 = vector.extract_strided_slice %393 {offsets = [0, 8], sizes = [16, 8], strides = [1, 1]} : vector<16x24xf32> to vector<16x8xf32>
    %396 = vector.extract_strided_slice %393 {offsets = [0, 16], sizes = [16, 8], strides = [1, 1]} : vector<16x24xf32> to vector<16x8xf32>
    %397 = vector.broadcast %388 : vector<1x1xf32> to vector<16x8xf32>
    %398 = arith.mulf %397, %394 : vector<16x8xf32>
    %cst_138 = arith.constant 1.000000e+00 : f32
    %399 = vector.broadcast %cst_138 : f32 to vector<1x1xf32>
    %400 = arith.subf %399, %388 : vector<1x1xf32>
    %401 = vector.broadcast %400 : vector<1x1xf32> to vector<16x8xf32>
    %402 = arith.mulf %401, %395 : vector<16x8xf32>
    %403 = arith.addf %398, %402 : vector<16x8xf32>
    %c56 = arith.constant 56 : index
    %c0_139 = arith.constant 0 : index
    %404 = vector.load %arg3[%c56, %c0_139] : memref<88x128xf32, #tpu.memory_space<vmem>>, vector<8x8xf32>
    %405 = arith.truncf %396 : vector<16x8xf32> to vector<16x8xbf16>
    %406 = arith.truncf %404 : vector<8x8xf32> to vector<8x8xbf16>
    %cst_140 = arith.constant dense<0.000000e+00> : vector<16x8xf32>
    %407 = tpu.matmul %405, %406, %cst_140 {dimension_numbers = #tpu.dot_dimension_numbers<[1], [0], [0], [1], [0, 0, 1, 1], [], []>} : vector<16x8xbf16>, vector<8x8xbf16>, vector<16x8xf32> -> vector<16x8xf32>
    %408 = arith.subf %403, %407 : vector<16x8xf32>
    %409 = arith.mulf %408, %408 : vector<16x8xf32>
    %cst_141 = arith.constant dense<0.000000e+00> : vector<16xf32>
    %410 = vector.multi_reduction <add>, %409, %cst_141 [1] : vector<16x8xf32> to vector<16xf32>
    %411 = vector.shape_cast %410 : vector<16xf32> to vector<16x1xf32>
    %cst_142 = arith.constant 8.000000e+00 : f32
    %412 = vector.broadcast %cst_142 : f32 to vector<16x1xf32>
    %413 = arith.divf %411, %412 : vector<16x1xf32>
    %414 = arith.mulf %403, %403 : vector<16x8xf32>
    %cst_143 = arith.constant dense<0.000000e+00> : vector<16xf32>
    %415 = vector.multi_reduction <add>, %414, %cst_143 [1] : vector<16x8xf32> to vector<16xf32>
    %416 = vector.shape_cast %415 : vector<16xf32> to vector<16x1xf32>
    %417 = math.sqrt %416 : vector<16x1xf32>
    %cst_144 = arith.constant 9.99999997E-7 : f32
    %418 = vector.broadcast %cst_144 : f32 to vector<16x1xf32>
    %419 = arith.addf %417, %418 : vector<16x1xf32>
    %420 = arith.mulf %407, %407 : vector<16x8xf32>
    %cst_145 = arith.constant dense<0.000000e+00> : vector<16xf32>
    %421 = vector.multi_reduction <add>, %420, %cst_145 [1] : vector<16x8xf32> to vector<16xf32>
    %422 = vector.shape_cast %421 : vector<16xf32> to vector<16x1xf32>
    %423 = math.sqrt %422 : vector<16x1xf32>
    %cst_146 = arith.constant 9.99999997E-7 : f32
    %424 = vector.broadcast %cst_146 : f32 to vector<16x1xf32>
    %425 = arith.addf %423, %424 : vector<16x1xf32>
    %426 = tpu.reciprocal %419 {approx = true} : vector<16x1xf32> -> vector<16x1xf32>
    %427 = vector.broadcast %426 : vector<16x1xf32> to vector<16x8xf32>
    %428 = arith.mulf %403, %427 : vector<16x8xf32>
    %429 = tpu.reciprocal %425 {approx = true} : vector<16x1xf32> -> vector<16x1xf32>
    %430 = vector.broadcast %429 : vector<16x1xf32> to vector<16x8xf32>
    %431 = arith.mulf %407, %430 : vector<16x8xf32>
    %432 = arith.subf %428, %431 : vector<16x8xf32>
    %433 = arith.mulf %432, %432 : vector<16x8xf32>
    %cst_147 = arith.constant dense<0.000000e+00> : vector<16xf32>
    %434 = vector.multi_reduction <add>, %433, %cst_147 [1] : vector<16x8xf32> to vector<16xf32>
    %435 = vector.shape_cast %434 : vector<16xf32> to vector<16x1xf32>
    %cst_148 = arith.constant 8.000000e+00 : f32
    %436 = vector.broadcast %cst_148 : f32 to vector<16x1xf32>
    %437 = arith.divf %435, %436 : vector<16x1xf32>
    %438 = math.absf %389 : vector<1x1xf32>
    %439 = vector.broadcast %438 : vector<1x1xf32> to vector<16x1xf32>
    %440 = arith.mulf %439, %437 : vector<16x1xf32>
    %441 = arith.addf %413, %440 : vector<16x1xf32>
    %442 = vector.extract_strided_slice %394 {offsets = [0, 0], sizes = [16, 1], strides = [1, 1]} : vector<16x8xf32> to vector<16x1xf32>
    %443 = vector.extract_strided_slice %394 {offsets = [0, 1], sizes = [16, 1], strides = [1, 1]} : vector<16x8xf32> to vector<16x1xf32>
    %444 = vector.extract_strided_slice %394 {offsets = [0, 2], sizes = [16, 1], strides = [1, 1]} : vector<16x8xf32> to vector<16x1xf32>
    %445 = vector.extract_strided_slice %395 {offsets = [0, 0], sizes = [16, 1], strides = [1, 1]} : vector<16x8xf32> to vector<16x1xf32>
    %446 = vector.extract_strided_slice %395 {offsets = [0, 1], sizes = [16, 1], strides = [1, 1]} : vector<16x8xf32> to vector<16x1xf32>
    %447 = vector.extract_strided_slice %395 {offsets = [0, 2], sizes = [16, 1], strides = [1, 1]} : vector<16x8xf32> to vector<16x1xf32>
    %448 = arith.mulf %443, %447 : vector<16x1xf32>
    %449 = arith.mulf %444, %446 : vector<16x1xf32>
    %450 = arith.subf %448, %449 : vector<16x1xf32>
    %451 = arith.mulf %444, %445 : vector<16x1xf32>
    %452 = arith.mulf %442, %447 : vector<16x1xf32>
    %453 = arith.subf %451, %452 : vector<16x1xf32>
    %454 = arith.mulf %442, %446 : vector<16x1xf32>
    %455 = arith.mulf %443, %445 : vector<16x1xf32>
    %456 = arith.subf %454, %455 : vector<16x1xf32>
    %457 = vector.extract_strided_slice %387 {offsets = [0, 0], sizes = [1, 8], strides = [1, 1]} : vector<1x128xf32> to vector<1x8xf32>
    %458 = vector.broadcast %457 : vector<1x8xf32> to vector<16x8xf32>
    %459 = arith.mulf %403, %458 : vector<16x8xf32>
    %cst_149 = arith.constant dense<0.000000e+00> : vector<16xf32>
    %460 = vector.multi_reduction <add>, %459, %cst_149 [1] : vector<16x8xf32> to vector<16xf32>
    %461 = vector.shape_cast %460 : vector<16xf32> to vector<16x1xf32>
    %462 = vector.extract_strided_slice %387 {offsets = [0, 8], sizes = [1, 8], strides = [1, 1]} : vector<1x128xf32> to vector<1x8xf32>
    %463 = vector.broadcast %462 : vector<1x8xf32> to vector<16x8xf32>
    %464 = arith.mulf %407, %463 : vector<16x8xf32>
    %cst_150 = arith.constant dense<0.000000e+00> : vector<16xf32>
    %465 = vector.multi_reduction <add>, %464, %cst_150 [1] : vector<16x8xf32> to vector<16xf32>
    %466 = vector.shape_cast %465 : vector<16xf32> to vector<16x1xf32>
    %467 = arith.addf %461, %466 : vector<16x1xf32>
    %468 = vector.extract_strided_slice %387 {offsets = [0, 16], sizes = [1, 1], strides = [1, 1]} : vector<1x128xf32> to vector<1x1xf32>
    %469 = vector.broadcast %468 : vector<1x1xf32> to vector<16x1xf32>
    %470 = arith.mulf %450, %469 : vector<16x1xf32>
    %471 = arith.addf %467, %470 : vector<16x1xf32>
    %472 = vector.extract_strided_slice %387 {offsets = [0, 17], sizes = [1, 1], strides = [1, 1]} : vector<1x128xf32> to vector<1x1xf32>
    %473 = vector.broadcast %472 : vector<1x1xf32> to vector<16x1xf32>
    %474 = arith.mulf %453, %473 : vector<16x1xf32>
    %475 = arith.addf %471, %474 : vector<16x1xf32>
    %476 = vector.extract_strided_slice %387 {offsets = [0, 18], sizes = [1, 1], strides = [1, 1]} : vector<1x128xf32> to vector<1x1xf32>
    %477 = vector.broadcast %476 : vector<1x1xf32> to vector<16x1xf32>
    %478 = arith.mulf %456, %477 : vector<16x1xf32>
    %479 = arith.addf %475, %478 : vector<16x1xf32>
    %480 = vector.extract_strided_slice %387 {offsets = [0, 19], sizes = [1, 1], strides = [1, 1]} : vector<1x128xf32> to vector<1x1xf32>
    %481 = vector.broadcast %480 : vector<1x1xf32> to vector<16x1xf32>
    %482 = arith.mulf %441, %481 : vector<16x1xf32>
    %483 = arith.addf %479, %482 : vector<16x1xf32>
    %484 = vector.extract_strided_slice %387 {offsets = [0, 20], sizes = [1, 1], strides = [1, 1]} : vector<1x128xf32> to vector<1x1xf32>
    %485 = vector.broadcast %484 : vector<1x1xf32> to vector<16x1xf32>
    %486 = arith.addf %483, %485 : vector<16x1xf32>
    %487 = tpu.concatenate %486, %441 in 1 : vector<16x1xf32>, vector<16x1xf32> -> vector<16x2xf32>
    %c0_151 = arith.constant 0 : index
    %c0_152 = arith.constant 0 : index
    %488 = vector.load %arg4[%c0_151, %c0_152] : memref<16x2xf32, #tpu.memory_space<vmem>>, vector<16x2xf32>
    tpu.vector_store %arg4[%c0_151, %c0_152], %487 {strides = array<i32>} : memref<16x2xf32, #tpu.memory_space<vmem>>, vector<16x2xf32>,
    return
  }
}

</mosaic_0001>

<llo_original>
// kernel: helix_transformer_forward.1
$region0: #{helix_transformer_forward.1}
  #allocation0 [shape = 'u32[]', space=smem, size = 0x4, offset = 0x4, fixed_abs, tag = 'smem constant byte address 0x4 - core index']
  #allocation1 [shape = 'u32[144,128]{1,0:T(1,128)}', space=vmem, size = 0x12000, scoped, tag = 'internal scratch']
  %s0 = inlined_call_operand.vmem [shape: f32[16,20], index: 0, kind: input, shape index: {}]
  %s1 = inlined_call_operand.vmem [shape: bf16[2,32,256], index: 1, kind: input, shape index: {}]
  %s2 = inlined_call_operand.vmem [shape: bf16[2,128,32], index: 2, kind: input, shape index: {}]
  %s3 = inlined_call_operand.vmem [shape: f32[88,128], index: 3, kind: input, shape index: {}]
  %s4 = inlined_call_operand.vmem [shape: f32[16,2], index: 4, kind: output, shape index: {}]
  %s5 = sld [smem:[#allocation0]]
  $region26: #{helix_transformer_forward.1} parent=0
    _
  %s7 = ssub.s32 1, %s5
  %s8 = scalar_select 0, %s7, %s5
  // Predicated region
  $region2: #{helix_transformer_forward.1} parent=0 // pred_check
    _
  $region3: #{helix_transformer_forward.1} parent=0 // pred_check_branch
    %10 = sbr.rel (0) target = $region5
  $region4: #{helix_transformer_forward.1} parent=0 // pred_region
    _
  $region5: #{helix_transformer_forward.1} parent=0 // pred_fallthru
    _
  // Predicated region
  $region6: #{helix_transformer_forward.1} parent=0 // pred_check
    _
  $region7: #{helix_transformer_forward.1} parent=0 // pred_check_branch
    %12 = sbr.rel (0) target = $region9
  $region8: #{helix_transformer_forward.1} parent=0 // pred_region
    _
  $region9: #{helix_transformer_forward.1} parent=0 // pred_fallthru
    _
  // Predicated region
  $region10: #{helix_transformer_forward.1} parent=0 // pred_check
    _
  $region11: #{helix_transformer_forward.1} parent=0 // pred_check_branch
    %14 = sbr.rel (0) target = $region13
  $region12: #{helix_transformer_forward.1} parent=0 // pred_region
    _
  $region13: #{helix_transformer_forward.1} parent=0 // pred_fallthru
    _
  // Predicated region
  $region14: #{helix_transformer_forward.1} parent=0 // pred_check
    _
  $region15: #{helix_transformer_forward.1} parent=0 // pred_check_branch
    %16 = sbr.rel (0) target = $region17
  $region16: #{helix_transformer_forward.1} parent=0 // pred_region
    _
  $region17: #{helix_transformer_forward.1} parent=0 // pred_fallthru
    _
  %v18 = vld [vmem:[%s0] sm:$0xff]
  %v19 = vld [vmem:[%s0 + $0x8] sm:$0xff]
  %v20 = vld [vmem:[%s3] sm:$0xff]
  %v21 = vld [vmem:[%s3 + $0x8] sm:$0xff]
  %v22 = vld [vmem:[%s3 + $0x10] sm:$0xf]
  %v23 = vpack.c.bf16 %v19, %v18
  %v24 = vpack.c.bf16 %v21, %v20
  %v25 = vpack.c.bf16 %v22, %v22
  %vm26 = vcmask 162816
  %v28 = vsel %vm26, %v23, 0
  %vm30 = vcmask 1041408
  %v32 = vsel %vm30, %v25, 0
  %34 = vmatprep.subr.bf16.mxu0 0
  %35 = vmatpush1.bf16.msra.mxu0 %v24
  %36 = vmatprep.subr.bf16.mxu0 0
  %37 = vmatpush1.bf16.msra.mxu0 %v32
  %38 = vmatprep.subr.bf16.mxu0 0
  %39 = vmatpush1.bf16.msra.mxu0 0
  %40 = vmatprep.subr.bf16.mxu0 0
  %41 = vmatpush1.bf16.msra.mxu0 0
  %42 = vmatprep.subr.bf16.mxu0 0
  %43 = vmatpush1.bf16.msra.mxu0 0
  %44 = vmatprep.subr.bf16.mxu0 0
  %45 = vmatpush1.bf16.msra.mxu0 0
  %46 = vmatprep.subr.bf16.mxu0 0
  %47 = vmatpush1.bf16.msra.mxu0 0
  %48 = vmatprep.subr.bf16.mxu0 0
  %49 = vmatpush1.bf16.msra.mxu0 0
  %50 = vmatprep.subr.bf16.mxu0 0
  %51 = vmatpush1.bf16.msra.mxu0 0
  %52 = vmatprep.subr.bf16.mxu0 0
  %53 = vmatpush1.bf16.msra.mxu0 0
  %54 = vmatprep.subr.bf16.mxu0 0
  %55 = vmatpush1.bf16.msra.mxu0 0
  %56 = vmatprep.subr.bf16.mxu0 0
  %57 = vmatpush1.bf16.msra.mxu0 0
  %58 = vmatprep.subr.bf16.mxu0 0
  %59 = vmatpush1.bf16.msra.mxu0 0
  %60 = vmatprep.subr.bf16.mxu0 0
  %61 = vmatpush1.bf16.msra.mxu0 0
  %62 = vmatprep.subr.bf16.mxu0 0
  %63 = vmatpush1.bf16.msra.mxu0 0
  %64 = vmatprep.subr.bf16.mxu0 0
  %65 = vmatpush1.bf16.msra.mxu0 0
  %66 = vmatprep.mubr.bf16.mxu0 0
  %67 = vmatmul.mubr.bf16.gmra.mrb[0].mxu0 %v28
  %v68 = vpop.f32.mrb[0].mxu0
  %v69 = vadd.f32 0.0, %v68
  %v70 = vpop.f32.mrb[0].mxu0
  %v71 = vpop.f32.mrb[0].mxu0
  %v72 = vadd.f32 0.0, %v71
  %v73 = vpop.f32.mrb[0].mxu0
  %74 = vdwg.mxu0
  %v75 = vlaneseq
  %v76 = vshrl.u32 %v75, 7
  %v77 = vadd.s32 %v76, 8
  %v78 = vlaneseq
  %v79 = vand.u32 %v78, 127
  %v80 = vshra.s32 %v76, 3
  %v81 = vshra.s32 %v77, 3
  %v82 = vshra.s32 %v79, 3
  %vm83 = vcmp.eq.s32.totalorder %v80, %v82
  %vm84 = vcmp.eq.s32.totalorder %v81, %v82
  %v85 = vsel %vm83, 0.0, -1e+30
  %v86 = vsel %vm84, 0.0, -1e+30
  %v87 = vld [vmem:[%s3 + $0x40] sm:$0x1]
  %v88 = vld [vmem:[%s3 + $0x41] sm:$0x1]
  %v89 = vld [vmem:[%s3 + $0x42] sm:$0x1]
  %v90 = vld [vmem:[%s3 + $0x43] sm:$0x1]
  %v91 = vld [vmem:[%s3 + $0x44] sm:$0x1]
  %v92 = vld [vmem:[%s3 + $0x45] sm:$0x1]
  %v93 = vld [vmem:[%s3 + $0x46] sm:$0x1]
  %v94 = vld [vmem:[%s3 + $0x47] sm:$0x1]
  %v95 = vld [vmem:[%s1] sm:$0xf]
  %v96 = vld [vmem:[%s1 + $0x8] sm:$0xf]
  %v97 = vld [vmem:[%s1 + $0x10] sm:$0xf]
  %v98 = vld [vmem:[%s1 + $0x18] sm:$0xf]
  %v99 = vpack.c.bf16 %v72, %v69
  %v100 = vlaneseq
  %v101 = vshrl.u32 %v100, 7
  %v102 = vsub.s32 0, %v101
  %v103 = vrot.slane %v87, %v102
  %v108 = vunpack.c.l.b16 %v95
  %v109 = vunpack.c.l.b16 %v96
  %v110 = vunpack.c.l.b16 %v97
  %v111 = vunpack.c.l.b16 %v98
  %v112 = vpack.c.b16 %v109, %v108
  %v113 = vpack.c.b16 %v111, %v110
  %vm116 = vcmask 261120
  %v118 = vsel %vm116, %v99, 0
  %120 = vmatprep.subr.bf16.mxu0 0
  %121 = vmatpush1.bf16.msra.mxu0 %v112
  %122 = vmatprep.subr.bf16.mxu0 0
  %123 = vmatpush1.bf16.msra.mxu0 %v113
  %124 = vmatprep.subr.bf16.mxu0 0
  %125 = vmatpush1.bf16.msra.mxu0 0
  %126 = vmatprep.subr.bf16.mxu0 0
  %127 = vmatpush1.bf16.msra.mxu0 0
  %128 = vmatprep.subr.bf16.mxu0 0
  %129 = vmatpush1.bf16.msra.mxu0 0
  %130 = vmatprep.subr.bf16.mxu0 0
  %131 = vmatpush1.bf16.msra.mxu0 0
  %132 = vmatprep.subr.bf16.mxu0 0
  %133 = vmatpush1.bf16.msra.mxu0 0
  %134 = vmatprep.subr.bf16.mxu0 0
  %135 = vmatpush1.bf16.msra.mxu0 0
  %136 = vmatprep.subr.bf16.mxu0 0
  %137 = vmatpush1.bf16.msra.mxu0 0
  %138 = vmatprep.subr.bf16.mxu0 0
  %139 = vmatpush1.bf16.msra.mxu0 0
  %140 = vmatprep.subr.bf16.mxu0 0
  %141 = vmatpush1.bf16.msra.mxu0 0
  %142 = vmatprep.subr.bf16.mxu0 0
  %143 = vmatpush1.bf16.msra.mxu0 0
  %144 = vmatprep.subr.bf16.mxu0 0
  %145 = vmatpush1.bf16.msra.mxu0 0
  %146 = vmatprep.subr.bf16.mxu0 0
  %147 = vmatpush1.bf16.msra.mxu0 0
  %148 = vmatprep.subr.bf16.mxu0 0
  %149 = vmatpush1.bf16.msra.mxu0 0
  %150 = vmatprep.subr.bf16.mxu0 0
  %151 = vmatpush1.bf16.msra.mxu0 0
  %152 = vmatprep.mubr.bf16.mxu0 0
  %153 = vmatmul.mubr.bf16.gmra.mrb[0].mxu0 %v118
  %v154 = vpop.f32.mrb[0].mxu0
  %v155 = vadd.f32 %v103, %v154
  %v156 = vpop.f32.mrb[0].mxu0
  %v157 = vpop.f32.mrb[0].mxu0
  %v158 = vadd.f32 %v103, %v157
  %v159 = vpop.f32.mrb[0].mxu0
  %160 = vdwg.mxu0
  %v161 = vpack.c.bf16 %v158, %v155
  %163 = vrot.lane.b32.xlu0 %v161, 96
  %v164 = vpop.permute.xlu0 %163
  %vm165 = vcmask 64512
  %v167 = vsel %vm165, %v161, 0
  %v170 = vsel %vm165, %v164, 0
  %172 = vmatprep.subr.bf16.mxu0 0
  %173 = vmatpush1.bf16.xpose.msra.mxu0 %v170
  %174 = vmatprep.subr.bf16.mxu0 0
  %175 = vmatpush1.bf16.xpose.msra.mxu0 0
  %176 = vmatprep.subr.bf16.mxu0 0
  %177 = vmatpush1.bf16.xpose.msra.mxu0 0
  %178 = vmatprep.subr.bf16.mxu0 0
  %179 = vmatpush1.bf16.xpose.msra.mxu0 0
  %180 = vmatprep.subr.bf16.mxu0 0
  %181 = vmatpush1.bf16.xpose.msra.mxu0 0
  %182 = vmatprep.subr.bf16.mxu0 0
  %183 = vmatpush1.bf16.xpose.msra.mxu0 0
  %184 = vmatprep.subr.bf16.mxu0 0
  %185 = vmatpush1.bf16.xpose.msra.mxu0 0
  %186 = vmatprep.subr.bf16.mxu0 0
  %187 = vmatpush1.bf16.xpose.msra.mxu0 0
  %188 = vmatprep.subr.bf16.mxu0 0
  %189 = vmatpush1.bf16.xpose.msra.mxu0 0
  %190 = vmatprep.subr.bf16.mxu0 0
  %191 = vmatpush1.bf16.xpose.msra.mxu0 0
  %192 = vmatprep.subr.bf16.mxu0 0
  %193 = vmatpush1.bf16.xpose.msra.mxu0 0
  %194 = vmatprep.subr.bf16.mxu0 0
  %195 = vmatpush1.bf16.xpose.msra.mxu0 0
  %196 = vmatprep.subr.bf16.mxu0 0
  %197 = vmatpush1.bf16.xpose.msra.mxu0 0
  %198 = vmatprep.subr.bf16.mxu0 0
  %199 = vmatpush1.bf16.xpose.msra.mxu0 0
  %200 = vmatprep.subr.bf16.mxu0 0
  %201 = vmatpush1.bf16.xpose.msra.mxu0 0
  %202 = vmatprep.subr.bf16.mxu0 0
  %203 = vmatpush1.bf16.xpose.msra.mxu0 0
  %204 = vmatprep.mubr.bf16.mxu0 0
  %205 = vmatmul.mubr.bf16.gmra.mrb[0].mxu0 %v167
  %v206 = vpop.f32.mrb[0].mxu0
  %v207 = vadd.f32 0.0, %v206
  %v208 = vpop.f32.mrb[0].mxu0
  %v209 = vpop.f32.mrb[0].mxu0
  %v210 = vadd.f32 0.0, %v209
  %v211 = vpop.f32.mrb[0].mxu0
  %212 = vdwg.mxu0
  %v213 = vmul.f32 %v207, 0.35355338
  %v214 = vmul.f32 %v210, 0.35355338
  %v215 = vadd.f32 %v213, %v85
  %v216 = vadd.f32 %v214, %v86
  %vm217 = vcmask 130048
  %v218 = vsel %vm217, %v215, -inf
  %219 = vmax.xlane.f32.xlu0 %v218
  %v220 = vpop.xlane.xlu0 %219
  %v221 = vsel %vm217, %v216, -inf
  %222 = vmax.xlane.f32.xlu0 %v221
  %v223 = vpop.xlane.xlu0 %222
  %v224 = vsub.f32 %v215, %v220
  %v225 = vsub.f32 %v216, %v223
  %v226 = vmul.f32 %v224, 1.442695
  %v227 = vpow.pop %v226
  %v228 = vmul.f32 %v225, 1.442695
  %v229 = vpow.pop %v228
  %v230 = vsel %vm217, %v227, 0.0
  %231 = vadd.xlane.f32.xlu0 %v230
  %v232 = vpop.xlane.xlu0 %231
  %v233 = vsel %vm217, %v229, 0.0
  %234 = vadd.xlane.f32.xlu0 %v233
  %v235 = vpop.xlane.xlu0 %234
  %v236 = vrcp.pop %v232
  %v237 = vrcp.pop %v235
  %v238 = vmul.f32 %v227, %v236
  %v239 = vmul.f32 %v229, %v237
  %v240 = vpack.c.bf16 %v239, %v238
  %241 = vrot.lane.b32.xlu0 %v161, 64
  %v242 = vpop.permute.xlu0 %241
  %v245 = vsel %vm217, %v240, 0
  %247 = vmatprep.subr.bf16.mxu0 0
  %248 = vmatpush1.bf16.msra.mxu0 %v242
  %249 = vmatprep.subr.bf16.mxu0 0
  %250 = vmatpush1.bf16.msra.mxu0 0
  %251 = vmatprep.subr.bf16.mxu0 0
  %252 = vmatpush1.bf16.msra.mxu0 0
  %253 = vmatprep.subr.bf16.mxu0 0
  %254 = vmatpush1.bf16.msra.mxu0 0
  %255 = vmatprep.subr.bf16.mxu0 0
  %256 = vmatpush1.bf16.msra.mxu0 0
  %257 = vmatprep.subr.bf16.mxu0 0
  %258 = vmatpush1.bf16.msra.mxu0 0
  %259 = vmatprep.subr.bf16.mxu0 0
  %260 = vmatpush1.bf16.msra.mxu0 0
  %261 = vmatprep.subr.bf16.mxu0 0
  %262 = vmatpush1.bf16.msra.mxu0 0
  %263 = vmatprep.subr.bf16.mxu0 0
  %264 = vmatpush1.bf16.msra.mxu0 0
  %265 = vmatprep.subr.bf16.mxu0 0
  %266 = vmatpush1.bf16.msra.mxu0 0
  %267 = vmatprep.subr.bf16.mxu0 0
  %268 = vmatpush1.bf16.msra.mxu0 0
  %269 = vmatprep.subr.bf16.mxu0 0
  %270 = vmatpush1.bf16.msra.mxu0 0
  %271 = vmatprep.subr.bf16.mxu0 0
  %272 = vmatpush1.bf16.msra.mxu0 0
  %273 = vmatprep.subr.bf16.mxu0 0
  %274 = vmatpush1.bf16.msra.mxu0 0
  %275 = vmatprep.subr.bf16.mxu0 0
  %276 = vmatpush1.bf16.msra.mxu0 0
  %277 = vmatprep.subr.bf16.mxu0 0
  %278 = vmatpush1.bf16.msra.mxu0 0
  %279 = vmatprep.mubr.bf16.mxu0 0
  %280 = vmatmul.mubr.bf16.gmra.mrb[0].mxu0 %v245
  %v281 = vpop.f32.mrb[0].mxu0
  %v282 = vadd.f32 0.0, %v281
  %v283 = vpop.f32.mrb[0].mxu0
  %v284 = vpop.f32.mrb[0].mxu0
  %v285 = vadd.f32 0.0, %v284
  %v286 = vpop.f32.mrb[0].mxu0
  %287 = vdwg.mxu0
  %v288 = vpack.c.bf16 %v285, %v282
  %v289 = vld [vmem:[%s1] sm:$0xf]
  %290 = vrot.lane.b32.xlu0 %v161, 120
  %v291 = vpop.permute.xlu0 %290
  %292 = vrot.lane.b32.xlu0 %v161, 88
  %v293 = vpop.permute.xlu0 %292
  %v295 = vsel %vm165, %v291, 0
  %v298 = vsel %vm165, %v293, 0
  %300 = vmatprep.subr.bf16.mxu0 0
  %301 = vmatpush1.bf16.xpose.msra.mxu0 %v298
  %302 = vmatprep.subr.bf16.mxu0 0
  %303 = vmatpush1.bf16.xpose.msra.mxu0 0
  %304 = vmatprep.subr.bf16.mxu0 0
  %305 = vmatpush1.bf16.xpose.msra.mxu0 0
  %306 = vmatprep.subr.bf16.mxu0 0
  %307 = vmatpush1.bf16.xpose.msra.mxu0 0
  %308 = vmatprep.subr.bf16.mxu0 0
  %309 = vmatpush1.bf16.xpose.msra.mxu0 0
  %310 = vmatprep.subr.bf16.mxu0 0
  %311 = vmatpush1.bf16.xpose.msra.mxu0 0
  %312 = vmatprep.subr.bf16.mxu0 0
  %313 = vmatpush1.bf16.xpose.msra.mxu0 0
  %314 = vmatprep.subr.bf16.mxu0 0
  %315 = vmatpush1.bf16.xpose.msra.mxu0 0
  %316 = vmatprep.subr.bf16.mxu0 0
  %317 = vmatpush1.bf16.xpose.msra.mxu0 0
  %318 = vmatprep.subr.bf16.mxu0 0
  %319 = vmatpush1.bf16.xpose.msra.mxu0 0
  %320 = vmatprep.subr.bf16.mxu0 0
  %321 = vmatpush1.bf16.xpose.msra.mxu0 0
  %322 = vmatprep.subr.bf16.mxu0 0
  %323 = vmatpush1.bf16.xpose.msra.mxu0 0
  %324 = vmatprep.subr.bf16.mxu0 0
  %325 = vmatpush1.bf16.xpose.msra.mxu0 0
  %326 = vmatprep.subr.bf16.mxu0 0
  %327 = vmatpush1.bf16.xpose.msra.mxu0 0
  %328 = vmatprep.subr.bf16.mxu0 0
  %329 = vmatpush1.bf16.xpose.msra.mxu0 0
  %330 = vmatprep.subr.bf16.mxu0 0
  %331 = vmatpush1.bf16.xpose.msra.mxu0 0
  %332 = vmatprep.mubr.bf16.mxu0 0
  %333 = vmatmul.mubr.bf16.gmra.mrb[0].mxu0 %v295
  %v334 = vpop.f32.mrb[0].mxu0
  %v335 = vadd.f32 0.0, %v334
  %v336 = vpop.f32.mrb[0].mxu0
  %v337 = vpop.f32.mrb[0].mxu0
  %v338 = vadd.f32 0.0, %v337
  %v339 = vpop.f32.mrb[0].mxu0
  %340 = vdwg.mxu0
  %v341 = vmul.f32 %v335, 0.35355338
  %v342 = vmul.f32 %v338, 0.35355338
  %v343 = vadd.f32 %v341, %v85
  %v344 = vadd.f32 %v342, %v86
  %v345 = vsel %vm217, %v343, -inf
  %346 = vmax.xlane.f32.xlu0 %v345
  %v347 = vpop.xlane.xlu0 %346
  %v348 = vsel %vm217, %v344, -inf
  %349 = vmax.xlane.f32.xlu0 %v348
  %v350 = vpop.xlane.xlu0 %349
  %v351 = vsub.f32 %v343, %v347
  %v352 = vsub.f32 %v344, %v350
  %v353 = vmul.f32 %v351, 1.442695
  %v354 = vpow.pop %v353
  %v355 = vmul.f32 %v352, 1.442695
  %v356 = vpow.pop %v355
  %v357 = vsel %vm217, %v354, 0.0
  %358 = vadd.xlane.f32.xlu0 %v357
  %v359 = vpop.xlane.xlu0 %358
  %v360 = vsel %vm217, %v356, 0.0
  %361 = vadd.xlane.f32.xlu0 %v360
  %v362 = vpop.xlane.xlu0 %361
  %v363 = vrcp.pop %v359
  %v364 = vrcp.pop %v362
  %v365 = vmul.f32 %v354, %v363
  %v366 = vmul.f32 %v356, %v364
  %v367 = vpack.c.bf16 %v366, %v365
  %368 = vrot.lane.b32.xlu0 %v161, 56
  %v369 = vpop.permute.xlu0 %368
  %v372 = vsel %vm217, %v367, 0
  %374 = vmatprep.subr.bf16.mxu0 0
  %375 = vmatpush1.bf16.msra.mxu0 %v369
  %376 = vmatprep.subr.bf16.mxu0 0
  %377 = vmatpush1.bf16.msra.mxu0 0
  %378 = vmatprep.subr.bf16.mxu0 0
  %379 = vmatpush1.bf16.msra.mxu0 0
  %380 = vmatprep.subr.bf16.mxu0 0
  %381 = vmatpush1.bf16.msra.mxu0 0
  %382 = vmatprep.subr.bf16.mxu0 0
  %383 = vmatpush1.bf16.msra.mxu0 0
  %384 = vmatprep.subr.bf16.mxu0 0
  %385 = vmatpush1.bf16.msra.mxu0 0
  %386 = vmatprep.subr.bf16.mxu0 0
  %387 = vmatpush1.bf16.msra.mxu0 0
  %388 = vmatprep.subr.bf16.mxu0 0
  %389 = vmatpush1.bf16.msra.mxu0 0
  %390 = vmatprep.subr.bf16.mxu0 0
  %391 = vmatpush1.bf16.msra.mxu0 0
  %392 = vmatprep.subr.bf16.mxu0 0
  %393 = vmatpush1.bf16.msra.mxu0 0
  %394 = vmatprep.subr.bf16.mxu0 0
  %395 = vmatpush1.bf16.msra.mxu0 0
  %396 = vmatprep.subr.bf16.mxu0 0
  %397 = vmatpush1.bf16.msra.mxu0 0
  %398 = vmatprep.subr.bf16.mxu0 0
  %399 = vmatpush1.bf16.msra.mxu0 0
  %400 = vmatprep.subr.bf16.mxu0 0
  %401 = vmatpush1.bf16.msra.mxu0 0
  %402 = vmatprep.subr.bf16.mxu0 0
  %403 = vmatpush1.bf16.msra.mxu0 0
  %404 = vmatprep.subr.bf16.mxu0 0
  %405 = vmatpush1.bf16.msra.mxu0 0
  %406 = vmatprep.mubr.bf16.mxu0 0
  %407 = vmatmul.mubr.bf16.gmra.mrb[0].mxu0 %v372
  %v408 = vpop.f32.mrb[0].mxu0
  %v409 = vadd.f32 0.0, %v408
  %v410 = vpop.f32.mrb[0].mxu0
  %v411 = vpop.f32.mrb[0].mxu0
  %v412 = vadd.f32 0.0, %v411
  %v413 = vpop.f32.mrb[0].mxu0
  %414 = vdwg.mxu0
  %v415 = vpack.c.bf16 %v412, %v409
  %v416 = vld [vmem:[%s1 + $0x8] sm:$0xf]
  %v418 = vunpack.c.l.b16 %v416
  %v419 = vpack.c.b16 %v418, %v418
  %420 = vrot.lane.b32.xlu0 %v419, 32
  %v421 = vpop.permute.xlu0 %420
  %v423 = vsel %vm165, %v415, 0
  %vm425 = vcmask 1043456
  %v427 = vsel %vm425, %v421, 0
  %429 = vmatprep.subr.bf16.mxu0 0
  %430 = vmatpush1.bf16.msra.mxu0 %v427
  %431 = vmatprep.subr.bf16.mxu0 0
  %432 = vmatpush1.bf16.msra.mxu0 0
  %433 = vmatprep.subr.bf16.mxu0 0
  %434 = vmatpush1.bf16.msra.mxu0 0
  %435 = vmatprep.subr.bf16.mxu0 0
  %436 = vmatpush1.bf16.msra.mxu0 0
  %437 = vmatprep.subr.bf16.mxu0 0
  %438 = vmatpush1.bf16.msra.mxu0 0
  %439 = vmatprep.subr.bf16.mxu0 0
  %440 = vmatpush1.bf16.msra.mxu0 0
  %441 = vmatprep.subr.bf16.mxu0 0
  %442 = vmatpush1.bf16.msra.mxu0 0
  %443 = vmatprep.subr.bf16.mxu0 0
  %444 = vmatpush1.bf16.msra.mxu0 0
  %445 = vmatprep.subr.bf16.mxu0 0
  %446 = vmatpush1.bf16.msra.mxu0 0
  %447 = vmatprep.subr.bf16.mxu0 0
  %448 = vmatpush1.bf16.msra.mxu0 0
  %449 = vmatprep.subr.bf16.mxu0 0
  %450 = vmatpush1.bf16.msra.mxu0 0
  %451 = vmatprep.subr.bf16.mxu0 0
  %452 = vmatpush1.bf16.msra.mxu0 0
  %453 = vmatprep.subr.bf16.mxu0 0
  %454 = vmatpush1.bf16.msra.mxu0 0
  %455 = vmatprep.subr.bf16.mxu0 0
  %456 = vmatpush1.bf16.msra.mxu0 0
  %457 = vmatprep.subr.bf16.mxu0 0
  %458 = vmatpush1.bf16.msra.mxu0 0
  %459 = vmatprep.subr.bf16.mxu0 0
  %460 = vmatpush1.bf16.msra.mxu0 0
  %461 = vmatprep.mubr.bf16.mxu0 0
  %462 = vmatmul.mubr.bf16.gmra.mrb[0].mxu0 %v423
  %v463 = vpop.f32.mrb[0].mxu0
  %v464 = vadd.f32 0.0, %v463
  %v465 = vpop.f32.mrb[0].mxu0
  %v466 = vpop.f32.mrb[0].mxu0
  %v467 = vadd.f32 0.0, %v466
  %v468 = vpop.f32.mrb[0].mxu0
  %469 = vdwg.mxu0
  %v471 = vunpack.c.l.b16 %v289
  %v472 = vpack.c.b16 %v471, %v471
  %473 = vrot.lane.b32.xlu0 %v472, 32
  %v474 = vpop.permute.xlu0 %473
  %v476 = vsel %vm165, %v288, 0
  %v479 = vsel %vm425, %v474, 0
  %481 = vmatprep.subr.bf16.mxu0 0
  %482 = vmatpush1.bf16.msra.mxu0 %v479
  %483 = vmatprep.subr.bf16.mxu0 0
  %484 = vmatpush1.bf16.msra.mxu0 0
  %485 = vmatprep.subr.bf16.mxu0 0
  %486 = vmatpush1.bf16.msra.mxu0 0
  %487 = vmatprep.subr.bf16.mxu0 0
  %488 = vmatpush1.bf16.msra.mxu0 0
  %489 = vmatprep.subr.bf16.mxu0 0
  %490 = vmatpush1.bf16.msra.mxu0 0
  %491 = vmatprep.subr.bf16.mxu0 0
  %492 = vmatpush1.bf16.msra.mxu0 0
  %493 = vmatprep.subr.bf16.mxu0 0
  %494 = vmatpush1.bf16.msra.mxu0 0
  %495 = vmatprep.subr.bf16.mxu0 0
  %496 = vmatpush1.bf16.msra.mxu0 0
  %497 = vmatprep.subr.bf16.mxu0 0
  %498 = vmatpush1.bf16.msra.mxu0 0
  %499 = vmatprep.subr.bf16.mxu0 0
  %500 = vmatpush1.bf16.msra.mxu0 0
  %501 = vmatprep.subr.bf16.mxu0 0
  %502 = vmatpush1.bf16.msra.mxu0 0
  %503 = vmatprep.subr.bf16.mxu0 0
  %504 = vmatpush1.bf16.msra.mxu0 0
  %505 = vmatprep.subr.bf16.mxu0 0
  %506 = vmatpush1.bf16.msra.mxu0 0
  %507 = vmatprep.subr.bf16.mxu0 0
  %508 = vmatpush1.bf16.msra.mxu0 0
  %509 = vmatprep.subr.bf16.mxu0 0
  %510 = vmatpush1.bf16.msra.mxu0 0
  %511 = vmatprep.subr.bf16.mxu0 0
  %512 = vmatpush1.bf16.msra.mxu0 0
  %513 = vmatprep.mubr.bf16.mxu0 0
  %514 = vmatmul.mubr.bf16.gmra.mrb[0].mxu0 %v476
  %v515 = vpop.f32.mrb[0].mxu0
  %v516 = vadd.f32 %v464, %v515
  %v517 = vpop.f32.mrb[0].mxu0
  %v518 = vpop.f32.mrb[0].mxu0
  %v519 = vadd.f32 %v467, %v518
  %v520 = vpop.f32.mrb[0].mxu0
  %521 = vdwg.mxu0
  %522 = vrot.lane.b32.xlu0 %v161, 112
  %v523 = vpop.permute.xlu0 %522
  %524 = vrot.lane.b32.xlu0 %v161, 80
  %v525 = vpop.permute.xlu0 %524
  %v527 = vsel %vm165, %v523, 0
  %v530 = vsel %vm165, %v525, 0
  %532 = vmatprep.subr.bf16.mxu0 0
  %533 = vmatpush1.bf16.xpose.msra.mxu0 %v530
  %534 = vmatprep.subr.bf16.mxu0 0
  %535 = vmatpush1.bf16.xpose.msra.mxu0 0
  %536 = vmatprep.subr.bf16.mxu0 0
  %537 = vmatpush1.bf16.xpose.msra.mxu0 0
  %538 = vmatprep.subr.bf16.mxu0 0
  %539 = vmatpush1.bf16.xpose.msra.mxu0 0
  %540 = vmatprep.subr.bf16.mxu0 0
  %541 = vmatpush1.bf16.xpose.msra.mxu0 0
  %542 = vmatprep.subr.bf16.mxu0 0
  %543 = vmatpush1.bf16.xpose.msra.mxu0 0
  %544 = vmatprep.subr.bf16.mxu0 0
  %545 = vmatpush1.bf16.xpose.msra.mxu0 0
  %546 = vmatprep.subr.bf16.mxu0 0
  %547 = vmatpush1.bf16.xpose.msra.mxu0 0
  %548 = vmatprep.subr.bf16.mxu0 0
  %549 = vmatpush1.bf16.xpose.msra.mxu0 0
  %550 = vmatprep.subr.bf16.mxu0 0
  %551 = vmatpush1.bf16.xpose.msra.mxu0 0
  %552 = vmatprep.subr.bf16.mxu0 0
  %553 = vmatpush1.bf16.xpose.msra.mxu0 0
  %554 = vmatprep.subr.bf16.mxu0 0
  %555 = vmatpush1.bf16.xpose.msra.mxu0 0
  %556 = vmatprep.subr.bf16.mxu0 0
  %557 = vmatpush1.bf16.xpose.msra.mxu0 0
  %558 = vmatprep.subr.bf16.mxu0 0
  %559 = vmatpush1.bf16.xpose.msra.mxu0 0
  %560 = vmatprep.subr.bf16.mxu0 0
  %561 = vmatpush1.bf16.xpose.msra.mxu0 0
  %562 = vmatprep.subr.bf16.mxu0 0
  %563 = vmatpush1.bf16.xpose.msra.mxu0 0
  %564 = vmatprep.mubr.bf16.mxu0 0
  %565 = vmatmul.mubr.bf16.gmra.mrb[0].mxu0 %v527
  %v566 = vpop.f32.mrb[0].mxu0
  %v567 = vadd.f32 0.0, %v566
  %v568 = vpop.f32.mrb[0].mxu0
  %v569 = vpop.f32.mrb[0].mxu0
  %v570 = vadd.f32 0.0, %v569
  %v571 = vpop.f32.mrb[0].mxu0
  %572 = vdwg.mxu0
  %v573 = vmul.f32 %v567, 0.35355338
  %v574 = vmul.f32 %v570, 0.35355338
  %v575 = vadd.f32 %v573, %v85
  %v576 = vadd.f32 %v574, %v86
  %v577 = vsel %vm217, %v575, -inf
  %578 = vmax.xlane.f32.xlu0 %v577
  %v579 = vpop.xlane.xlu0 %578
  %v580 = vsel %vm217, %v576, -inf
  %581 = vmax.xlane.f32.xlu0 %v580
  %v582 = vpop.xlane.xlu0 %581
  %v583 = vsub.f32 %v575, %v579
  %v584 = vsub.f32 %v576, %v582
  %v585 = vmul.f32 %v583, 1.442695
  %v586 = vpow.pop %v585
  %v587 = vmul.f32 %v584, 1.442695
  %v588 = vpow.pop %v587
  %v589 = vsel %vm217, %v586, 0.0
  %590 = vadd.xlane.f32.xlu0 %v589
  %v591 = vpop.xlane.xlu0 %590
  %v592 = vsel %vm217, %v588, 0.0
  %593 = vadd.xlane.f32.xlu0 %v592
  %v594 = vpop.xlane.xlu0 %593
  %v595 = vrcp.pop %v591
  %v596 = vrcp.pop %v594
  %v597 = vmul.f32 %v586, %v595
  %v598 = vmul.f32 %v588, %v596
  %v599 = vpack.c.bf16 %v598, %v597
  %600 = vrot.lane.b32.xlu0 %v161, 48
  %v601 = vpop.permute.xlu0 %600
  %v604 = vsel %vm217, %v599, 0
  %606 = vmatprep.subr.bf16.mxu0 0
  %607 = vmatpush1.bf16.msra.mxu0 %v601
  %608 = vmatprep.subr.bf16.mxu0 0
  %609 = vmatpush1.bf16.msra.mxu0 0
  %610 = vmatprep.subr.bf16.mxu0 0
  %611 = vmatpush1.bf16.msra.mxu0 0
  %612 = vmatprep.subr.bf16.mxu0 0
  %613 = vmatpush1.bf16.msra.mxu0 0
  %614 = vmatprep.subr.bf16.mxu0 0
  %615 = vmatpush1.bf16.msra.mxu0 0
  %616 = vmatprep.subr.bf16.mxu0 0
  %617 = vmatpush1.bf16.msra.mxu0 0
  %618 = vmatprep.subr.bf16.mxu0 0
  %619 = vmatpush1.bf16.msra.mxu0 0
  %620 = vmatprep.subr.bf16.mxu0 0
  %621 = vmatpush1.bf16.msra.mxu0 0
  %622 = vmatprep.subr.bf16.mxu0 0
  %623 = vmatpush1.bf16.msra.mxu0 0
  %624 = vmatprep.subr.bf16.mxu0 0
  %625 = vmatpush1.bf16.msra.mxu0 0
  %626 = vmatprep.subr.bf16.mxu0 0
  %627 = vmatpush1.bf16.msra.mxu0 0
  %628 = vmatprep.subr.bf16.mxu0 0
  %629 = vmatpush1.bf16.msra.mxu0 0
  %630 = vmatprep.subr.bf16.mxu0 0
  %631 = vmatpush1.bf16.msra.mxu0 0
  %632 = vmatprep.subr.bf16.mxu0 0
  %633 = vmatpush1.bf16.msra.mxu0 0
  %634 = vmatprep.subr.bf16.mxu0 0
  %635 = vmatpush1.bf16.msra.mxu0 0
  %636 = vmatprep.subr.bf16.mxu0 0
  %637 = vmatpush1.bf16.msra.mxu0 0
  %638 = vmatprep.mubr.bf16.mxu0 0
  %639 = vmatmul.mubr.bf16.gmra.mrb[0].mxu0 %v604
  %v640 = vpop.f32.mrb[0].mxu0
  %v641 = vadd.f32 0.0, %v640
  %v642 = vpop.f32.mrb[0].mxu0
  %v643 = vpop.f32.mrb[0].mxu0
  %v644 = vadd.f32 0.0, %v643
  %v645 = vpop.f32.mrb[0].mxu0
  %646 = vdwg.mxu0
  %v647 = vpack.c.bf16 %v644, %v641
  %v648 = vld [vmem:[%s1 + $0x10] sm:$0xf]
  %v650 = vunpack.c.l.b16 %v648
  %v651 = vpack.c.b16 %v650, %v650
  %652 = vrot.lane.b32.xlu0 %v651, 32
  %v653 = vpop.permute.xlu0 %652
  %v655 = vsel %vm165, %v647, 0
  %v658 = vsel %vm425, %v653, 0
  %660 = vmatprep.subr.bf16.mxu0 0
  %661 = vmatpush1.bf16.msra.mxu0 %v658
  %662 = vmatprep.subr.bf16.mxu0 0
  %663 = vmatpush1.bf16.msra.mxu0 0
  %664 = vmatprep.subr.bf16.mxu0 0
  %665 = vmatpush1.bf16.msra.mxu0 0
  %666 = vmatprep.subr.bf16.mxu0 0
  %667 = vmatpush1.bf16.msra.mxu0 0
  %668 = vmatprep.subr.bf16.mxu0 0
  %669 = vmatpush1.bf16.msra.mxu0 0
  %670 = vmatprep.subr.bf16.mxu0 0
  %671 = vmatpush1.bf16.msra.mxu0 0
  %672 = vmatprep.subr.bf16.mxu0 0
  %673 = vmatpush1.bf16.msra.mxu0 0
  %674 = vmatprep.subr.bf16.mxu0 0
  %675 = vmatpush1.bf16.msra.mxu0 0
  %676 = vmatprep.subr.bf16.mxu0 0
  %677 = vmatpush1.bf16.msra.mxu0 0
  %678 = vmatprep.subr.bf16.mxu0 0
  %679 = vmatpush1.bf16.msra.mxu0 0
  %680 = vmatprep.subr.bf16.mxu0 0
  %681 = vmatpush1.bf16.msra.mxu0 0
  %682 = vmatprep.subr.bf16.mxu0 0
  %683 = vmatpush1.bf16.msra.mxu0 0
  %684 = vmatprep.subr.bf16.mxu0 0
  %685 = vmatpush1.bf16.msra.mxu0 0
  %686 = vmatprep.subr.bf16.mxu0 0
  %687 = vmatpush1.bf16.msra.mxu0 0
  %688 = vmatprep.subr.bf16.mxu0 0
  %689 = vmatpush1.bf16.msra.mxu0 0
  %690 = vmatprep.subr.bf16.mxu0 0
  %691 = vmatpush1.bf16.msra.mxu0 0
  %692 = vmatprep.mubr.bf16.mxu0 0
  %693 = vmatmul.mubr.bf16.gmra.mrb[0].mxu0 %v655
  %v694 = vpop.f32.mrb[0].mxu0
  %v695 = vadd.f32 0.0, %v694
  %v696 = vpop.f32.mrb[0].mxu0
  %v697 = vpop.f32.mrb[0].mxu0
  %v698 = vadd.f32 0.0, %v697
  %v699 = vpop.f32.mrb[0].mxu0
  %700 = vdwg.mxu0
  %v701 = vadd.f32 %v516, %v695
  %v702 = vadd.f32 %v519, %v698
  %703 = vrot.lane.b32.xlu0 %v161, 104
  %v704 = vpop.permute.xlu0 %703
  %705 = vrot.lane.b32.xlu0 %v161, 72
  %v706 = vpop.permute.xlu0 %705
  %v708 = vsel %vm165, %v704, 0
  %v711 = vsel %vm165, %v706, 0
  %713 = vmatprep.subr.bf16.mxu0 0
  %714 = vmatpush1.bf16.xpose.msra.mxu0 %v711
  %715 = vmatprep.subr.bf16.mxu0 0
  %716 = vmatpush1.bf16.xpose.msra.mxu0 0
  %717 = vmatprep.subr.bf16.mxu0 0
  %718 = vmatpush1.bf16.xpose.msra.mxu0 0
  %719 = vmatprep.subr.bf16.mxu0 0
  %720 = vmatpush1.bf16.xpose.msra.mxu0 0
  %721 = vmatprep.subr.bf16.mxu0 0
  %722 = vmatpush1.bf16.xpose.msra.mxu0 0
  %723 = vmatprep.subr.bf16.mxu0 0
  %724 = vmatpush1.bf16.xpose.msra.mxu0 0
  %725 = vmatprep.subr.bf16.mxu0 0
  %726 = vmatpush1.bf16.xpose.msra.mxu0 0
  %727 = vmatprep.subr.bf16.mxu0 0
  %728 = vmatpush1.bf16.xpose.msra.mxu0 0
  %729 = vmatprep.subr.bf16.mxu0 0
  %730 = vmatpush1.bf16.xpose.msra.mxu0 0
  %731 = vmatprep.subr.bf16.mxu0 0
  %732 = vmatpush1.bf16.xpose.msra.mxu0 0
  %733 = vmatprep.subr.bf16.mxu0 0
  %734 = vmatpush1.bf16.xpose.msra.mxu0 0
  %735 = vmatprep.subr.bf16.mxu0 0
  %736 = vmatpush1.bf16.xpose.msra.mxu0 0
  %737 = vmatprep.subr.bf16.mxu0 0
  %738 = vmatpush1.bf16.xpose.msra.mxu0 0
  %739 = vmatprep.subr.bf16.mxu0 0
  %740 = vmatpush1.bf16.xpose.msra.mxu0 0
  %741 = vmatprep.subr.bf16.mxu0 0
  %742 = vmatpush1.bf16.xpose.msra.mxu0 0
  %743 = vmatprep.subr.bf16.mxu0 0
  %744 = vmatpush1.bf16.xpose.msra.mxu0 0
  %745 = vmatprep.mubr.bf16.mxu0 0
  %746 = vmatmul.mubr.bf16.gmra.mrb[0].mxu0 %v708
  %v747 = vpop.f32.mrb[0].mxu0
  %v748 = vadd.f32 0.0, %v747
  %v749 = vpop.f32.mrb[0].mxu0
  %v750 = vpop.f32.mrb[0].mxu0
  %v751 = vadd.f32 0.0, %v750
  %v752 = vpop.f32.mrb[0].mxu0
  %753 = vdwg.mxu0
  %v754 = vmul.f32 %v748, 0.35355338
  %v755 = vmul.f32 %v751, 0.35355338
  %v756 = vadd.f32 %v754, %v85
  %v757 = vadd.f32 %v755, %v86
  %v758 = vsel %vm217, %v756, -inf
  %759 = vmax.xlane.f32.xlu0 %v758
  %v760 = vpop.xlane.xlu0 %759
  %v761 = vsel %vm217, %v757, -inf
  %762 = vmax.xlane.f32.xlu0 %v761
  %v763 = vpop.xlane.xlu0 %762
  %v764 = vsub.f32 %v756, %v760
  %v765 = vsub.f32 %v757, %v763
  %v766 = vmul.f32 %v764, 1.442695
  %v767 = vpow.pop %v766
  %v768 = vmul.f32 %v765, 1.442695
  %v769 = vpow.pop %v768
  %v770 = vsel %vm217, %v767, 0.0
  %771 = vadd.xlane.f32.xlu0 %v770
  %v772 = vpop.xlane.xlu0 %771
  %v773 = vsel %vm217, %v769, 0.0
  %774 = vadd.xlane.f32.xlu0 %v773
  %v775 = vpop.xlane.xlu0 %774
  %v776 = vrcp.pop %v772
  %v777 = vrcp.pop %v775
  %v778 = vmul.f32 %v767, %v776
  %v779 = vmul.f32 %v769, %v777
  %v780 = vpack.c.bf16 %v779, %v778
  %781 = vrot.lane.b32.xlu0 %v161, 40
  %v782 = vpop.permute.xlu0 %781
  %v785 = vsel %vm217, %v780, 0
  %787 = vmatprep.subr.bf16.mxu0 0
  %788 = vmatpush1.bf16.msra.mxu0 %v782
  %789 = vmatprep.subr.bf16.mxu0 0
  %790 = vmatpush1.bf16.msra.mxu0 0
  %791 = vmatprep.subr.bf16.mxu0 0
  %792 = vmatpush1.bf16.msra.mxu0 0
  %793 = vmatprep.subr.bf16.mxu0 0
  %794 = vmatpush1.bf16.msra.mxu0 0
  %795 = vmatprep.subr.bf16.mxu0 0
  %796 = vmatpush1.bf16.msra.mxu0 0
  %797 = vmatprep.subr.bf16.mxu0 0
  %798 = vmatpush1.bf16.msra.mxu0 0
  %799 = vmatprep.subr.bf16.mxu0 0
  %800 = vmatpush1.bf16.msra.mxu0 0
  %801 = vmatprep.subr.bf16.mxu0 0
  %802 = vmatpush1.bf16.msra.mxu0 0
  %803 = vmatprep.subr.bf16.mxu0 0
  %804 = vmatpush1.bf16.msra.mxu0 0
  %805 = vmatprep.subr.bf16.mxu0 0
  %806 = vmatpush1.bf16.msra.mxu0 0
  %807 = vmatprep.subr.bf16.mxu0 0
  %808 = vmatpush1.bf16.msra.mxu0 0
  %809 = vmatprep.subr.bf16.mxu0 0
  %810 = vmatpush1.bf16.msra.mxu0 0
  %811 = vmatprep.subr.bf16.mxu0 0
  %812 = vmatpush1.bf16.msra.mxu0 0
  %813 = vmatprep.subr.bf16.mxu0 0
  %814 = vmatpush1.bf16.msra.mxu0 0
  %815 = vmatprep.subr.bf16.mxu0 0
  %816 = vmatpush1.bf16.msra.mxu0 0
  %817 = vmatprep.subr.bf16.mxu0 0
  %818 = vmatpush1.bf16.msra.mxu0 0
  %819 = vmatprep.mubr.bf16.mxu0 0
  %820 = vmatmul.mubr.bf16.gmra.mrb[0].mxu0 %v785
  %v821 = vpop.f32.mrb[0].mxu0
  %v822 = vadd.f32 0.0, %v821
  %v823 = vpop.f32.mrb[0].mxu0
  %v824 = vpop.f32.mrb[0].mxu0
  %v825 = vadd.f32 0.0, %v824
  %v826 = vpop.f32.mrb[0].mxu0
  %827 = vdwg.mxu0
  %v828 = vpack.c.bf16 %v825, %v822
  %v829 = vpack.c.b16 %v111, %v111
  %830 = vrot.lane.b32.xlu0 %v829, 32
  %v831 = vpop.permute.xlu0 %830
  %v833 = vsel %vm165, %v828, 0
  %v836 = vsel %vm425, %v831, 0
  %838 = vmatprep.subr.bf16.mxu0 0
  %839 = vmatpush1.bf16.msra.mxu0 %v836
  %840 = vmatprep.subr.bf16.mxu0 0
  %841 = vmatpush1.bf16.msra.mxu0 0
  %842 = vmatprep.subr.bf16.mxu0 0
  %843 = vmatpush1.bf16.msra.mxu0 0
  %844 = vmatprep.subr.bf16.mxu0 0
  %845 = vmatpush1.bf16.msra.mxu0 0
  %846 = vmatprep.subr.bf16.mxu0 0
  %847 = vmatpush1.bf16.msra.mxu0 0
  %848 = vmatprep.subr.bf16.mxu0 0
  %849 = vmatpush1.bf16.msra.mxu0 0
  %850 = vmatprep.subr.bf16.mxu0 0
  %851 = vmatpush1.bf16.msra.mxu0 0
  %852 = vmatprep.subr.bf16.mxu0 0
  %853 = vmatpush1.bf16.msra.mxu0 0
  %854 = vmatprep.subr.bf16.mxu0 0
  %855 = vmatpush1.bf16.msra.mxu0 0
  %856 = vmatprep.subr.bf16.mxu0 0
  %857 = vmatpush1.bf16.msra.mxu0 0
  %858 = vmatprep.subr.bf16.mxu0 0
  %859 = vmatpush1.bf16.msra.mxu0 0
  %860 = vmatprep.subr.bf16.mxu0 0
  %861 = vmatpush1.bf16.msra.mxu0 0
  %862 = vmatprep.subr.bf16.mxu0 0
  %863 = vmatpush1.bf16.msra.mxu0 0
  %864 = vmatprep.subr.bf16.mxu0 0
  %865 = vmatpush1.bf16.msra.mxu0 0
  %866 = vmatprep.subr.bf16.mxu0 0
  %867 = vmatpush1.bf16.msra.mxu0 0
  %868 = vmatprep.subr.bf16.mxu0 0
  %869 = vmatpush1.bf16.msra.mxu0 0
  %870 = vmatprep.mubr.bf16.mxu0 0
  %871 = vmatmul.mubr.bf16.gmra.mrb[0].mxu0 %v833
  %v872 = vpop.f32.mrb[0].mxu0
  %v873 = vadd.f32 0.0, %v872
  %v874 = vpop.f32.mrb[0].mxu0
  %v875 = vpop.f32.mrb[0].mxu0
  %v876 = vadd.f32 0.0, %v875
  %v877 = vpop.f32.mrb[0].mxu0
  %878 = vdwg.mxu0
  %v879 = vadd.f32 %v701, %v873
  %v880 = vadd.f32 %v702, %v876
  %v881 = vadd.f32 %v69, %v879
  %v882 = vadd.f32 %v72, %v880
  %v883 = vlaneseq
  %v884 = vshrl.u32 %v883, 7
  %v885 = vsub.s32 0, %v884
  %v886 = vrot.slane %v88, %v885
  %v887 = vadd.f32 %v881, %v886
  %v888 = vadd.f32 %v882, %v886
  %v889 = vsel %vm116, %v887, 0.0
  %890 = vadd.xlane.f32.xlu0 %v889
  %v891 = vpop.xlane.xlu0 %890
  %v892 = vsel %vm116, %v888, 0.0
  %893 = vadd.xlane.f32.xlu0 %v892
  %v894 = vpop.xlane.xlu0 %893
  %v895 = vrcp.pop 32.0
  %v896 = vmul.f32 %v891, %v895
  %v897 = vmul.f32 %v894, %v895
  %v898 = vsub.f32 %v887, %v896
  %v899 = vsub.f32 %v888, %v897
  %v900 = vmul.f32 %v898, %v898
  %v901 = vmul.f32 %v899, %v899
  %v902 = vsel %vm116, %v900, 0.0
  %903 = vadd.xlane.f32.xlu0 %v902
  %v904 = vpop.xlane.xlu0 %903
  %v905 = vsel %vm116, %v901, 0.0
  %906 = vadd.xlane.f32.xlu0 %v905
  %v907 = vpop.xlane.xlu0 %906
  %v908 = vmul.f32 %v904, %v895
  %v909 = vmul.f32 %v907, %v895
  %v910 = vadd.f32 %v908, 1e-05
  %v911 = vadd.f32 %v909, 1e-05
  %v912 = vrsqrt.pop %v910
  %v913 = vrsqrt.pop %v911
  %v914 = vmul.f32 %v898, %v912
  %v915 = vmul.f32 %v899, %v913
  %v916 = vlaneseq
  %v917 = vshrl.u32 %v916, 7
  %v918 = vsub.s32 0, %v917
  %v919 = vrot.slane %v91, %v918
  %v920 = vmul.f32 %v914, %v919
  %v921 = vmul.f32 %v915, %v919
  %v922 = vlaneseq
  %v923 = vshrl.u32 %v922, 7
  %v924 = vsub.s32 0, %v923
  %v925 = vrot.slane %v92, %v924
  %v926 = vadd.f32 %v920, %v925
  %v927 = vadd.f32 %v921, %v925
  %v928 = vld [vmem:[%s1 + $0x4] sm:$0xf]
  %v929 = vld [vmem:[%s1 + $0xc] sm:$0xf]
  %v930 = vld [vmem:[%s1 + $0x14] sm:$0xf]
  %v931 = vld [vmem:[%s1 + $0x1c] sm:$0xf]
  %v932 = vpack.c.bf16 %v927, %v926
  %v933 = vlaneseq
  %v934 = vshrl.u32 %v933, 7
  %v935 = vsub.s32 0, %v934
  %v936 = vrot.slane %v89, %v935
  %v941 = vunpack.c.l.b16 %v928
  %v942 = vunpack.c.l.b16 %v929
  %v943 = vunpack.c.l.b16 %v930
  %v944 = vunpack.c.l.b16 %v931
  %v945 = vpack.c.b16 %v942, %v941
  %v946 = vpack.c.b16 %v944, %v943
  %v950 = vsel %vm116, %v932, 0
  %952 = vmatprep.subr.bf16.mxu0 0
  %953 = vmatpush1.bf16.msra.mxu0 %v945
  %954 = vmatprep.subr.bf16.mxu0 0
  %955 = vmatpush1.bf16.msra.mxu0 %v946
  %956 = vmatprep.subr.bf16.mxu0 0
  %957 = vmatpush1.bf16.msra.mxu0 0
  %958 = vmatprep.subr.bf16.mxu0 0
  %959 = vmatpush1.bf16.msra.mxu0 0
  %960 = vmatprep.subr.bf16.mxu0 0
  %961 = vmatpush1.bf16.msra.mxu0 0
  %962 = vmatprep.subr.bf16.mxu0 0
  %963 = vmatpush1.bf16.msra.mxu0 0
  %964 = vmatprep.subr.bf16.mxu0 0
  %965 = vmatpush1.bf16.msra.mxu0 0
  %966 = vmatprep.subr.bf16.mxu0 0
  %967 = vmatpush1.bf16.msra.mxu0 0
  %968 = vmatprep.subr.bf16.mxu0 0
  %969 = vmatpush1.bf16.msra.mxu0 0
  %970 = vmatprep.subr.bf16.mxu0 0
  %971 = vmatpush1.bf16.msra.mxu0 0
  %972 = vmatprep.subr.bf16.mxu0 0
  %973 = vmatpush1.bf16.msra.mxu0 0
  %974 = vmatprep.subr.bf16.mxu0 0
  %975 = vmatpush1.bf16.msra.mxu0 0
  %976 = vmatprep.subr.bf16.mxu0 0
  %977 = vmatpush1.bf16.msra.mxu0 0
  %978 = vmatprep.subr.bf16.mxu0 0
  %979 = vmatpush1.bf16.msra.mxu0 0
  %980 = vmatprep.subr.bf16.mxu0 0
  %981 = vmatpush1.bf16.msra.mxu0 0
  %982 = vmatprep.subr.bf16.mxu0 0
  %983 = vmatpush1.bf16.msra.mxu0 0
  %984 = vmatprep.mubr.bf16.mxu0 0
  %985 = vmatmul.mubr.bf16.gmra.mrb[0].mxu0 %v950
  %v986 = vpop.f32.mrb[0].mxu0
  %v987 = vadd.f32 %v936, %v986
  %v988 = vpop.f32.mrb[0].mxu0
  %v989 = vpop.f32.mrb[0].mxu0
  %v990 = vadd.f32 %v936, %v989
  %v991 = vpop.f32.mrb[0].mxu0
  %992 = vdwg.mxu0
  %v993 = vmax.f32 %v987, 0.0
  %v994 = vmax.f32 %v990, 0.0
  %v995 = vld [vmem:[%s2] sm:$0xf]
  %v996 = vld [vmem:[%s2 + $0x4] sm:$0xf]
  %v997 = vld [vmem:[%s2 + $0x8] sm:$0xf]
  %v998 = vld [vmem:[%s2 + $0xc] sm:$0xf]
  %v999 = vld [vmem:[%s2 + $0x10] sm:$0xf]
  %v1000 = vld [vmem:[%s2 + $0x14] sm:$0xf]
  %v1001 = vld [vmem:[%s2 + $0x18] sm:$0xf]
  %v1002 = vld [vmem:[%s2 + $0x1c] sm:$0xf]
  %v1003 = vld [vmem:[%s2 + $0x20] sm:$0xf]
  %v1004 = vld [vmem:[%s2 + $0x24] sm:$0xf]
  %v1005 = vld [vmem:[%s2 + $0x28] sm:$0xf]
  %v1006 = vld [vmem:[%s2 + $0x2c] sm:$0xf]
  %v1007 = vld [vmem:[%s2 + $0x30] sm:$0xf]
  %v1008 = vld [vmem:[%s2 + $0x34] sm:$0xf]
  %v1009 = vld [vmem:[%s2 + $0x38] sm:$0xf]
  %v1010 = vld [vmem:[%s2 + $0x3c] sm:$0xf]
  %v1011 = vpack.c.bf16 %v994, %v993
  %v1012 = vlaneseq
  %v1013 = vshrl.u32 %v1012, 7
  %v1014 = vsub.s32 0, %v1013
  %v1015 = vrot.slane %v90, %v1014
  %v1032 = vunpack.c.l.b16 %v995
  %v1033 = vunpack.c.l.b16 %v996
  %v1034 = vunpack.c.l.b16 %v997
  %v1035 = vunpack.c.l.b16 %v998
  %v1036 = vunpack.c.l.b16 %v999
  %v1037 = vunpack.c.l.b16 %v1000
  %v1038 = vunpack.c.l.b16 %v1001
  %v1039 = vunpack.c.l.b16 %v1002
  %v1040 = vunpack.c.l.b16 %v1003
  %v1041 = vunpack.c.l.b16 %v1004
  %v1042 = vunpack.c.l.b16 %v1005
  %v1043 = vunpack.c.l.b16 %v1006
  %v1044 = vunpack.c.l.b16 %v1007
  %v1045 = vunpack.c.l.b16 %v1008
  %v1046 = vunpack.c.l.b16 %v1009
  %v1047 = vunpack.c.l.b16 %v1010
  %v1048 = vpack.c.b16 %v1033, %v1032
  %v1049 = vpack.c.b16 %v1035, %v1034
  %v1050 = vpack.c.b16 %v1037, %v1036
  %v1051 = vpack.c.b16 %v1039, %v1038
  %v1052 = vpack.c.b16 %v1041, %v1040
  %v1053 = vpack.c.b16 %v1043, %v1042
  %v1054 = vpack.c.b16 %v1045, %v1044
  %v1055 = vpack.c.b16 %v1047, %v1046
  %1064 = vmatprep.subr.bf16.mxu0 0
  %1065 = vmatpush1.bf16.msra.mxu0 %v1048
  %1066 = vmatprep.subr.bf16.mxu0 0
  %1067 = vmatpush1.bf16.msra.mxu0 %v1049
  %1068 = vmatprep.subr.bf16.mxu0 0
  %1069 = vmatpush1.bf16.msra.mxu0 %v1050
  %1070 = vmatprep.subr.bf16.mxu0 0
  %1071 = vmatpush1.bf16.msra.mxu0 %v1051
  %1072 = vmatprep.subr.bf16.mxu0 0
  %1073 = vmatpush1.bf16.msra.mxu0 %v1052
  %1074 = vmatprep.subr.bf16.mxu0 0
  %1075 = vmatpush1.bf16.msra.mxu0 %v1053
  %1076 = vmatprep.subr.bf16.mxu0 0
  %1077 = vmatpush1.bf16.msra.mxu0 %v1054
  %1078 = vmatprep.subr.bf16.mxu0 0
  %1079 = vmatpush1.bf16.msra.mxu0 %v1055
  %1080 = vmatprep.subr.bf16.mxu0 0
  %1081 = vmatpush1.bf16.msra.mxu0 0
  %1082 = vmatprep.subr.bf16.mxu0 0
  %1083 = vmatpush1.bf16.msra.mxu0 0
  %1084 = vmatprep.subr.bf16.mxu0 0
  %1085 = vmatpush1.bf16.msra.mxu0 0
  %1086 = vmatprep.subr.bf16.mxu0 0
  %1087 = vmatpush1.bf16.msra.mxu0 0
  %1088 = vmatprep.subr.bf16.mxu0 0
  %1089 = vmatpush1.bf16.msra.mxu0 0
  %1090 = vmatprep.subr.bf16.mxu0 0
  %1091 = vmatpush1.bf16.msra.mxu0 0
  %1092 = vmatprep.subr.bf16.mxu0 0
  %1093 = vmatpush1.bf16.msra.mxu0 0
  %1094 = vmatprep.subr.bf16.mxu0 0
  %1095 = vmatpush1.bf16.msra.mxu0 0
  %1096 = vmatprep.mubr.bf16.mxu0 0
  %1097 = vmatmul.mubr.bf16.gmra.mrb[0].mxu0 %v1011
  %v1098 = vpop.f32.mrb[0].mxu0
  %v1099 = vadd.f32 %v1015, %v1098
  %v1100 = vpop.f32.mrb[0].mxu0
  %v1101 = vpop.f32.mrb[0].mxu0
  %v1102 = vadd.f32 %v1015, %v1101
  %v1103 = vpop.f32.mrb[0].mxu0
  %1104 = vdwg.mxu0
  %v1105 = vadd.f32 %v926, %v1099
  %v1106 = vadd.f32 %v927, %v1102
  %v1107 = vsel %vm116, %v1105, 0.0
  %1108 = vadd.xlane.f32.xlu0 %v1107
  %v1109 = vpop.xlane.xlu0 %1108
  %v1110 = vsel %vm116, %v1106, 0.0
  %1111 = vadd.xlane.f32.xlu0 %v1110
  %v1112 = vpop.xlane.xlu0 %1111
  %v1113 = vmul.f32 %v1109, %v895
  %v1114 = vmul.f32 %v1112, %v895
  %v1115 = vsub.f32 %v1105, %v1113
  %v1116 = vsub.f32 %v1106, %v1114
  %v1117 = vmul.f32 %v1115, %v1115
  %v1118 = vmul.f32 %v1116, %v1116
  %v1119 = vsel %vm116, %v1117, 0.0
  %1120 = vadd.xlane.f32.xlu0 %v1119
  %v1121 = vpop.xlane.xlu0 %1120
  %v1122 = vsel %vm116, %v1118, 0.0
  %1123 = vadd.xlane.f32.xlu0 %v1122
  %v1124 = vpop.xlane.xlu0 %1123
  %v1125 = vmul.f32 %v1121, %v895
  %v1126 = vmul.f32 %v1124, %v895
  %v1127 = vadd.f32 %v1125, 1e-05
  %v1128 = vadd.f32 %v1126, 1e-05
  %v1129 = vrsqrt.pop %v1127
  %v1130 = vrsqrt.pop %v1128
  %v1131 = vmul.f32 %v1115, %v1129
  %v1132 = vmul.f32 %v1116, %v1130
  %v1133 = vlaneseq
  %v1134 = vshrl.u32 %v1133, 7
  %v1135 = vsub.s32 0, %v1134
  %v1136 = vrot.slane %v93, %v1135
  %v1137 = vmul.f32 %v1131, %v1136
  %v1138 = vmul.f32 %v1132, %v1136
  %v1139 = vlaneseq
  %v1140 = vshrl.u32 %v1139, 7
  %v1141 = vsub.s32 0, %v1140
  %v1142 = vrot.slane %v94, %v1141
  %v1143 = vadd.f32 %v1137, %v1142
  %v1144 = vadd.f32 %v1138, %v1142
  %v1145 = vld [vmem:[%s3 + $0x48] sm:$0x1]
  %v1146 = vld [vmem:[%s3 + $0x49] sm:$0x1]
  %v1147 = vld [vmem:[%s3 + $0x4a] sm:$0x1]
  %v1148 = vld [vmem:[%s3 + $0x4b] sm:$0x1]
  %v1149 = vld [vmem:[%s3 + $0x4c] sm:$0x1]
  %v1150 = vld [vmem:[%s3 + $0x4d] sm:$0x1]
  %v1151 = vld [vmem:[%s3 + $0x4e] sm:$0x1]
  %v1152 = vld [vmem:[%s3 + $0x4f] sm:$0x1]
  %s1153 = scalar_lea.vmem %s1, 32
  %v1154 = vld [vmem:[%s1153] sm:$0xf]
  %v1155 = vld [vmem:[%s1153 + $0x8] sm:$0xf]
  %v1156 = vld [vmem:[%s1153 + $0x10] sm:$0xf]
  %v1157 = vld [vmem:[%s1153 + $0x18] sm:$0xf]
  %v1158 = vpack.c.bf16 %v1144, %v1143
  %v1159 = vlaneseq
  %v1160 = vshrl.u32 %v1159, 7
  %v1161 = vsub.s32 0, %v1160
  %v1162 = vrot.slane %v1145, %v1161
  %v1167 = vunpack.c.l.b16 %v1154
  %v1168 = vunpack.c.l.b16 %v1155
  %v1169 = vunpack.c.l.b16 %v1156
  %v1170 = vunpack.c.l.b16 %v1157
  %v1171 = vpack.c.b16 %v1168, %v1167
  %v1172 = vpack.c.b16 %v1170, %v1169
  %v1176 = vsel %vm116, %v1158, 0
  %1178 = vmatprep.subr.bf16.mxu0 0
  %1179 = vmatpush1.bf16.msra.mxu0 %v1171
  %1180 = vmatprep.subr.bf16.mxu0 0
  %1181 = vmatpush1.bf16.msra.mxu0 %v1172
  %1182 = vmatprep.subr.bf16.mxu0 0
  %1183 = vmatpush1.bf16.msra.mxu0 0
  %1184 = vmatprep.subr.bf16.mxu0 0
  %1185 = vmatpush1.bf16.msra.mxu0 0
  %1186 = vmatprep.subr.bf16.mxu0 0
  %1187 = vmatpush1.bf16.msra.mxu0 0
  %1188 = vmatprep.subr.bf16.mxu0 0
  %1189 = vmatpush1.bf16.msra.mxu0 0
  %1190 = vmatprep.subr.bf16.mxu0 0
  %1191 = vmatpush1.bf16.msra.mxu0 0
  %1192 = vmatprep.subr.bf16.mxu0 0
  %1193 = vmatpush1.bf16.msra.mxu0 0
  %1194 = vmatprep.subr.bf16.mxu0 0
  %1195 = vmatpush1.bf16.msra.mxu0 0
  %1196 = vmatprep.subr.bf16.mxu0 0
  %1197 = vmatpush1.bf16.msra.mxu0 0
  %1198 = vmatprep.subr.bf16.mxu0 0
  %1199 = vmatpush1.bf16.msra.mxu0 0
  %1200 = vmatprep.subr.bf16.mxu0 0
  %1201 = vmatpush1.bf16.msra.mxu0 0
  %1202 = vmatprep.subr.bf16.mxu0 0
  %1203 = vmatpush1.bf16.msra.mxu0 0
  %1204 = vmatprep.subr.bf16.mxu0 0
  %1205 = vmatpush1.bf16.msra.mxu0 0
  %1206 = vmatprep.subr.bf16.mxu0 0
  %1207 = vmatpush1.bf16.msra.mxu0 0
  %1208 = vmatprep.subr.bf16.mxu0 0
  %1209 = vmatpush1.bf16.msra.mxu0 0
  %1210 = vmatprep.mubr.bf16.mxu0 0
  %1211 = vmatmul.mubr.bf16.gmra.mrb[0].mxu0 %v1176
  %v1212 = vpop.f32.mrb[0].mxu0
  %v1213 = vadd.f32 %v1162, %v1212
  %v1214 = vpop.f32.mrb[0].mxu0
  %v1215 = vpop.f32.mrb[0].mxu0
  %v1216 = vadd.f32 %v1162, %v1215
  %v1217 = vpop.f32.mrb[0].mxu0
  %1218 = vdwg.mxu0
  %v1219 = vpack.c.bf16 %v1216, %v1213
  %1221 = vrot.lane.b32.xlu0 %v1219, 96
  %v1222 = vpop.permute.xlu0 %1221
  %v1224 = vsel %vm165, %v1219, 0
  %v1227 = vsel %vm165, %v1222, 0
  %1229 = vmatprep.subr.bf16.mxu0 0
  %1230 = vmatpush1.bf16.xpose.msra.mxu0 %v1227
  %1231 = vmatprep.subr.bf16.mxu0 0
  %1232 = vmatpush1.bf16.xpose.msra.mxu0 0
  %1233 = vmatprep.subr.bf16.mxu0 0
  %1234 = vmatpush1.bf16.xpose.msra.mxu0 0
  %1235 = vmatprep.subr.bf16.mxu0 0
  %1236 = vmatpush1.bf16.xpose.msra.mxu0 0
  %1237 = vmatprep.subr.bf16.mxu0 0
  %1238 = vmatpush1.bf16.xpose.msra.mxu0 0
  %1239 = vmatprep.subr.bf16.mxu0 0
  %1240 = vmatpush1.bf16.xpose.msra.mxu0 0
  %1241 = vmatprep.subr.bf16.mxu0 0
  %1242 = vmatpush1.bf16.xpose.msra.mxu0 0
  %1243 = vmatprep.subr.bf16.mxu0 0
  %1244 = vmatpush1.bf16.xpose.msra.mxu0 0
  %1245 = vmatprep.subr.bf16.mxu0 0
  %1246 = vmatpush1.bf16.xpose.msra.mxu0 0
  %1247 = vmatprep.subr.bf16.mxu0 0
  %1248 = vmatpush1.bf16.xpose.msra.mxu0 0
  %1249 = vmatprep.subr.bf16.mxu0 0
  %1250 = vmatpush1.bf16.xpose.msra.mxu0 0
  %1251 = vmatprep.subr.bf16.mxu0 0
  %1252 = vmatpush1.bf16.xpose.msra.mxu0 0
  %1253 = vmatprep.subr.bf16.mxu0 0
  %1254 = vmatpush1.bf16.xpose.msra.mxu0 0
  %1255 = vmatprep.subr.bf16.mxu0 0
  %1256 = vmatpush1.bf16.xpose.msra.mxu0 0
  %1257 = vmatprep.subr.bf16.mxu0 0
  %1258 = vmatpush1.bf16.xpose.msra.mxu0 0
  %1259 = vmatprep.subr.bf16.mxu0 0
  %1260 = vmatpush1.bf16.xpose.msra.mxu0 0
  %1261 = vmatprep.mubr.bf16.mxu0 0
  %1262 = vmatmul.mubr.bf16.gmra.mrb[0].mxu0 %v1224
  %v1263 = vpop.f32.mrb[0].mxu0
  %v1264 = vadd.f32 0.0, %v1263
  %v1265 = vpop.f32.mrb[0].mxu0
  %v1266 = vpop.f32.mrb[0].mxu0
  %v1267 = vadd.f32 0.0, %v1266
  %v1268 = vpop.f32.mrb[0].mxu0
  %1269 = vdwg.mxu0
  %v1270 = vmul.f32 %v1264, 0.35355338
  %v1271 = vmul.f32 %v1267, 0.35355338
  %v1272 = vadd.f32 %v1270, %v85
  %v1273 = vadd.f32 %v1271, %v86
  %v1274 = vsel %vm217, %v1272, -inf
  %1275 = vmax.xlane.f32.xlu0 %v1274
  %v1276 = vpop.xlane.xlu0 %1275
  %v1277 = vsel %vm217, %v1273, -inf
  %1278 = vmax.xlane.f32.xlu0 %v1277
  %v1279 = vpop.xlane.xlu0 %1278
  %v1280 = vsub.f32 %v1272, %v1276
  %v1281 = vsub.f32 %v1273, %v1279
  %v1282 = vmul.f32 %v1280, 1.442695
  %v1283 = vpow.pop %v1282
  %v1284 = vmul.f32 %v1281, 1.442695
  %v1285 = vpow.pop %v1284
  %v1286 = vsel %vm217, %v1283, 0.0
  %1287 = vadd.xlane.f32.xlu0 %v1286
  %v1288 = vpop.xlane.xlu0 %1287
  %v1289 = vsel %vm217, %v1285, 0.0
  %1290 = vadd.xlane.f32.xlu0 %v1289
  %v1291 = vpop.xlane.xlu0 %1290
  %v1292 = vrcp.pop %v1288
  %v1293 = vrcp.pop %v1291
  %v1294 = vmul.f32 %v1283, %v1292
  %v1295 = vmul.f32 %v1285, %v1293
  %v1296 = vpack.c.bf16 %v1295, %v1294
  %1297 = vrot.lane.b32.xlu0 %v1219, 64
  %v1298 = vpop.permute.xlu0 %1297
  %v1301 = vsel %vm217, %v1296, 0
  %1303 = vmatprep.subr.bf16.mxu0 0
  %1304 = vmatpush1.bf16.msra.mxu0 %v1298
  %1305 = vmatprep.subr.bf16.mxu0 0
  %1306 = vmatpush1.bf16.msra.mxu0 0
  %1307 = vmatprep.subr.bf16.mxu0 0
  %1308 = vmatpush1.bf16.msra.mxu0 0
  %1309 = vmatprep.subr.bf16.mxu0 0
  %1310 = vmatpush1.bf16.msra.mxu0 0
  %1311 = vmatprep.subr.bf16.mxu0 0
  %1312 = vmatpush1.bf16.msra.mxu0 0
  %1313 = vmatprep.subr.bf16.mxu0 0
  %1314 = vmatpush1.bf16.msra.mxu0 0
  %1315 = vmatprep.subr.bf16.mxu0 0
  %1316 = vmatpush1.bf16.msra.mxu0 0
  %1317 = vmatprep.subr.bf16.mxu0 0
  %1318 = vmatpush1.bf16.msra.mxu0 0
  %1319 = vmatprep.subr.bf16.mxu0 0
  %1320 = vmatpush1.bf16.msra.mxu0 0
  %1321 = vmatprep.subr.bf16.mxu0 0
  %1322 = vmatpush1.bf16.msra.mxu0 0
  %1323 = vmatprep.subr.bf16.mxu0 0
  %1324 = vmatpush1.bf16.msra.mxu0 0
  %1325 = vmatprep.subr.bf16.mxu0 0
  %1326 = vmatpush1.bf16.msra.mxu0 0
  %1327 = vmatprep.subr.bf16.mxu0 0
  %1328 = vmatpush1.bf16.msra.mxu0 0
  %1329 = vmatprep.subr.bf16.mxu0 0
  %1330 = vmatpush1.bf16.msra.mxu0 0
  %1331 = vmatprep.subr.bf16.mxu0 0
  %1332 = vmatpush1.bf16.msra.mxu0 0
  %1333 = vmatprep.subr.bf16.mxu0 0
  %1334 = vmatpush1.bf16.msra.mxu0 0
  %1335 = vmatprep.mubr.bf16.mxu0 0
  %1336 = vmatmul.mubr.bf16.gmra.mrb[0].mxu0 %v1301
  %v1337 = vpop.f32.mrb[0].mxu0
  %v1338 = vadd.f32 0.0, %v1337
  %v1339 = vpop.f32.mrb[0].mxu0
  %v1340 = vpop.f32.mrb[0].mxu0
  %v1341 = vadd.f32 0.0, %v1340
  %v1342 = vpop.f32.mrb[0].mxu0
  %1343 = vdwg.mxu0
  %v1344 = vpack.c.bf16 %v1341, %v1338
  %v1345 = vld [vmem:[%s1153] sm:$0xf]
  %1346 = vrot.lane.b32.xlu0 %v1219, 120
  %v1347 = vpop.permute.xlu0 %1346
  %1348 = vrot.lane.b32.xlu0 %v1219, 88
  %v1349 = vpop.permute.xlu0 %1348
  %v1351 = vsel %vm165, %v1347, 0
  %v1354 = vsel %vm165, %v1349, 0
  %1356 = vmatprep.subr.bf16.mxu0 0
  %1357 = vmatpush1.bf16.xpose.msra.mxu0 %v1354
  %1358 = vmatprep.subr.bf16.mxu0 0
  %1359 = vmatpush1.bf16.xpose.msra.mxu0 0
  %1360 = vmatprep.subr.bf16.mxu0 0
  %1361 = vmatpush1.bf16.xpose.msra.mxu0 0
  %1362 = vmatprep.subr.bf16.mxu0 0
  %1363 = vmatpush1.bf16.xpose.msra.mxu0 0
  %1364 = vmatprep.subr.bf16.mxu0 0
  %1365 = vmatpush1.bf16.xpose.msra.mxu0 0
  %1366 = vmatprep.subr.bf16.mxu0 0
  %1367 = vmatpush1.bf16.xpose.msra.mxu0 0
  %1368 = vmatprep.subr.bf16.mxu0 0
  %1369 = vmatpush1.bf16.xpose.msra.mxu0 0
  %1370 = vmatprep.subr.bf16.mxu0 0
  %1371 = vmatpush1.bf16.xpose.msra.mxu0 0
  %1372 = vmatprep.subr.bf16.mxu0 0
  %1373 = vmatpush1.bf16.xpose.msra.mxu0 0
  %1374 = vmatprep.subr.bf16.mxu0 0
  %1375 = vmatpush1.bf16.xpose.msra.mxu0 0
  %1376 = vmatprep.subr.bf16.mxu0 0
  %1377 = vmatpush1.bf16.xpose.msra.mxu0 0
  %1378 = vmatprep.subr.bf16.mxu0 0
  %1379 = vmatpush1.bf16.xpose.msra.mxu0 0
  %1380 = vmatprep.subr.bf16.mxu0 0
  %1381 = vmatpush1.bf16.xpose.msra.mxu0 0
  %1382 = vmatprep.subr.bf16.mxu0 0
  %1383 = vmatpush1.bf16.xpose.msra.mxu0 0
  %1384 = vmatprep.subr.bf16.mxu0 0
  %1385 = vmatpush1.bf16.xpose.msra.mxu0 0
  %1386 = vmatprep.subr.bf16.mxu0 0
  %1387 = vmatpush1.bf16.xpose.msra.mxu0 0
  %1388 = vmatprep.mubr.bf16.mxu0 0
  %1389 = vmatmul.mubr.bf16.gmra.mrb[0].mxu0 %v1351
  %v1390 = vpop.f32.mrb[0].mxu0
  %v1391 = vadd.f32 0.0, %v1390
  %v1392 = vpop.f32.mrb[0].mxu0
  %v1393 = vpop.f32.mrb[0].mxu0
  %v1394 = vadd.f32 0.0, %v1393
  %v1395 = vpop.f32.mrb[0].mxu0
  %1396 = vdwg.mxu0
  %v1397 = vmul.f32 %v1391, 0.35355338
  %v1398 = vmul.f32 %v1394, 0.35355338
  %v1399 = vadd.f32 %v1397, %v85
  %v1400 = vadd.f32 %v1398, %v86
  %v1401 = vsel %vm217, %v1399, -inf
  %1402 = vmax.xlane.f32.xlu0 %v1401
  %v1403 = vpop.xlane.xlu0 %1402
  %v1404 = vsel %vm217, %v1400, -inf
  %1405 = vmax.xlane.f32.xlu0 %v1404
  %v1406 = vpop.xlane.xlu0 %1405
  %v1407 = vsub.f32 %v1399, %v1403
  %v1408 = vsub.f32 %v1400, %v1406
  %v1409 = vmul.f32 %v1407, 1.442695
  %v1410 = vpow.pop %v1409
  %v1411 = vmul.f32 %v1408, 1.442695
  %v1412 = vpow.pop %v1411
  %v1413 = vsel %vm217, %v1410, 0.0
  %1414 = vadd.xlane.f32.xlu0 %v1413
  %v1415 = vpop.xlane.xlu0 %1414
  %v1416 = vsel %vm217, %v1412, 0.0
  %1417 = vadd.xlane.f32.xlu0 %v1416
  %v1418 = vpop.xlane.xlu0 %1417
  %v1419 = vrcp.pop %v1415
  %v1420 = vrcp.pop %v1418
  %v1421 = vmul.f32 %v1410, %v1419
  %v1422 = vmul.f32 %v1412, %v1420
  %v1423 = vpack.c.bf16 %v1422, %v1421
  %1424 = vrot.lane.b32.xlu0 %v1219, 56
  %v1425 = vpop.permute.xlu0 %1424
  %v1428 = vsel %vm217, %v1423, 0
  %1430 = vmatprep.subr.bf16.mxu0 0
  %1431 = vmatpush1.bf16.msra.mxu0 %v1425
  %1432 = vmatprep.subr.bf16.mxu0 0
  %1433 = vmatpush1.bf16.msra.mxu0 0
  %1434 = vmatprep.subr.bf16.mxu0 0
  %1435 = vmatpush1.bf16.msra.mxu0 0
  %1436 = vmatprep.subr.bf16.mxu0 0
  %1437 = vmatpush1.bf16.msra.mxu0 0
  %1438 = vmatprep.subr.bf16.mxu0 0
  %1439 = vmatpush1.bf16.msra.mxu0 0
  %1440 = vmatprep.subr.bf16.mxu0 0
  %1441 = vmatpush1.bf16.msra.mxu0 0
  %1442 = vmatprep.subr.bf16.mxu0 0
  %1443 = vmatpush1.bf16.msra.mxu0 0
  %1444 = vmatprep.subr.bf16.mxu0 0
  %1445 = vmatpush1.bf16.msra.mxu0 0
  %1446 = vmatprep.subr.bf16.mxu0 0
  %1447 = vmatpush1.bf16.msra.mxu0 0
  %1448 = vmatprep.subr.bf16.mxu0 0
  %1449 = vmatpush1.bf16.msra.mxu0 0
  %1450 = vmatprep.subr.bf16.mxu0 0
  %1451 = vmatpush1.bf16.msra.mxu0 0
  %1452 = vmatprep.subr.bf16.mxu0 0
  %1453 = vmatpush1.bf16.msra.mxu0 0
  %1454 = vmatprep.subr.bf16.mxu0 0
  %1455 = vmatpush1.bf16.msra.mxu0 0
  %1456 = vmatprep.subr.bf16.mxu0 0
  %1457 = vmatpush1.bf16.msra.mxu0 0
  %1458 = vmatprep.subr.bf16.mxu0 0
  %1459 = vmatpush1.bf16.msra.mxu0 0
  %1460 = vmatprep.subr.bf16.mxu0 0
  %1461 = vmatpush1.bf16.msra.mxu0 0
  %1462 = vmatprep.mubr.bf16.mxu0 0
  %1463 = vmatmul.mubr.bf16.gmra.mrb[0].mxu0 %v1428
  %v1464 = vpop.f32.mrb[0].mxu0
  %v1465 = vadd.f32 0.0, %v1464
  %v1466 = vpop.f32.mrb[0].mxu0
  %v1467 = vpop.f32.mrb[0].mxu0
  %v1468 = vadd.f32 0.0, %v1467
  %v1469 = vpop.f32.mrb[0].mxu0
  %1470 = vdwg.mxu0
  %v1471 = vpack.c.bf16 %v1468, %v1465
  %v1472 = vld [vmem:[%s1153 + $0x8] sm:$0xf]
  %v1474 = vunpack.c.l.b16 %v1472
  %v1475 = vpack.c.b16 %v1474, %v1474
  %1476 = vrot.lane.b32.xlu0 %v1475, 32
  %v1477 = vpop.permute.xlu0 %1476
  %v1479 = vsel %vm165, %v1471, 0
  %v1482 = vsel %vm425, %v1477, 0
  %1484 = vmatprep.subr.bf16.mxu0 0
  %1485 = vmatpush1.bf16.msra.mxu0 %v1482
  %1486 = vmatprep.subr.bf16.mxu0 0
  %1487 = vmatpush1.bf16.msra.mxu0 0
  %1488 = vmatprep.subr.bf16.mxu0 0
  %1489 = vmatpush1.bf16.msra.mxu0 0
  %1490 = vmatprep.subr.bf16.mxu0 0
  %1491 = vmatpush1.bf16.msra.mxu0 0
  %1492 = vmatprep.subr.bf16.mxu0 0
  %1493 = vmatpush1.bf16.msra.mxu0 0
  %1494 = vmatprep.subr.bf16.mxu0 0
  %1495 = vmatpush1.bf16.msra.mxu0 0
  %1496 = vmatprep.subr.bf16.mxu0 0
  %1497 = vmatpush1.bf16.msra.mxu0 0
  %1498 = vmatprep.subr.bf16.mxu0 0
  %1499 = vmatpush1.bf16.msra.mxu0 0
  %1500 = vmatprep.subr.bf16.mxu0 0
  %1501 = vmatpush1.bf16.msra.mxu0 0
  %1502 = vmatprep.subr.bf16.mxu0 0
  %1503 = vmatpush1.bf16.msra.mxu0 0
  %1504 = vmatprep.subr.bf16.mxu0 0
  %1505 = vmatpush1.bf16.msra.mxu0 0
  %1506 = vmatprep.subr.bf16.mxu0 0
  %1507 = vmatpush1.bf16.msra.mxu0 0
  %1508 = vmatprep.subr.bf16.mxu0 0
  %1509 = vmatpush1.bf16.msra.mxu0 0
  %1510 = vmatprep.subr.bf16.mxu0 0
  %1511 = vmatpush1.bf16.msra.mxu0 0
  %1512 = vmatprep.subr.bf16.mxu0 0
  %1513 = vmatpush1.bf16.msra.mxu0 0
  %1514 = vmatprep.subr.bf16.mxu0 0
  %1515 = vmatpush1.bf16.msra.mxu0 0
  %1516 = vmatprep.mubr.bf16.mxu0 0
  %1517 = vmatmul.mubr.bf16.gmra.mrb[0].mxu0 %v1479
  %v1518 = vpop.f32.mrb[0].mxu0
  %v1519 = vadd.f32 0.0, %v1518
  %v1520 = vpop.f32.mrb[0].mxu0
  %v1521 = vpop.f32.mrb[0].mxu0
  %v1522 = vadd.f32 0.0, %v1521
  %v1523 = vpop.f32.mrb[0].mxu0
  %1524 = vdwg.mxu0
  %v1526 = vunpack.c.l.b16 %v1345
  %v1527 = vpack.c.b16 %v1526, %v1526
  %1528 = vrot.lane.b32.xlu0 %v1527, 32
  %v1529 = vpop.permute.xlu0 %1528
  %v1531 = vsel %vm165, %v1344, 0
  %v1534 = vsel %vm425, %v1529, 0
  %1536 = vmatprep.subr.bf16.mxu0 0
  %1537 = vmatpush1.bf16.msra.mxu0 %v1534
  %1538 = vmatprep.subr.bf16.mxu0 0
  %1539 = vmatpush1.bf16.msra.mxu0 0
  %1540 = vmatprep.subr.bf16.mxu0 0
  %1541 = vmatpush1.bf16.msra.mxu0 0
  %1542 = vmatprep.subr.bf16.mxu0 0
  %1543 = vmatpush1.bf16.msra.mxu0 0
  %1544 = vmatprep.subr.bf16.mxu0 0
  %1545 = vmatpush1.bf16.msra.mxu0 0
  %1546 = vmatprep.subr.bf16.mxu0 0
  %1547 = vmatpush1.bf16.msra.mxu0 0
  %1548 = vmatprep.subr.bf16.mxu0 0
  %1549 = vmatpush1.bf16.msra.mxu0 0
  %1550 = vmatprep.subr.bf16.mxu0 0
  %1551 = vmatpush1.bf16.msra.mxu0 0
  %1552 = vmatprep.subr.bf16.mxu0 0
  %1553 = vmatpush1.bf16.msra.mxu0 0
  %1554 = vmatprep.subr.bf16.mxu0 0
  %1555 = vmatpush1.bf16.msra.mxu0 0
  %1556 = vmatprep.subr.bf16.mxu0 0
  %1557 = vmatpush1.bf16.msra.mxu0 0
  %1558 = vmatprep.subr.bf16.mxu0 0
  %1559 = vmatpush1.bf16.msra.mxu0 0
  %1560 = vmatprep.subr.bf16.mxu0 0
  %1561 = vmatpush1.bf16.msra.mxu0 0
  %1562 = vmatprep.subr.bf16.mxu0 0
  %1563 = vmatpush1.bf16.msra.mxu0 0
  %1564 = vmatprep.subr.bf16.mxu0 0
  %1565 = vmatpush1.bf16.msra.mxu0 0
  %1566 = vmatprep.subr.bf16.mxu0 0
  %1567 = vmatpush1.bf16.msra.mxu0 0
  %1568 = vmatprep.mubr.bf16.mxu0 0
  %1569 = vmatmul.mubr.bf16.gmra.mrb[0].mxu0 %v1531
  %v1570 = vpop.f32.mrb[0].mxu0
  %v1571 = vadd.f32 %v1519, %v1570
  %v1572 = vpop.f32.mrb[0].mxu0
  %v1573 = vpop.f32.mrb[0].mxu0
  %v1574 = vadd.f32 %v1522, %v1573
  %v1575 = vpop.f32.mrb[0].mxu0
  %1576 = vdwg.mxu0
  %1577 = vrot.lane.b32.xlu0 %v1219, 112
  %v1578 = vpop.permute.xlu0 %1577
  %1579 = vrot.lane.b32.xlu0 %v1219, 80
  %v1580 = vpop.permute.xlu0 %1579
  %v1582 = vsel %vm165, %v1578, 0
  %v1585 = vsel %vm165, %v1580, 0
  %1587 = vmatprep.subr.bf16.mxu0 0
  %1588 = vmatpush1.bf16.xpose.msra.mxu0 %v1585
  %1589 = vmatprep.subr.bf16.mxu0 0
  %1590 = vmatpush1.bf16.xpose.msra.mxu0 0
  %1591 = vmatprep.subr.bf16.mxu0 0
  %1592 = vmatpush1.bf16.xpose.msra.mxu0 0
  %1593 = vmatprep.subr.bf16.mxu0 0
  %1594 = vmatpush1.bf16.xpose.msra.mxu0 0
  %1595 = vmatprep.subr.bf16.mxu0 0
  %1596 = vmatpush1.bf16.xpose.msra.mxu0 0
  %1597 = vmatprep.subr.bf16.mxu0 0
  %1598 = vmatpush1.bf16.xpose.msra.mxu0 0
  %1599 = vmatprep.subr.bf16.mxu0 0
  %1600 = vmatpush1.bf16.xpose.msra.mxu0 0
  %1601 = vmatprep.subr.bf16.mxu0 0
  %1602 = vmatpush1.bf16.xpose.msra.mxu0 0
  %1603 = vmatprep.subr.bf16.mxu0 0
  %1604 = vmatpush1.bf16.xpose.msra.mxu0 0
  %1605 = vmatprep.subr.bf16.mxu0 0
  %1606 = vmatpush1.bf16.xpose.msra.mxu0 0
  %1607 = vmatprep.subr.bf16.mxu0 0
  %1608 = vmatpush1.bf16.xpose.msra.mxu0 0
  %1609 = vmatprep.subr.bf16.mxu0 0
  %1610 = vmatpush1.bf16.xpose.msra.mxu0 0
  %1611 = vmatprep.subr.bf16.mxu0 0
  %1612 = vmatpush1.bf16.xpose.msra.mxu0 0
  %1613 = vmatprep.subr.bf16.mxu0 0
  %1614 = vmatpush1.bf16.xpose.msra.mxu0 0
  %1615 = vmatprep.subr.bf16.mxu0 0
  %1616 = vmatpush1.bf16.xpose.msra.mxu0 0
  %1617 = vmatprep.subr.bf16.mxu0 0
  %1618 = vmatpush1.bf16.xpose.msra.mxu0 0
  %1619 = vmatprep.mubr.bf16.mxu0 0
  %1620 = vmatmul.mubr.bf16.gmra.mrb[0].mxu0 %v1582
  %v1621 = vpop.f32.mrb[0].mxu0
  %v1622 = vadd.f32 0.0, %v1621
  %v1623 = vpop.f32.mrb[0].mxu0
  %v1624 = vpop.f32.mrb[0].mxu0
  %v1625 = vadd.f32 0.0, %v1624
  %v1626 = vpop.f32.mrb[0].mxu0
  %1627 = vdwg.mxu0
  %v1628 = vmul.f32 %v1622, 0.35355338
  %v1629 = vmul.f32 %v1625, 0.35355338
  %v1630 = vadd.f32 %v1628, %v85
  %v1631 = vadd.f32 %v1629, %v86
  %v1632 = vsel %vm217, %v1630, -inf
  %1633 = vmax.xlane.f32.xlu0 %v1632
  %v1634 = vpop.xlane.xlu0 %1633
  %v1635 = vsel %vm217, %v1631, -inf
  %1636 = vmax.xlane.f32.xlu0 %v1635
  %v1637 = vpop.xlane.xlu0 %1636
  %v1638 = vsub.f32 %v1630, %v1634
  %v1639 = vsub.f32 %v1631, %v1637
  %v1640 = vmul.f32 %v1638, 1.442695
  %v1641 = vpow.pop %v1640
  %v1642 = vmul.f32 %v1639, 1.442695
  %v1643 = vpow.pop %v1642
  %v1644 = vsel %vm217, %v1641, 0.0
  %1645 = vadd.xlane.f32.xlu0 %v1644
  %v1646 = vpop.xlane.xlu0 %1645
  %v1647 = vsel %vm217, %v1643, 0.0
  %1648 = vadd.xlane.f32.xlu0 %v1647
  %v1649 = vpop.xlane.xlu0 %1648
  %v1650 = vrcp.pop %v1646
  %v1651 = vrcp.pop %v1649
  %v1652 = vmul.f32 %v1641, %v1650
  %v1653 = vmul.f32 %v1643, %v1651
  %v1654 = vpack.c.bf16 %v1653, %v1652
  %1655 = vrot.lane.b32.xlu0 %v1219, 48
  %v1656 = vpop.permute.xlu0 %1655
  %v1659 = vsel %vm217, %v1654, 0
  %1661 = vmatprep.subr.bf16.mxu0 0
  %1662 = vmatpush1.bf16.msra.mxu0 %v1656
  %1663 = vmatprep.subr.bf16.mxu0 0
  %1664 = vmatpush1.bf16.msra.mxu0 0
  %1665 = vmatprep.subr.bf16.mxu0 0
  %1666 = vmatpush1.bf16.msra.mxu0 0
  %1667 = vmatprep.subr.bf16.mxu0 0
  %1668 = vmatpush1.bf16.msra.mxu0 0
  %1669 = vmatprep.subr.bf16.mxu0 0
  %1670 = vmatpush1.bf16.msra.mxu0 0
  %1671 = vmatprep.subr.bf16.mxu0 0
  %1672 = vmatpush1.bf16.msra.mxu0 0
  %1673 = vmatprep.subr.bf16.mxu0 0
  %1674 = vmatpush1.bf16.msra.mxu0 0
  %1675 = vmatprep.subr.bf16.mxu0 0
  %1676 = vmatpush1.bf16.msra.mxu0 0
  %1677 = vmatprep.subr.bf16.mxu0 0
  %1678 = vmatpush1.bf16.msra.mxu0 0
  %1679 = vmatprep.subr.bf16.mxu0 0
  %1680 = vmatpush1.bf16.msra.mxu0 0
  %1681 = vmatprep.subr.bf16.mxu0 0
  %1682 = vmatpush1.bf16.msra.mxu0 0
  %1683 = vmatprep.subr.bf16.mxu0 0
  %1684 = vmatpush1.bf16.msra.mxu0 0
  %1685 = vmatprep.subr.bf16.mxu0 0
  %1686 = vmatpush1.bf16.msra.mxu0 0
  %1687 = vmatprep.subr.bf16.mxu0 0
  %1688 = vmatpush1.bf16.msra.mxu0 0
  %1689 = vmatprep.subr.bf16.mxu0 0
  %1690 = vmatpush1.bf16.msra.mxu0 0
  %1691 = vmatprep.subr.bf16.mxu0 0
  %1692 = vmatpush1.bf16.msra.mxu0 0
  %1693 = vmatprep.mubr.bf16.mxu0 0
  %1694 = vmatmul.mubr.bf16.gmra.mrb[0].mxu0 %v1659
  %v1695 = vpop.f32.mrb[0].mxu0
  %v1696 = vadd.f32 0.0, %v1695
  %v1697 = vpop.f32.mrb[0].mxu0
  %v1698 = vpop.f32.mrb[0].mxu0
  %v1699 = vadd.f32 0.0, %v1698
  %v1700 = vpop.f32.mrb[0].mxu0
  %1701 = vdwg.mxu0
  %v1702 = vpack.c.bf16 %v1699, %v1696
  %v1703 = vld [vmem:[%s1153 + $0x10] sm:$0xf]
  %v1705 = vunpack.c.l.b16 %v1703
  %v1706 = vpack.c.b16 %v1705, %v1705
  %1707 = vrot.lane.b32.xlu0 %v1706, 32
  %v1708 = vpop.permute.xlu0 %1707
  %v1710 = vsel %vm165, %v1702, 0
  %v1713 = vsel %vm425, %v1708, 0
  %1715 = vmatprep.subr.bf16.mxu0 0
  %1716 = vmatpush1.bf16.msra.mxu0 %v1713
  %1717 = vmatprep.subr.bf16.mxu0 0
  %1718 = vmatpush1.bf16.msra.mxu0 0
  %1719 = vmatprep.subr.bf16.mxu0 0
  %1720 = vmatpush1.bf16.msra.mxu0 0
  %1721 = vmatprep.subr.bf16.mxu0 0
  %1722 = vmatpush1.bf16.msra.mxu0 0
  %1723 = vmatprep.subr.bf16.mxu0 0
  %1724 = vmatpush1.bf16.msra.mxu0 0
  %1725 = vmatprep.subr.bf16.mxu0 0
  %1726 = vmatpush1.bf16.msra.mxu0 0
  %1727 = vmatprep.subr.bf16.mxu0 0
  %1728 = vmatpush1.bf16.msra.mxu0 0
  %1729 = vmatprep.subr.bf16.mxu0 0
  %1730 = vmatpush1.bf16.msra.mxu0 0
  %1731 = vmatprep.subr.bf16.mxu0 0
  %1732 = vmatpush1.bf16.msra.mxu0 0
  %1733 = vmatprep.subr.bf16.mxu0 0
  %1734 = vmatpush1.bf16.msra.mxu0 0
  %1735 = vmatprep.subr.bf16.mxu0 0
  %1736 = vmatpush1.bf16.msra.mxu0 0
  %1737 = vmatprep.subr.bf16.mxu0 0
  %1738 = vmatpush1.bf16.msra.mxu0 0
  %1739 = vmatprep.subr.bf16.mxu0 0
  %1740 = vmatpush1.bf16.msra.mxu0 0
  %1741 = vmatprep.subr.bf16.mxu0 0
  %1742 = vmatpush1.bf16.msra.mxu0 0
  %1743 = vmatprep.subr.bf16.mxu0 0
  %1744 = vmatpush1.bf16.msra.mxu0 0
  %1745 = vmatprep.subr.bf16.mxu0 0
  %1746 = vmatpush1.bf16.msra.mxu0 0
  %1747 = vmatprep.mubr.bf16.mxu0 0
  %1748 = vmatmul.mubr.bf16.gmra.mrb[0].mxu0 %v1710
  %v1749 = vpop.f32.mrb[0].mxu0
  %v1750 = vadd.f32 0.0, %v1749
  %v1751 = vpop.f32.mrb[0].mxu0
  %v1752 = vpop.f32.mrb[0].mxu0
  %v1753 = vadd.f32 0.0, %v1752
  %v1754 = vpop.f32.mrb[0].mxu0
  %1755 = vdwg.mxu0
  %v1756 = vadd.f32 %v1571, %v1750
  %v1757 = vadd.f32 %v1574, %v1753
  %1758 = vrot.lane.b32.xlu0 %v1219, 104
  %v1759 = vpop.permute.xlu0 %1758
  %1760 = vrot.lane.b32.xlu0 %v1219, 72
  %v1761 = vpop.permute.xlu0 %1760
  %v1763 = vsel %vm165, %v1759, 0
  %v1766 = vsel %vm165, %v1761, 0
  %1768 = vmatprep.subr.bf16.mxu0 0
  %1769 = vmatpush1.bf16.xpose.msra.mxu0 %v1766
  %1770 = vmatprep.subr.bf16.mxu0 0
  %1771 = vmatpush1.bf16.xpose.msra.mxu0 0
  %1772 = vmatprep.subr.bf16.mxu0 0
  %1773 = vmatpush1.bf16.xpose.msra.mxu0 0
  %1774 = vmatprep.subr.bf16.mxu0 0
  %1775 = vmatpush1.bf16.xpose.msra.mxu0 0
  %1776 = vmatprep.subr.bf16.mxu0 0
  %1777 = vmatpush1.bf16.xpose.msra.mxu0 0
  %1778 = vmatprep.subr.bf16.mxu0 0
  %1779 = vmatpush1.bf16.xpose.msra.mxu0 0
  %1780 = vmatprep.subr.bf16.mxu0 0
  %1781 = vmatpush1.bf16.xpose.msra.mxu0 0
  %1782 = vmatprep.subr.bf16.mxu0 0
  %1783 = vmatpush1.bf16.xpose.msra.mxu0 0
  %1784 = vmatprep.subr.bf16.mxu0 0
  %1785 = vmatpush1.bf16.xpose.msra.mxu0 0
  %1786 = vmatprep.subr.bf16.mxu0 0
  %1787 = vmatpush1.bf16.xpose.msra.mxu0 0
  %1788 = vmatprep.subr.bf16.mxu0 0
  %1789 = vmatpush1.bf16.xpose.msra.mxu0 0
  %1790 = vmatprep.subr.bf16.mxu0 0
  %1791 = vmatpush1.bf16.xpose.msra.mxu0 0
  %1792 = vmatprep.subr.bf16.mxu0 0
  %1793 = vmatpush1.bf16.xpose.msra.mxu0 0
  %1794 = vmatprep.subr.bf16.mxu0 0
  %1795 = vmatpush1.bf16.xpose.msra.mxu0 0
  %1796 = vmatprep.subr.bf16.mxu0 0
  %1797 = vmatpush1.bf16.xpose.msra.mxu0 0
  %1798 = vmatprep.subr.bf16.mxu0 0
  %1799 = vmatpush1.bf16.xpose.msra.mxu0 0
  %1800 = vmatprep.mubr.bf16.mxu0 0
  %1801 = vmatmul.mubr.bf16.gmra.mrb[0].mxu0 %v1763
  %v1802 = vpop.f32.mrb[0].mxu0
  %v1803 = vadd.f32 0.0, %v1802
  %v1804 = vpop.f32.mrb[0].mxu0
  %v1805 = vpop.f32.mrb[0].mxu0
  %v1806 = vadd.f32 0.0, %v1805
  %v1807 = vpop.f32.mrb[0].mxu0
  %1808 = vdwg.mxu0
  %v1809 = vmul.f32 %v1803, 0.35355338
  %v1810 = vmul.f32 %v1806, 0.35355338
  %v1811 = vadd.f32 %v1809, %v85
  %v1812 = vadd.f32 %v1810, %v86
  %v1813 = vsel %vm217, %v1811, -inf
  %1814 = vmax.xlane.f32.xlu0 %v1813
  %v1815 = vpop.xlane.xlu0 %1814
  %v1816 = vsel %vm217, %v1812, -inf
  %1817 = vmax.xlane.f32.xlu0 %v1816
  %v1818 = vpop.xlane.xlu0 %1817
  %v1819 = vsub.f32 %v1811, %v1815
  %v1820 = vsub.f32 %v1812, %v1818
  %v1821 = vmul.f32 %v1819, 1.442695
  %v1822 = vpow.pop %v1821
  %v1823 = vmul.f32 %v1820, 1.442695
  %v1824 = vpow.pop %v1823
  %v1825 = vsel %vm217, %v1822, 0.0
  %1826 = vadd.xlane.f32.xlu0 %v1825
  %v1827 = vpop.xlane.xlu0 %1826
  %v1828 = vsel %vm217, %v1824, 0.0
  %1829 = vadd.xlane.f32.xlu0 %v1828
  %v1830 = vpop.xlane.xlu0 %1829
  %v1831 = vrcp.pop %v1827
  %v1832 = vrcp.pop %v1830
  %v1833 = vmul.f32 %v1822, %v1831
  %v1834 = vmul.f32 %v1824, %v1832
  %v1835 = vpack.c.bf16 %v1834, %v1833
  %1836 = vrot.lane.b32.xlu0 %v1219, 40
  %v1837 = vpop.permute.xlu0 %1836
  %v1840 = vsel %vm217, %v1835, 0
  %1842 = vmatprep.subr.bf16.mxu0 0
  %1843 = vmatpush1.bf16.msra.mxu0 %v1837
  %1844 = vmatprep.subr.bf16.mxu0 0
  %1845 = vmatpush1.bf16.msra.mxu0 0
  %1846 = vmatprep.subr.bf16.mxu0 0
  %1847 = vmatpush1.bf16.msra.mxu0 0
  %1848 = vmatprep.subr.bf16.mxu0 0
  %1849 = vmatpush1.bf16.msra.mxu0 0
  %1850 = vmatprep.subr.bf16.mxu0 0
  %1851 = vmatpush1.bf16.msra.mxu0 0
  %1852 = vmatprep.subr.bf16.mxu0 0
  %1853 = vmatpush1.bf16.msra.mxu0 0
  %1854 = vmatprep.subr.bf16.mxu0 0
  %1855 = vmatpush1.bf16.msra.mxu0 0
  %1856 = vmatprep.subr.bf16.mxu0 0
  %1857 = vmatpush1.bf16.msra.mxu0 0
  %1858 = vmatprep.subr.bf16.mxu0 0
  %1859 = vmatpush1.bf16.msra.mxu0 0
  %1860 = vmatprep.subr.bf16.mxu0 0
  %1861 = vmatpush1.bf16.msra.mxu0 0
  %1862 = vmatprep.subr.bf16.mxu0 0
  %1863 = vmatpush1.bf16.msra.mxu0 0
  %1864 = vmatprep.subr.bf16.mxu0 0
  %1865 = vmatpush1.bf16.msra.mxu0 0
  %1866 = vmatprep.subr.bf16.mxu0 0
  %1867 = vmatpush1.bf16.msra.mxu0 0
  %1868 = vmatprep.subr.bf16.mxu0 0
  %1869 = vmatpush1.bf16.msra.mxu0 0
  %1870 = vmatprep.subr.bf16.mxu0 0
  %1871 = vmatpush1.bf16.msra.mxu0 0
  %1872 = vmatprep.subr.bf16.mxu0 0
  %1873 = vmatpush1.bf16.msra.mxu0 0
  %1874 = vmatprep.mubr.bf16.mxu0 0
  %1875 = vmatmul.mubr.bf16.gmra.mrb[0].mxu0 %v1840
  %v1876 = vpop.f32.mrb[0].mxu0
  %v1877 = vadd.f32 0.0, %v1876
  %v1878 = vpop.f32.mrb[0].mxu0
  %v1879 = vpop.f32.mrb[0].mxu0
  %v1880 = vadd.f32 0.0, %v1879
  %v1881 = vpop.f32.mrb[0].mxu0
  %1882 = vdwg.mxu0
  %v1883 = vpack.c.bf16 %v1880, %v1877
  %v1884 = vpack.c.b16 %v1170, %v1170
  %1885 = vrot.lane.b32.xlu0 %v1884, 32
  %v1886 = vpop.permute.xlu0 %1885
  %v1888 = vsel %vm165, %v1883, 0
  %v1891 = vsel %vm425, %v1886, 0
  %1893 = vmatprep.subr.bf16.mxu0 0
  %1894 = vmatpush1.bf16.msra.mxu0 %v1891
  %1895 = vmatprep.subr.bf16.mxu0 0
  %1896 = vmatpush1.bf16.msra.mxu0 0
  %1897 = vmatprep.subr.bf16.mxu0 0
  %1898 = vmatpush1.bf16.msra.mxu0 0
  %1899 = vmatprep.subr.bf16.mxu0 0
  %1900 = vmatpush1.bf16.msra.mxu0 0
  %1901 = vmatprep.subr.bf16.mxu0 0
  %1902 = vmatpush1.bf16.msra.mxu0 0
  %1903 = vmatprep.subr.bf16.mxu0 0
  %1904 = vmatpush1.bf16.msra.mxu0 0
  %1905 = vmatprep.subr.bf16.mxu0 0
  %1906 = vmatpush1.bf16.msra.mxu0 0
  %1907 = vmatprep.subr.bf16.mxu0 0
  %1908 = vmatpush1.bf16.msra.mxu0 0
  %1909 = vmatprep.subr.bf16.mxu0 0
  %1910 = vmatpush1.bf16.msra.mxu0 0
  %1911 = vmatprep.subr.bf16.mxu0 0
  %1912 = vmatpush1.bf16.msra.mxu0 0
  %1913 = vmatprep.subr.bf16.mxu0 0
  %1914 = vmatpush1.bf16.msra.mxu0 0
  %1915 = vmatprep.subr.bf16.mxu0 0
  %1916 = vmatpush1.bf16.msra.mxu0 0
  %1917 = vmatprep.subr.bf16.mxu0 0
  %1918 = vmatpush1.bf16.msra.mxu0 0
  %1919 = vmatprep.subr.bf16.mxu0 0
  %1920 = vmatpush1.bf16.msra.mxu0 0
  %1921 = vmatprep.subr.bf16.mxu0 0
  %1922 = vmatpush1.bf16.msra.mxu0 0
  %1923 = vmatprep.subr.bf16.mxu0 0
  %1924 = vmatpush1.bf16.msra.mxu0 0
  %1925 = vmatprep.mubr.bf16.mxu0 0
  %1926 = vmatmul.mubr.bf16.gmra.mrb[0].mxu0 %v1888
  %v1927 = vpop.f32.mrb[0].mxu0
  %v1928 = vadd.f32 0.0, %v1927
  %v1929 = vpop.f32.mrb[0].mxu0
  %v1930 = vpop.f32.mrb[0].mxu0
  %v1931 = vadd.f32 0.0, %v1930
  %v1932 = vpop.f32.mrb[0].mxu0
  %1933 = vdwg.mxu0
  %v1934 = vadd.f32 %v1756, %v1928
  %v1935 = vadd.f32 %v1757, %v1931
  %v1936 = vadd.f32 %v1143, %v1934
  %v1937 = vadd.f32 %v1144, %v1935
  %v1938 = vlaneseq
  %v1939 = vshrl.u32 %v1938, 7
  %v1940 = vsub.s32 0, %v1939
  %v1941 = vrot.slane %v1146, %v1940
  %v1942 = vadd.f32 %v1936, %v1941
  %v1943 = vadd.f32 %v1937, %v1941
  %v1944 = vsel %vm116, %v1942, 0.0
  %1945 = vadd.xlane.f32.xlu0 %v1944
  %v1946 = vpop.xlane.xlu0 %1945
  %v1947 = vsel %vm116, %v1943, 0.0
  %1948 = vadd.xlane.f32.xlu0 %v1947
  %v1949 = vpop.xlane.xlu0 %1948
  %v1950 = vmul.f32 %v1946, %v895
  %v1951 = vmul.f32 %v1949, %v895
  %v1952 = vsub.f32 %v1942, %v1950
  %v1953 = vsub.f32 %v1943, %v1951
  %v1954 = vmul.f32 %v1952, %v1952
  %v1955 = vmul.f32 %v1953, %v1953
  %v1956 = vsel %vm116, %v1954, 0.0
  %1957 = vadd.xlane.f32.xlu0 %v1956
  %v1958 = vpop.xlane.xlu0 %1957
  %v1959 = vsel %vm116, %v1955, 0.0
  %1960 = vadd.xlane.f32.xlu0 %v1959
  %v1961 = vpop.xlane.xlu0 %1960
  %v1962 = vmul.f32 %v1958, %v895
  %v1963 = vmul.f32 %v1961, %v895
  %v1964 = vadd.f32 %v1962, 1e-05
  %v1965 = vadd.f32 %v1963, 1e-05
  %v1966 = vrsqrt.pop %v1964
  %v1967 = vrsqrt.pop %v1965
  %v1968 = vmul.f32 %v1952, %v1966
  %v1969 = vmul.f32 %v1953, %v1967
  %v1970 = vlaneseq
  %v1971 = vshrl.u32 %v1970, 7
  %v1972 = vsub.s32 0, %v1971
  %v1973 = vrot.slane %v1149, %v1972
  %v1974 = vmul.f32 %v1968, %v1973
  %v1975 = vmul.f32 %v1969, %v1973
  %v1976 = vlaneseq
  %v1977 = vshrl.u32 %v1976, 7
  %v1978 = vsub.s32 0, %v1977
  %v1979 = vrot.slane %v1150, %v1978
  %v1980 = vadd.f32 %v1974, %v1979
  %v1981 = vadd.f32 %v1975, %v1979
  %v1982 = vld [vmem:[%s1153 + $0x4] sm:$0xf]
  %v1983 = vld [vmem:[%s1153 + $0xc] sm:$0xf]
  %v1984 = vld [vmem:[%s1153 + $0x14] sm:$0xf]
  %v1985 = vld [vmem:[%s1153 + $0x1c] sm:$0xf]
  %v1986 = vpack.c.bf16 %v1981, %v1980
  %v1987 = vlaneseq
  %v1988 = vshrl.u32 %v1987, 7
  %v1989 = vsub.s32 0, %v1988
  %v1990 = vrot.slane %v1147, %v1989
  %v1995 = vunpack.c.l.b16 %v1982
  %v1996 = vunpack.c.l.b16 %v1983
  %v1997 = vunpack.c.l.b16 %v1984
  %v1998 = vunpack.c.l.b16 %v1985
  %v1999 = vpack.c.b16 %v1996, %v1995
  %v2000 = vpack.c.b16 %v1998, %v1997
  %v2004 = vsel %vm116, %v1986, 0
  %2006 = vmatprep.subr.bf16.mxu0 0
  %2007 = vmatpush1.bf16.msra.mxu0 %v1999
  %2008 = vmatprep.subr.bf16.mxu0 0
  %2009 = vmatpush1.bf16.msra.mxu0 %v2000
  %2010 = vmatprep.subr.bf16.mxu0 0
  %2011 = vmatpush1.bf16.msra.mxu0 0
  %2012 = vmatprep.subr.bf16.mxu0 0
  %2013 = vmatpush1.bf16.msra.mxu0 0
  %2014 = vmatprep.subr.bf16.mxu0 0
  %2015 = vmatpush1.bf16.msra.mxu0 0
  %2016 = vmatprep.subr.bf16.mxu0 0
  %2017 = vmatpush1.bf16.msra.mxu0 0
  %2018 = vmatprep.subr.bf16.mxu0 0
  %2019 = vmatpush1.bf16.msra.mxu0 0
  %2020 = vmatprep.subr.bf16.mxu0 0
  %2021 = vmatpush1.bf16.msra.mxu0 0
  %2022 = vmatprep.subr.bf16.mxu0 0
  %2023 = vmatpush1.bf16.msra.mxu0 0
  %2024 = vmatprep.subr.bf16.mxu0 0
  %2025 = vmatpush1.bf16.msra.mxu0 0
  %2026 = vmatprep.subr.bf16.mxu0 0
  %2027 = vmatpush1.bf16.msra.mxu0 0
  %2028 = vmatprep.subr.bf16.mxu0 0
  %2029 = vmatpush1.bf16.msra.mxu0 0
  %2030 = vmatprep.subr.bf16.mxu0 0
  %2031 = vmatpush1.bf16.msra.mxu0 0
  %2032 = vmatprep.subr.bf16.mxu0 0
  %2033 = vmatpush1.bf16.msra.mxu0 0
  %2034 = vmatprep.subr.bf16.mxu0 0
  %2035 = vmatpush1.bf16.msra.mxu0 0
  %2036 = vmatprep.subr.bf16.mxu0 0
  %2037 = vmatpush1.bf16.msra.mxu0 0
  %2038 = vmatprep.mubr.bf16.mxu0 0
  %2039 = vmatmul.mubr.bf16.gmra.mrb[0].mxu0 %v2004
  %v2040 = vpop.f32.mrb[0].mxu0
  %v2041 = vadd.f32 %v1990, %v2040
  %v2042 = vpop.f32.mrb[0].mxu0
  %v2043 = vpop.f32.mrb[0].mxu0
  %v2044 = vadd.f32 %v1990, %v2043
  %v2045 = vpop.f32.mrb[0].mxu0
  %2046 = vdwg.mxu0
  %v2047 = vmax.f32 %v2041, 0.0
  %v2048 = vmax.f32 %v2044, 0.0
  %s2049 = scalar_lea.vmem %s2, 64
  %v2050 = vld [vmem:[%s2049] sm:$0xf]
  %v2051 = vld [vmem:[%s2049 + $0x4] sm:$0xf]
  %v2052 = vld [vmem:[%s2049 + $0x8] sm:$0xf]
  %v2053 = vld [vmem:[%s2049 + $0xc] sm:$0xf]
  %v2054 = vld [vmem:[%s2049 + $0x10] sm:$0xf]
  %v2055 = vld [vmem:[%s2049 + $0x14] sm:$0xf]
  %v2056 = vld [vmem:[%s2049 + $0x18] sm:$0xf]
  %v2057 = vld [vmem:[%s2049 + $0x1c] sm:$0xf]
  %v2058 = vld [vmem:[%s2049 + $0x20] sm:$0xf]
  %v2059 = vld [vmem:[%s2049 + $0x24] sm:$0xf]
  %v2060 = vld [vmem:[%s2049 + $0x28] sm:$0xf]
  %v2061 = vld [vmem:[%s2049 + $0x2c] sm:$0xf]
  %v2062 = vld [vmem:[%s2049 + $0x30] sm:$0xf]
  %v2063 = vld [vmem:[%s2049 + $0x34] sm:$0xf]
  %v2064 = vld [vmem:[%s2049 + $0x38] sm:$0xf]
  %v2065 = vld [vmem:[%s2049 + $0x3c] sm:$0xf]
  %v2066 = vpack.c.bf16 %v2048, %v2047
  %v2067 = vlaneseq
  %v2068 = vshrl.u32 %v2067, 7
  %v2069 = vsub.s32 0, %v2068
  %v2070 = vrot.slane %v1148, %v2069
  %v2087 = vunpack.c.l.b16 %v2050
  %v2088 = vunpack.c.l.b16 %v2051
  %v2089 = vunpack.c.l.b16 %v2052
  %v2090 = vunpack.c.l.b16 %v2053
  %v2091 = vunpack.c.l.b16 %v2054
  %v2092 = vunpack.c.l.b16 %v2055
  %v2093 = vunpack.c.l.b16 %v2056
  %v2094 = vunpack.c.l.b16 %v2057
  %v2095 = vunpack.c.l.b16 %v2058
  %v2096 = vunpack.c.l.b16 %v2059
  %v2097 = vunpack.c.l.b16 %v2060
  %v2098 = vunpack.c.l.b16 %v2061
  %v2099 = vunpack.c.l.b16 %v2062
  %v2100 = vunpack.c.l.b16 %v2063
  %v2101 = vunpack.c.l.b16 %v2064
  %v2102 = vunpack.c.l.b16 %v2065
  %v2103 = vpack.c.b16 %v2088, %v2087
  %v2104 = vpack.c.b16 %v2090, %v2089
  %v2105 = vpack.c.b16 %v2092, %v2091
  %v2106 = vpack.c.b16 %v2094, %v2093
  %v2107 = vpack.c.b16 %v2096, %v2095
  %v2108 = vpack.c.b16 %v2098, %v2097
  %v2109 = vpack.c.b16 %v2100, %v2099
  %v2110 = vpack.c.b16 %v2102, %v2101
  %2119 = vmatprep.subr.bf16.mxu0 0
  %2120 = vmatpush1.bf16.msra.mxu0 %v2103
  %2121 = vmatprep.subr.bf16.mxu0 0
  %2122 = vmatpush1.bf16.msra.mxu0 %v2104
  %2123 = vmatprep.subr.bf16.mxu0 0
  %2124 = vmatpush1.bf16.msra.mxu0 %v2105
  %2125 = vmatprep.subr.bf16.mxu0 0
  %2126 = vmatpush1.bf16.msra.mxu0 %v2106
  %2127 = vmatprep.subr.bf16.mxu0 0
  %2128 = vmatpush1.bf16.msra.mxu0 %v2107
  %2129 = vmatprep.subr.bf16.mxu0 0
  %2130 = vmatpush1.bf16.msra.mxu0 %v2108
  %2131 = vmatprep.subr.bf16.mxu0 0
  %2132 = vmatpush1.bf16.msra.mxu0 %v2109
  %2133 = vmatprep.subr.bf16.mxu0 0
  %2134 = vmatpush1.bf16.msra.mxu0 %v2110
  %2135 = vmatprep.subr.bf16.mxu0 0
  %2136 = vmatpush1.bf16.msra.mxu0 0
  %2137 = vmatprep.subr.bf16.mxu0 0
  %2138 = vmatpush1.bf16.msra.mxu0 0
  %2139 = vmatprep.subr.bf16.mxu0 0
  %2140 = vmatpush1.bf16.msra.mxu0 0
  %2141 = vmatprep.subr.bf16.mxu0 0
  %2142 = vmatpush1.bf16.msra.mxu0 0
  %2143 = vmatprep.subr.bf16.mxu0 0
  %2144 = vmatpush1.bf16.msra.mxu0 0
  %2145 = vmatprep.subr.bf16.mxu0 0
  %2146 = vmatpush1.bf16.msra.mxu0 0
  %2147 = vmatprep.subr.bf16.mxu0 0
  %2148 = vmatpush1.bf16.msra.mxu0 0
  %2149 = vmatprep.subr.bf16.mxu0 0
  %2150 = vmatpush1.bf16.msra.mxu0 0
  %2151 = vmatprep.mubr.bf16.mxu0 0
  %2152 = vmatmul.mubr.bf16.gmra.mrb[0].mxu0 %v2066
  %v2153 = vpop.f32.mrb[0].mxu0
  %v2154 = vadd.f32 %v2070, %v2153
  %v2155 = vpop.f32.mrb[0].mxu0
  %v2156 = vpop.f32.mrb[0].mxu0
  %v2157 = vadd.f32 %v2070, %v2156
  %v2158 = vpop.f32.mrb[0].mxu0
  %2159 = vdwg.mxu0
  %v2160 = vadd.f32 %v1980, %v2154
  %v2161 = vadd.f32 %v1981, %v2157
  %v2162 = vsel %vm116, %v2160, 0.0
  %2163 = vadd.xlane.f32.xlu0 %v2162
  %v2164 = vpop.xlane.xlu0 %2163
  %v2165 = vsel %vm116, %v2161, 0.0
  %2166 = vadd.xlane.f32.xlu0 %v2165
  %v2167 = vpop.xlane.xlu0 %2166
  %v2168 = vmul.f32 %v2164, %v895
  %v2169 = vmul.f32 %v2167, %v895
  %v2170 = vsub.f32 %v2160, %v2168
  %v2171 = vsub.f32 %v2161, %v2169
  %v2172 = vmul.f32 %v2170, %v2170
  %v2173 = vmul.f32 %v2171, %v2171
  %v2174 = vsel %vm116, %v2172, 0.0
  %2175 = vadd.xlane.f32.xlu0 %v2174
  %v2176 = vpop.xlane.xlu0 %2175
  %v2177 = vsel %vm116, %v2173, 0.0
  %2178 = vadd.xlane.f32.xlu0 %v2177
  %v2179 = vpop.xlane.xlu0 %2178
  %v2180 = vmul.f32 %v2176, %v895
  %v2181 = vmul.f32 %v2179, %v895
  %v2182 = vadd.f32 %v2180, 1e-05
  %v2183 = vadd.f32 %v2181, 1e-05
  %v2184 = vrsqrt.pop %v2182
  %v2185 = vrsqrt.pop %v2183
  %v2186 = vmul.f32 %v2170, %v2184
  %v2187 = vmul.f32 %v2171, %v2185
  %v2188 = vlaneseq
  %v2189 = vshrl.u32 %v2188, 7
  %v2190 = vsub.s32 0, %v2189
  %v2191 = vrot.slane %v1151, %v2190
  %v2192 = vmul.f32 %v2186, %v2191
  %v2193 = vmul.f32 %v2187, %v2191
  %v2194 = vlaneseq
  %v2195 = vshrl.u32 %v2194, 7
  %v2196 = vsub.s32 0, %v2195
  %v2197 = vrot.slane %v1152, %v2196
  %v2198 = vadd.f32 %v2192, %v2197
  %v2199 = vadd.f32 %v2193, %v2197
  %v2200 = vld [vmem:[%s3 + $0x50] sm:$0x1]
  %v2201 = vld [vmem:[%s3 + $0x18] sm:$0xff]
  %v2202 = vld [vmem:[%s3 + $0x20] sm:$0xff]
  %v2203 = vld [vmem:[%s3 + $0x28] sm:$0xff]
  %v2204 = vld [vmem:[%s3 + $0x30] sm:$0xff]
  %v2205 = vpack.c.bf16 %v2199, %v2198
  %v2206 = vpack.c.bf16 %v2202, %v2201
  %v2207 = vpack.c.bf16 %v2204, %v2203
  %v2209 = vsel %vm116, %v2205, 0
  %2211 = vmatprep.subr.bf16.mxu0 0
  %2212 = vmatpush1.bf16.msra.mxu0 %v2206
  %2213 = vmatprep.subr.bf16.mxu0 0
  %2214 = vmatpush1.bf16.msra.mxu0 %v2207
  %2215 = vmatprep.subr.bf16.mxu0 0
  %2216 = vmatpush1.bf16.msra.mxu0 0
  %2217 = vmatprep.subr.bf16.mxu0 0
  %2218 = vmatpush1.bf16.msra.mxu0 0
  %2219 = vmatprep.subr.bf16.mxu0 0
  %2220 = vmatpush1.bf16.msra.mxu0 0
  %2221 = vmatprep.subr.bf16.mxu0 0
  %2222 = vmatpush1.bf16.msra.mxu0 0
  %2223 = vmatprep.subr.bf16.mxu0 0
  %2224 = vmatpush1.bf16.msra.mxu0 0
  %2225 = vmatprep.subr.bf16.mxu0 0
  %2226 = vmatpush1.bf16.msra.mxu0 0
  %2227 = vmatprep.subr.bf16.mxu0 0
  %2228 = vmatpush1.bf16.msra.mxu0 0
  %2229 = vmatprep.subr.bf16.mxu0 0
  %2230 = vmatpush1.bf16.msra.mxu0 0
  %2231 = vmatprep.subr.bf16.mxu0 0
  %2232 = vmatpush1.bf16.msra.mxu0 0
  %2233 = vmatprep.subr.bf16.mxu0 0
  %2234 = vmatpush1.bf16.msra.mxu0 0
  %2235 = vmatprep.subr.bf16.mxu0 0
  %2236 = vmatpush1.bf16.msra.mxu0 0
  %2237 = vmatprep.subr.bf16.mxu0 0
  %2238 = vmatpush1.bf16.msra.mxu0 0
  %2239 = vmatprep.subr.bf16.mxu0 0
  %2240 = vmatpush1.bf16.msra.mxu0 0
  %2241 = vmatprep.subr.bf16.mxu0 0
  %2242 = vmatpush1.bf16.msra.mxu0 0
  %2243 = vmatprep.mubr.bf16.mxu0 0
  %2244 = vmatmul.mubr.bf16.gmra.mrb[0].mxu0 %v2209
  %v2245 = vpop.f32.mrb[0].mxu0
  %v2246 = vadd.f32 0.0, %v2245
  %v2247 = vpop.f32.mrb[0].mxu0
  %v2248 = vpop.f32.mrb[0].mxu0
  %v2249 = vadd.f32 0.0, %v2248
  %v2250 = vpop.f32.mrb[0].mxu0
  %2251 = vdwg.mxu0
  %2253 = vrot.lane.b32.xlu0 %v2200, 107
  %v2254 = vpop.permute.xlu0 %2253
  %s2255 = vtos %v2254
  %v2256 = vstv %s2255
  %v2258 = vmul.f32 %v2256, %v2246
  %v2259 = vmul.f32 %v2256, %v2249
  %v2260 = vsub.f32 1.0, %v2200
  %2262 = vrot.lane.b32.xlu0 %v2260, 107
  %v2263 = vpop.permute.xlu0 %2262
  %s2264 = vtos %v2263
  %v2265 = vstv %s2264
  %v2267 = vmul.f32 %v2265, %v2246
  %v2268 = vmul.f32 %v2265, %v2249
  %2271 = vrot.lane.b32.xlu0 %v2267, 120
  %v2272 = vpop.permute.xlu0 %2271
  %2273 = vrot.lane.b32.xlu0 %v2268, 120
  %v2274 = vpop.permute.xlu0 %2273
  %v2277 = vadd.f32 %v2258, %v2272
  %v2278 = vadd.f32 %v2259, %v2274
  %v2279 = vld [vmem:[%s3 + $0x38] sm:$0xff]
  %v2280 = vpack.c.bf16 %v2249, %v2246
  %v2281 = vpack.c.bf16 %v2279, %v2279
  %2283 = vrot.lane.b32.xlu0 %v2280, 112
  %v2284 = vpop.permute.xlu0 %2283
  %v2286 = vsel %vm165, %v2284, 0
  %v2289 = vsel %vm425, %v2281, 0
  %2291 = vmatprep.subr.bf16.mxu0 0
  %2292 = vmatpush1.bf16.msra.mxu0 %v2289
  %2293 = vmatprep.subr.bf16.mxu0 0
  %2294 = vmatpush1.bf16.msra.mxu0 0
  %2295 = vmatprep.subr.bf16.mxu0 0
  %2296 = vmatpush1.bf16.msra.mxu0 0
  %2297 = vmatprep.subr.bf16.mxu0 0
  %2298 = vmatpush1.bf16.msra.mxu0 0
  %2299 = vmatprep.subr.bf16.mxu0 0
  %2300 = vmatpush1.bf16.msra.mxu0 0
  %2301 = vmatprep.subr.bf16.mxu0 0
  %2302 = vmatpush1.bf16.msra.mxu0 0
  %2303 = vmatprep.subr.bf16.mxu0 0
  %2304 = vmatpush1.bf16.msra.mxu0 0
  %2305 = vmatprep.subr.bf16.mxu0 0
  %2306 = vmatpush1.bf16.msra.mxu0 0
  %2307 = vmatprep.subr.bf16.mxu0 0
  %2308 = vmatpush1.bf16.msra.mxu0 0
  %2309 = vmatprep.subr.bf16.mxu0 0
  %2310 = vmatpush1.bf16.msra.mxu0 0
  %2311 = vmatprep.subr.bf16.mxu0 0
  %2312 = vmatpush1.bf16.msra.mxu0 0
  %2313 = vmatprep.subr.bf16.mxu0 0
  %2314 = vmatpush1.bf16.msra.mxu0 0
  %2315 = vmatprep.subr.bf16.mxu0 0
  %2316 = vmatpush1.bf16.msra.mxu0 0
  %2317 = vmatprep.subr.bf16.mxu0 0
  %2318 = vmatpush1.bf16.msra.mxu0 0
  %2319 = vmatprep.subr.bf16.mxu0 0
  %2320 = vmatpush1.bf16.msra.mxu0 0
  %2321 = vmatprep.subr.bf16.mxu0 0
  %2322 = vmatpush1.bf16.msra.mxu0 0
  %2323 = vmatprep.mubr.bf16.mxu0 0
  %2324 = vmatmul.mubr.bf16.gmra.mrb[0].mxu0 %v2286
  %v2325 = vpop.f32.mrb[0].mxu0
  %v2326 = vadd.f32 0.0, %v2325
  %v2327 = vpop.f32.mrb[0].mxu0
  %v2328 = vpop.f32.mrb[0].mxu0
  %v2329 = vadd.f32 0.0, %v2328
  %v2330 = vpop.f32.mrb[0].mxu0
  %2331 = vdwg.mxu0
  %v2332 = vsub.f32 %v2277, %v2326
  %v2333 = vsub.f32 %v2278, %v2329
  %v2334 = vmul.f32 %v2332, %v2332
  %v2335 = vmul.f32 %v2333, %v2333
  %v2336 = vsel %vm165, %v2334, 0.0
  %2337 = vadd.xlane.f32.xlu0 %v2336
  %v2338 = vpop.xlane.xlu0 %2337
  %v2339 = vsel %vm165, %v2335, 0.0
  %2340 = vadd.xlane.f32.xlu0 %v2339
  %v2341 = vpop.xlane.xlu0 %2340
  %v2342 = vrcp.pop 8.0
  %v2343 = vmul.f32 %v2338, %v2342
  %v2344 = vmul.f32 %v2341, %v2342
  %v2345 = vmul.f32 %v2277, %v2277
  %v2346 = vmul.f32 %v2278, %v2278
  %v2347 = vsel %vm165, %v2345, 0.0
  %2348 = vadd.xlane.f32.xlu0 %v2347
  %v2349 = vpop.xlane.xlu0 %2348
  %v2350 = vsel %vm165, %v2346, 0.0
  %2351 = vadd.xlane.f32.xlu0 %v2350
  %v2352 = vpop.xlane.xlu0 %2351
  %v2353 = vrsqrt.pop %v2349
  %v2354 = vmul.f32 %v2349, %v2353
  %vm2355 = vcmp.eq.f32.partialorder %v2349, inf
  %v2356 = vsel %vm2355, %v2349, %v2354
  %vm2357 = vcmp.eq.f32.partialorder %v2349, 0.0
  %v2358 = vand.u32 %v2349, 2147483648
  %v2359 = vsel %vm2357, %v2358, %v2356
  %v2360 = vrsqrt.pop %v2352
  %v2361 = vmul.f32 %v2352, %v2360
  %vm2362 = vcmp.eq.f32.partialorder %v2352, inf
  %v2363 = vsel %vm2362, %v2352, %v2361
  %vm2364 = vcmp.eq.f32.partialorder %v2352, 0.0
  %v2365 = vand.u32 %v2352, 2147483648
  %v2366 = vsel %vm2364, %v2365, %v2363
  %v2367 = vadd.f32 %v2359, 1e-06
  %v2368 = vadd.f32 %v2366, 1e-06
  %v2369 = vmul.f32 %v2326, %v2326
  %v2370 = vmul.f32 %v2329, %v2329
  %v2371 = vsel %vm165, %v2369, 0.0
  %2372 = vadd.xlane.f32.xlu0 %v2371
  %v2373 = vpop.xlane.xlu0 %2372
  %v2374 = vsel %vm165, %v2370, 0.0
  %2375 = vadd.xlane.f32.xlu0 %v2374
  %v2376 = vpop.xlane.xlu0 %2375
  %v2377 = vrsqrt.pop %v2373
  %v2378 = vmul.f32 %v2373, %v2377
  %vm2379 = vcmp.eq.f32.partialorder %v2373, inf
  %v2380 = vsel %vm2379, %v2373, %v2378
  %vm2381 = vcmp.eq.f32.partialorder %v2373, 0.0
  %v2382 = vand.u32 %v2373, 2147483648
  %v2383 = vsel %vm2381, %v2382, %v2380
  %v2384 = vrsqrt.pop %v2376
  %v2385 = vmul.f32 %v2376, %v2384
  %vm2386 = vcmp.eq.f32.partialorder %v2376, inf
  %v2387 = vsel %vm2386, %v2376, %v2385
  %vm2388 = vcmp.eq.f32.partialorder %v2376, 0.0
  %v2389 = vand.u32 %v2376, 2147483648
  %v2390 = vsel %vm2388, %v2389, %v2387
  %v2391 = vadd.f32 %v2383, 1e-06
  %v2392 = vadd.f32 %v2390, 1e-06
  %v2393 = vrcp.pop %v2367
  %v2394 = vrcp.pop %v2368
  %v2395 = vmul.f32 %v2277, %v2393
  %v2396 = vmul.f32 %v2278, %v2394
  %v2397 = vrcp.pop %v2391
  %v2398 = vrcp.pop %v2392
  %v2399 = vmul.f32 %v2326, %v2397
  %v2400 = vmul.f32 %v2329, %v2398
  %v2401 = vsub.f32 %v2395, %v2399
  %v2402 = vsub.f32 %v2396, %v2400
  %v2403 = vmul.f32 %v2401, %v2401
  %v2404 = vmul.f32 %v2402, %v2402
  %v2405 = vsel %vm165, %v2403, 0.0
  %2406 = vadd.xlane.f32.xlu0 %v2405
  %v2407 = vpop.xlane.xlu0 %2406
  %v2408 = vsel %vm165, %v2404, 0.0
  %2409 = vadd.xlane.f32.xlu0 %v2408
  %v2410 = vpop.xlane.xlu0 %2409
  %v2411 = vmul.f32 %v2407, %v2342
  %v2412 = vmul.f32 %v2410, %v2342
  %v2413 = vand.u32 2147483647, %v2200
  %v2414 = vlaneseq
  %v2415 = vshrl.u32 %v2414, 7
  %v2416 = vsub.s32 0, %v2415
  %v2417 = vrot.slane %v2413, %v2416
  %v2418 = vmul.f32 %v2417, %v2411
  %v2419 = vmul.f32 %v2417, %v2412
  %v2420 = vadd.f32 %v2343, %v2418
  %v2421 = vadd.f32 %v2344, %v2419
  %2424 = vrot.lane.b32.xlu0 %v2246, 119
  %v2425 = vpop.permute.xlu0 %2424
  %2426 = vrot.lane.b32.xlu0 %v2249, 119
  %v2427 = vpop.permute.xlu0 %2426
  %v2430 = vmul.f32 %v2246, %v2425
  %v2431 = vmul.f32 %v2249, %v2427
  %2432 = vrot.lane.b32.xlu0 %v2246, 121
  %v2433 = vpop.permute.xlu0 %2432
  %2434 = vrot.lane.b32.xlu0 %v2249, 121
  %v2435 = vpop.permute.xlu0 %2434
  %v2438 = vmul.f32 %v2246, %v2433
  %v2439 = vmul.f32 %v2249, %v2435
  %2442 = vrot.lane.b32.xlu0 %v2438, 127
  %v2443 = vpop.permute.xlu0 %2442
  %2444 = vrot.lane.b32.xlu0 %v2439, 127
  %v2445 = vpop.permute.xlu0 %2444
  %v2448 = vsub.f32 %v2430, %v2443
  %v2449 = vsub.f32 %v2431, %v2445
  %2450 = vrot.lane.b32.xlu0 %v2246, 122
  %v2451 = vpop.permute.xlu0 %2450
  %2452 = vrot.lane.b32.xlu0 %v2249, 122
  %v2453 = vpop.permute.xlu0 %2452
  %v2456 = vmul.f32 %v2246, %v2451
  %v2457 = vmul.f32 %v2249, %v2453
  %2458 = vrot.lane.b32.xlu0 %v2246, 118
  %v2459 = vpop.permute.xlu0 %2458
  %2460 = vrot.lane.b32.xlu0 %v2249, 118
  %v2461 = vpop.permute.xlu0 %2460
  %v2464 = vmul.f32 %v2246, %v2459
  %v2465 = vmul.f32 %v2249, %v2461
  %2468 = vrot.lane.b32.xlu0 %v2464, 2
  %v2469 = vpop.permute.xlu0 %2468
  %2470 = vrot.lane.b32.xlu0 %v2465, 2
  %v2471 = vpop.permute.xlu0 %2470
  %v2474 = vsub.f32 %v2456, %v2469
  %v2475 = vsub.f32 %v2457, %v2471
  %v2476 = vlaneseq
  %v2477 = vshrl.u32 %v2476, 7
  %v2478 = vsub.s32 0, %v2477
  %v2479 = vrot.slane %v2200, %v2478
  %v2480 = vmul.f32 %v2277, %v2479
  %v2481 = vmul.f32 %v2278, %v2479
  %v2482 = vsel %vm165, %v2480, 0.0
  %2483 = vadd.xlane.f32.xlu0 %v2482
  %v2484 = vpop.xlane.xlu0 %2483
  %v2485 = vsel %vm165, %v2481, 0.0
  %2486 = vadd.xlane.f32.xlu0 %v2485
  %v2487 = vpop.xlane.xlu0 %2486
  %2489 = vrot.lane.b32.xlu0 %v2479, 120
  %v2490 = vpop.permute.xlu0 %2489
  %v2492 = vmul.f32 %v2326, %v2490
  %v2493 = vmul.f32 %v2329, %v2490
  %v2494 = vsel %vm165, %v2492, 0.0
  %2495 = vadd.xlane.f32.xlu0 %v2494
  %v2496 = vpop.xlane.xlu0 %2495
  %v2497 = vsel %vm165, %v2493, 0.0
  %2498 = vadd.xlane.f32.xlu0 %v2497
  %v2499 = vpop.xlane.xlu0 %2498
  %v2500 = vadd.f32 %v2484, %v2496
  %v2501 = vadd.f32 %v2487, %v2499
  %2502 = vrot.lane.b32.xlu0 %v2479, 113
  %v2503 = vpop.permute.xlu0 %2502
  %v2505 = vmul.f32 %v2448, %v2503
  %v2506 = vmul.f32 %v2449, %v2503
  %v2507 = vadd.f32 %v2500, %v2505
  %v2508 = vadd.f32 %v2501, %v2506
  %v2509 = vmul.f32 %v2474, %v2503
  %v2510 = vmul.f32 %v2475, %v2503
  %2513 = vrot.lane.b32.xlu0 %v2509, 127
  %v2514 = vpop.permute.xlu0 %2513
  %2515 = vrot.lane.b32.xlu0 %v2510, 127
  %v2516 = vpop.permute.xlu0 %2515
  %v2519 = vadd.f32 %v2507, %v2514
  %v2520 = vadd.f32 %v2508, %v2516
  %2521 = vrot.lane.b32.xlu0 %v2479, 110
  %v2522 = vpop.permute.xlu0 %2521
  %v2524 = vmul.f32 %v2448, %v2522
  %v2525 = vmul.f32 %v2449, %v2522
  %2528 = vrot.lane.b32.xlu0 %v2524, 1
  %v2529 = vpop.permute.xlu0 %2528
  %2530 = vrot.lane.b32.xlu0 %v2525, 1
  %v2531 = vpop.permute.xlu0 %2530
  %v2534 = vadd.f32 %v2519, %v2529
  %v2535 = vadd.f32 %v2520, %v2531
  %2536 = vrot.lane.b32.xlu0 %v2479, 3
  %v2537 = vpop.permute.xlu0 %2536
  %v2539 = vmul.f32 %v2420, %v2537
  %v2540 = vmul.f32 %v2421, %v2537
  %2543 = vrot.lane.b32.xlu0 %v2539, 107
  %v2544 = vpop.permute.xlu0 %2543
  %2545 = vrot.lane.b32.xlu0 %v2540, 107
  %v2546 = vpop.permute.xlu0 %2545
  %v2549 = vadd.f32 %v2534, %v2544
  %v2550 = vadd.f32 %v2535, %v2546
  %2551 = vrot.lane.b32.xlu0 %v2479, 109
  %v2552 = vpop.permute.xlu0 %2551
  %v2554 = vadd.f32 %v2549, %v2552
  %v2555 = vadd.f32 %v2550, %v2552
  %2558 = vrot.lane.b32.xlu0 %v2554, 127
  %v2559 = vpop.permute.xlu0 %2558
  %2560 = vrot.lane.b32.xlu0 %v2555, 127
  %v2561 = vpop.permute.xlu0 %2560
  %2566 = vrot.lane.b32.xlu0 %v2420, 107
  %v2567 = vpop.permute.xlu0 %2566
  %2568 = vrot.lane.b32.xlu0 %v2421, 107
  %v2569 = vpop.permute.xlu0 %2568
  %vm2572 = vcmask 7168
  %v2573 = vsel %vm2572, %v2559, %v2567
  %v2574 = vsel %vm2572, %v2561, %v2569
  %vm2575 = vcmask 15360
  %2576 = vst.msk [vmem:[%s4] sm:$0xff] %vm2575, %v2573
  %2577 = vst.msk [vmem:[%s4 + $0x8] sm:$0xff] %vm2575, %v2574
  // Predicated region
  $region18: #{helix_transformer_forward.1} parent=0 // pred_check
    _
  $region19: #{helix_transformer_forward.1} parent=0 // pred_check_branch
    %2579 = sbr.rel (0) target = $region21
  $region20: #{helix_transformer_forward.1} parent=0 // pred_region
    _
  $region21: #{helix_transformer_forward.1} parent=0 // pred_fallthru
    _
  // Predicated region
  $region22: #{helix_transformer_forward.1} parent=0 // pred_check
    _
  $region23: #{helix_transformer_forward.1} parent=0 // pred_check_branch
    %2581 = sbr.rel (0) target = $region25
  $region24: #{helix_transformer_forward.1} parent=0 // pred_region
    _
  $region25: #{helix_transformer_forward.1} parent=0 // pred_fallthru
    _

</llo_original>
